<compile_context>
chip_gen: v7x
topology: tpu7x:2x2x1
jax: 0.10.0
libtpu: 0.0.40
codegen_flags: <defaults>
</compile_context>

<pallas_src>
import functools

import jax
import jax.numpy as jnp
from jax.experimental import pallas as pl
from jax.experimental.pallas import tpu as pltpu


def _basic_block_kernel(x_ref, w1_ref, w2_ref, sb1_ref, sb2_ref, o_ref,
                        xp_ref, mid_ref, *, H, W, C):
    """Fused BasicBlock on one batch element (NHWC, channels-last).

    x_ref:   (1, H, W, C)          input tile (also the residual)
    w1_ref:  (9*C, C)   bf16       conv1 weights, row = (kh*3+kw)*C + cin
    w2_ref:  (9*C, C)   bf16       conv2 weights
    sb1_ref: (2, C)     f32        [scale; bias] of folded BN1
    sb2_ref: (2, C)     f32        [scale; bias] of folded BN2
    o_ref:   (1, H, W, C)          output tile
    xp_ref:  (H+2, W+2, C) f32     VMEM scratch: zero-padded input
    mid_ref: (H+2, W+2, C) f32     VMEM scratch: zero-padded conv1 output
    """
    f32 = jnp.float32

    def conv3x3_bn(src_ref, w_ref, sb_ref):
        # im2col: one (H*W, 9*C) x (9*C, C) matmul on the MXU (bf16 in, f32 acc).
        taps = []
        for kh in range(3):
            for kw in range(3):
                taps.append(src_ref[kh:kh + H, kw:kw + W, :].reshape(H * W, C))
        patches = jnp.concatenate(taps, axis=-1).astype(jnp.bfloat16)
        acc = jnp.dot(patches, w_ref[...], preferred_element_type=f32)
        return acc * sb_ref[0] + sb_ref[1]            # f32 epilogue

    # Stage zero-padded input in VMEM (replaces the wrapper-side jnp.pad).
    xp_ref[...] = jnp.zeros_like(xp_ref)
    xp_ref[1:H + 1, 1:W + 1, :] = x_ref[0].astype(f32)

    # conv1 + BN1 + ReLU -> kept resident in VMEM (never written to HBM).
    out1 = jnp.maximum(conv3x3_bn(xp_ref, w1_ref, sb1_ref), 0.0)
    mid_ref[...] = jnp.zeros_like(mid_ref)
    mid_ref[1:H + 1, 1:W + 1, :] = out1.reshape(H, W, C)

    # conv2 + BN2 + residual add (all f32).
    out2 = conv3x3_bn(mid_ref, w2_ref, sb2_ref)
    out2 = out2 + x_ref[0].astype(f32).reshape(H * W, C)

    o_ref[0] = out2.reshape(H, W, C).astype(o_ref.dtype)


def _fold_bn(gamma, beta, mean, var, eps=1e-5):
    scale = gamma / jnp.sqrt(var + eps)
    bias = beta - mean * scale
    return jnp.stack([scale, bias]).astype(jnp.float32)        # (2, C)


def _w_to_im2col(w_oihw):
    # PyTorch OIHW -> rows = (kh*3+kw)*Cin + cin, cols = Cout; bf16 for the MXU.
    Cout, Cin = int(w_oihw.shape[0]), int(w_oihw.shape[1])
    return (jnp.transpose(w_oihw, (2, 3, 1, 0))
            .reshape(9 * Cin, Cout)
            .astype(jnp.bfloat16))


def basic_block_forward(x_nchw, params):
    """BasicBlock(inplanes, planes, stride=1, downsample=None, pad=1, dilation=1)."""
    N, C, H, W = x_nchw.shape
    x_nhwc = jnp.transpose(x_nchw, (0, 2, 3, 1))

    sb1 = _fold_bn(params["bn1_gamma"], params["bn1_beta"],
                   params["bn1_mean"], params["bn1_var"])
    sb2 = _fold_bn(params["bn2_gamma"], params["bn2_beta"],
                   params["bn2_mean"], params["bn2_var"])
    w1 = _w_to_im2col(params["conv1_w"])
    w2 = _w_to_im2col(params["conv2_w"])

    flops = 2 * 2 * N * H * W * 9 * C * C                       # two 3x3 convs
    bytes_accessed = int(2 * x_nhwc.size * x_nhwc.dtype.itemsize
                         + (w1.size + w2.size) * 2
                         + (sb1.size + sb2.size) * 4)

    out_nhwc = pl.pallas_call(
        functools.partial(_basic_block_kernel, H=H, W=W, C=C),
        out_shape=jax.ShapeDtypeStruct((N, H, W, C), x_nhwc.dtype),
        grid=(N,),
        in_specs=[
            pl.BlockSpec((1, H, W, C), lambda n: (n, 0, 0, 0)),   # x (+ residual)
            pl.BlockSpec((9 * C, C), lambda n: (0, 0)),           # w1
            pl.BlockSpec((9 * C, C), lambda n: (0, 0)),           # w2
            pl.BlockSpec((2, C), lambda n: (0, 0)),               # BN1 scale/bias
            pl.BlockSpec((2, C), lambda n: (0, 0)),               # BN2 scale/bias
        ],
        out_specs=pl.BlockSpec((1, H, W, C), lambda n: (n, 0, 0, 0)),
        scratch_shapes=[pltpu.VMEM((H + 2, W + 2, C), jnp.float32),
                        pltpu.VMEM((H + 2, W + 2, C), jnp.float32)],
        compiler_params=pltpu.CompilerParams(
            dimension_semantics=("parallel",)),
        cost_estimate=pl.CostEstimate(flops=flops, transcendentals=0,
                                      bytes_accessed=bytes_accessed),
    )(x_nhwc, w1, w2, sb1, sb2)

    return jnp.transpose(out_nhwc, (0, 3, 1, 2))


# -------------------- pure-JAX reference (for correctness check) --------------------
def _ref_convbn(x_nchw, w, gamma, beta, mean, var, eps=1e-5):
    y = jax.lax.conv_general_dilated(
        x_nchw, w, window_strides=(1, 1), padding=((1, 1), (1, 1)),
        dimension_numbers=("NCHW", "OIHW", "NCHW"))
    scale = gamma / jnp.sqrt(var + eps)
    bias = beta - mean * scale
    return y * scale[None, :, None, None] + bias[None, :, None, None]


def _ref_basic_block(x, p):
    out = jax.nn.relu(_ref_convbn(x, p["conv1_w"], p["bn1_gamma"], p["bn1_beta"],
                                  p["bn1_mean"], p["bn1_var"]))
    out = _ref_convbn(out, p["conv2_w"], p["bn2_gamma"], p["bn2_beta"],
                      p["bn2_mean"], p["bn2_var"])
    return out + x


if __name__ == "__main__":
    # BasicBlock(inplanes=4, planes=4, stride=1, downsample=None, pad=1, dilation=1)
    N, C, H, W = 2, 4, 16, 16
    key = jax.random.PRNGKey(0)
    ks = jax.random.split(key, 10)

    x = jax.random.normal(ks[0], (N, C, H, W), dtype=jnp.float32)

    params = {
        "conv1_w":   0.1 * jax.random.normal(ks[1], (C, C, 3, 3), jnp.float32),
        "conv2_w":   0.1 * jax.random.normal(ks[2], (C, C, 3, 3), jnp.float32),
        "bn1_gamma": 1.0 + 0.1 * jax.random.normal(ks[3], (C,), jnp.float32),
        "bn1_beta":  0.1 * jax.random.normal(ks[4], (C,), jnp.float32),
        "bn1_mean":  0.1 * jax.random.normal(ks[5], (C,), jnp.float32),
        "bn1_var":   1.0 + 0.1 * jax.random.uniform(ks[6], (C,), jnp.float32),
        "bn2_gamma": 1.0 + 0.1 * jax.random.normal(ks[7], (C,), jnp.float32),
        "bn2_beta":  0.1 * jax.random.normal(ks[8], (C,), jnp.float32),
        "bn2_mean":  0.1 * jax.random.normal(ks[9], (C,), jnp.float32),
        "bn2_var":   jnp.ones((C,), jnp.float32),
    }

    out = jax.block_until_ready(basic_block_forward(x, params))
    ref = jax.block_until_ready(_ref_basic_block(x, params))

    assert out.shape == (N, C, H, W)
    # bf16 MXU operands (f32 accumulation/epilogue) -> loosened tolerance vs f32 ref.
    assert jnp.allclose(out, ref, atol=3e-2, rtol=3e-2), "mismatch vs reference"
    print("KERNEL_OK")
</pallas_src>

<mosaic_0001>
module attributes {stable_mosaic.version = 11 : i64} {
  func.func @_basic_block_kernel(%arg0: i32, %arg1: memref<1x16x16x4xf32, #tpu.memory_space<vmem>>, %arg2: memref<36x4xbf16, #tpu.memory_space<vmem>>, %arg3: memref<36x4xbf16, #tpu.memory_space<vmem>>, %arg4: memref<2x4xf32, #tpu.memory_space<vmem>>, %arg5: memref<2x4xf32, #tpu.memory_space<vmem>>, %arg6: memref<1x16x16x4xf32, #tpu.memory_space<vmem>>, %arg7: memref<18x18x4xf32, #tpu.memory_space<vmem>>, %arg8: memref<18x18x4xf32, #tpu.memory_space<vmem>>) attributes {dimension_semantics = [#tpu.dimension_semantics<parallel>], iteration_bounds = array<i64: 2>, scalar_prefetch = 0 : i64, scratch_operands = 2 : i64, tpu.core_type = #tpu.core_type<tc>, window_params = [{transform_indices = @transform_0, window_bounds = array<i64: 1, 16, 16, 4>}, {pipeline_mode = #tpu.pipeline_mode<synchronous>, transform_indices = @transform_1, window_bounds = array<i64: 36, 4>}, {pipeline_mode = #tpu.pipeline_mode<synchronous>, transform_indices = @transform_2, window_bounds = array<i64: 36, 4>}, {pipeline_mode = #tpu.pipeline_mode<synchronous>, transform_indices = @transform_3, window_bounds = array<i64: 2, 4>}, {pipeline_mode = #tpu.pipeline_mode<synchronous>, transform_indices = @transform_4, window_bounds = array<i64: 2, 4>}, {transform_indices = @transform_5, window_bounds = array<i64: 1, 16, 16, 4>}]} {
    %cst = arith.constant 0.000000e+00 : f32
    %0 = vector.broadcast %cst : f32 to vector<18x18x4xf32>
    %c0 = arith.constant 0 : index
    %c0_0 = arith.constant 0 : index
    %c0_1 = arith.constant 0 : index
    %1 = vector.load %arg7[%c0, %c0_0, %c0_1] : memref<18x18x4xf32, #tpu.memory_space<vmem>>, vector<18x18x4xf32>
    tpu.vector_store %arg7[%c0, %c0_0, %c0_1], %0 {strides = array<i32>} : memref<18x18x4xf32, #tpu.memory_space<vmem>>, vector<18x18x4xf32>,
    %c0_2 = arith.constant 0 : index
    %c0_3 = arith.constant 0 : index
    %c0_4 = arith.constant 0 : index
    %c0_5 = arith.constant 0 : index
    %2 = vector.load %arg1[%c0_2, %c0_3, %c0_4, %c0_5] : memref<1x16x16x4xf32, #tpu.memory_space<vmem>>, vector<1x16x16x4xf32>
    %3 = vector.shape_cast %2 : vector<1x16x16x4xf32> to vector<16x16x4xf32>
    %c1 = arith.constant 1 : index
    %c1_6 = arith.constant 1 : index
    %c0_7 = arith.constant 0 : index
    %4 = vector.load %arg7[%c1, %c1_6, %c0_7] : memref<18x18x4xf32, #tpu.memory_space<vmem>>, vector<16x16x4xf32>
    tpu.vector_store %arg7[%c1, %c1_6, %c0_7], %3 {strides = array<i32>} : memref<18x18x4xf32, #tpu.memory_space<vmem>>, vector<16x16x4xf32>,
    %c0_8 = arith.constant 0 : index
    %c0_9 = arith.constant 0 : index
    %c0_10 = arith.constant 0 : index
    %5 = vector.load %arg7[%c0_8, %c0_9, %c0_10] : memref<18x18x4xf32, #tpu.memory_space<vmem>>, vector<16x16x4xf32>
    %6 = vector.shape_cast %5 : vector<16x16x4xf32> to vector<256x4xf32>
    %c0_11 = arith.constant 0 : index
    %c1_12 = arith.constant 1 : index
    %c0_13 = arith.constant 0 : index
    %7 = vector.load %arg7[%c0_11, %c1_12, %c0_13] : memref<18x18x4xf32, #tpu.memory_space<vmem>>, vector<16x16x4xf32>
    %8 = vector.shape_cast %7 : vector<16x16x4xf32> to vector<256x4xf32>
    %c0_14 = arith.constant 0 : index
    %c2 = arith.constant 2 : index
    %c0_15 = arith.constant 0 : index
    %9 = vector.load %arg7[%c0_14, %c2, %c0_15] : memref<18x18x4xf32, #tpu.memory_space<vmem>>, vector<16x16x4xf32>
    %10 = vector.shape_cast %9 : vector<16x16x4xf32> to vector<256x4xf32>
    %c1_16 = arith.constant 1 : index
    %c0_17 = arith.constant 0 : index
    %c0_18 = arith.constant 0 : index
    %11 = vector.load %arg7[%c1_16, %c0_17, %c0_18] : memref<18x18x4xf32, #tpu.memory_space<vmem>>, vector<16x16x4xf32>
    %12 = vector.shape_cast %11 : vector<16x16x4xf32> to vector<256x4xf32>
    %c1_19 = arith.constant 1 : index
    %c1_20 = arith.constant 1 : index
    %c0_21 = arith.constant 0 : index
    %13 = vector.load %arg7[%c1_19, %c1_20, %c0_21] : memref<18x18x4xf32, #tpu.memory_space<vmem>>, vector<16x16x4xf32>
    %14 = vector.shape_cast %13 : vector<16x16x4xf32> to vector<256x4xf32>
    %c1_22 = arith.constant 1 : index
    %c2_23 = arith.constant 2 : index
    %c0_24 = arith.constant 0 : index
    %15 = vector.load %arg7[%c1_22, %c2_23, %c0_24] : memref<18x18x4xf32, #tpu.memory_space<vmem>>, vector<16x16x4xf32>
    %16 = vector.shape_cast %15 : vector<16x16x4xf32> to vector<256x4xf32>
    %c2_25 = arith.constant 2 : index
    %c0_26 = arith.constant 0 : index
    %c0_27 = arith.constant 0 : index
    %17 = vector.load %arg7[%c2_25, %c0_26, %c0_27] : memref<18x18x4xf32, #tpu.memory_space<vmem>>, vector<16x16x4xf32>
    %18 = vector.shape_cast %17 : vector<16x16x4xf32> to vector<256x4xf32>
    %c2_28 = arith.constant 2 : index
    %c1_29 = arith.constant 1 : index
    %c0_30 = arith.constant 0 : index
    %19 = vector.load %arg7[%c2_28, %c1_29, %c0_30] : memref<18x18x4xf32, #tpu.memory_space<vmem>>, vector<16x16x4xf32>
    %20 = vector.shape_cast %19 : vector<16x16x4xf32> to vector<256x4xf32>
    %c2_31 = arith.constant 2 : index
    %c2_32 = arith.constant 2 : index
    %c0_33 = arith.constant 0 : index
    %21 = vector.load %arg7[%c2_31, %c2_32, %c0_33] : memref<18x18x4xf32, #tpu.memory_space<vmem>>, vector<16x16x4xf32>
    %22 = vector.shape_cast %21 : vector<16x16x4xf32> to vector<256x4xf32>
    %23 = tpu.concatenate %6, %8, %10, %12, %14, %16, %18, %20, %22 in 1 : vector<256x4xf32>, vector<256x4xf32>, vector<256x4xf32>, vector<256x4xf32>, vector<256x4xf32>, vector<256x4xf32>, vector<256x4xf32>, vector<256x4xf32>, vector<256x4xf32> -> vector<256x36xf32>
    %24 = arith.truncf %23 : vector<256x36xf32> to vector<256x36xbf16>
    %c0_34 = arith.constant 0 : index
    %c0_35 = arith.constant 0 : index
    %25 = vector.load %arg2[%c0_34, %c0_35] : memref<36x4xbf16, #tpu.memory_space<vmem>>, vector<36x4xbf16>
    %cst_36 = arith.constant dense<0.000000e+00> : vector<256x4xf32>
    %26 = tpu.matmul %24, %25, %cst_36 {dimension_numbers = #tpu.dot_dimension_numbers<[1], [0], [0], [1], [0, 0, 1, 1], [], []>} : vector<256x36xbf16>, vector<36x4xbf16>, vector<256x4xf32> -> vector<256x4xf32>
    %c0_37 = arith.constant 0 : index
    %c0_38 = arith.constant 0 : index
    %27 = vector.load %arg4[%c0_37, %c0_38] : memref<2x4xf32, #tpu.memory_space<vmem>>, vector<1x4xf32>
    %28 = vector.shape_cast %27 : vector<1x4xf32> to vector<4xf32>
    %29 = vector.shape_cast %28 : vector<4xf32> to vector<1x4xf32>
    %30 = vector.broadcast %29 : vector<1x4xf32> to vector<256x4xf32>
    %31 = arith.mulf %26, %30 : vector<256x4xf32>
    %c1_39 = arith.constant 1 : index
    %c0_40 = arith.constant 0 : index
    %32 = vector.load %arg4[%c1_39, %c0_40] : memref<2x4xf32, #tpu.memory_space<vmem>>, vector<1x4xf32>
    %33 = vector.shape_cast %32 : vector<1x4xf32> to vector<4xf32>
    %34 = vector.shape_cast %33 : vector<4xf32> to vector<1x4xf32>
    %35 = vector.broadcast %34 : vector<1x4xf32> to vector<256x4xf32>
    %36 = arith.addf %31, %35 : vector<256x4xf32>
    %cst_41 = arith.constant 0.000000e+00 : f32
    %37 = vector.broadcast %cst_41 : f32 to vector<256x4xf32>
    %38 = arith.maximumf %36, %37 : vector<256x4xf32>
    %cst_42 = arith.constant 0.000000e+00 : f32
    %39 = vector.broadcast %cst_42 : f32 to vector<18x18x4xf32>
    %c0_43 = arith.constant 0 : index
    %c0_44 = arith.constant 0 : index
    %c0_45 = arith.constant 0 : index
    %40 = vector.load %arg8[%c0_43, %c0_44, %c0_45] : memref<18x18x4xf32, #tpu.memory_space<vmem>>, vector<18x18x4xf32>
    tpu.vector_store %arg8[%c0_43, %c0_44, %c0_45], %39 {strides = array<i32>} : memref<18x18x4xf32, #tpu.memory_space<vmem>>, vector<18x18x4xf32>,
    %41 = vector.shape_cast %38 : vector<256x4xf32> to vector<16x16x4xf32>
    %c1_46 = arith.constant 1 : index
    %c1_47 = arith.constant 1 : index
    %c0_48 = arith.constant 0 : index
    %42 = vector.load %arg8[%c1_46, %c1_47, %c0_48] : memref<18x18x4xf32, #tpu.memory_space<vmem>>, vector<16x16x4xf32>
    tpu.vector_store %arg8[%c1_46, %c1_47, %c0_48], %41 {strides = array<i32>} : memref<18x18x4xf32, #tpu.memory_space<vmem>>, vector<16x16x4xf32>,
    %c0_49 = arith.constant 0 : index
    %c0_50 = arith.constant 0 : index
    %c0_51 = arith.constant 0 : index
    %43 = vector.load %arg8[%c0_49, %c0_50, %c0_51] : memref<18x18x4xf32, #tpu.memory_space<vmem>>, vector<16x16x4xf32>
    %44 = vector.shape_cast %43 : vector<16x16x4xf32> to vector<256x4xf32>
    %c0_52 = arith.constant 0 : index
    %c1_53 = arith.constant 1 : index
    %c0_54 = arith.constant 0 : index
    %45 = vector.load %arg8[%c0_52, %c1_53, %c0_54] : memref<18x18x4xf32, #tpu.memory_space<vmem>>, vector<16x16x4xf32>
    %46 = vector.shape_cast %45 : vector<16x16x4xf32> to vector<256x4xf32>
    %c0_55 = arith.constant 0 : index
    %c2_56 = arith.constant 2 : index
    %c0_57 = arith.constant 0 : index
    %47 = vector.load %arg8[%c0_55, %c2_56, %c0_57] : memref<18x18x4xf32, #tpu.memory_space<vmem>>, vector<16x16x4xf32>
    %48 = vector.shape_cast %47 : vector<16x16x4xf32> to vector<256x4xf32>
    %c1_58 = arith.constant 1 : index
    %c0_59 = arith.constant 0 : index
    %c0_60 = arith.constant 0 : index
    %49 = vector.load %arg8[%c1_58, %c0_59, %c0_60] : memref<18x18x4xf32, #tpu.memory_space<vmem>>, vector<16x16x4xf32>
    %50 = vector.shape_cast %49 : vector<16x16x4xf32> to vector<256x4xf32>
    %c1_61 = arith.constant 1 : index
    %c1_62 = arith.constant 1 : index
    %c0_63 = arith.constant 0 : index
    %51 = vector.load %arg8[%c1_61, %c1_62, %c0_63] : memref<18x18x4xf32, #tpu.memory_space<vmem>>, vector<16x16x4xf32>
    %52 = vector.shape_cast %51 : vector<16x16x4xf32> to vector<256x4xf32>
    %c1_64 = arith.constant 1 : index
    %c2_65 = arith.constant 2 : index
    %c0_66 = arith.constant 0 : index
    %53 = vector.load %arg8[%c1_64, %c2_65, %c0_66] : memref<18x18x4xf32, #tpu.memory_space<vmem>>, vector<16x16x4xf32>
    %54 = vector.shape_cast %53 : vector<16x16x4xf32> to vector<256x4xf32>
    %c2_67 = arith.constant 2 : index
    %c0_68 = arith.constant 0 : index
    %c0_69 = arith.constant 0 : index
    %55 = vector.load %arg8[%c2_67, %c0_68, %c0_69] : memref<18x18x4xf32, #tpu.memory_space<vmem>>, vector<16x16x4xf32>
    %56 = vector.shape_cast %55 : vector<16x16x4xf32> to vector<256x4xf32>
    %c2_70 = arith.constant 2 : index
    %c1_71 = arith.constant 1 : index
    %c0_72 = arith.constant 0 : index
    %57 = vector.load %arg8[%c2_70, %c1_71, %c0_72] : memref<18x18x4xf32, #tpu.memory_space<vmem>>, vector<16x16x4xf32>
    %58 = vector.shape_cast %57 : vector<16x16x4xf32> to vector<256x4xf32>
    %c2_73 = arith.constant 2 : index
    %c2_74 = arith.constant 2 : index
    %c0_75 = arith.constant 0 : index
    %59 = vector.load %arg8[%c2_73, %c2_74, %c0_75] : memref<18x18x4xf32, #tpu.memory_space<vmem>>, vector<16x16x4xf32>
    %60 = vector.shape_cast %59 : vector<16x16x4xf32> to vector<256x4xf32>
    %61 = tpu.concatenate %44, %46, %48, %50, %52, %54, %56, %58, %60 in 1 : vector<256x4xf32>, vector<256x4xf32>, vector<256x4xf32>, vector<256x4xf32>, vector<256x4xf32>, vector<256x4xf32>, vector<256x4xf32>, vector<256x4xf32>, vector<256x4xf32> -> vector<256x36xf32>
    %62 = arith.truncf %61 : vector<256x36xf32> to vector<256x36xbf16>
    %c0_76 = arith.constant 0 : index
    %c0_77 = arith.constant 0 : index
    %63 = vector.load %arg3[%c0_76, %c0_77] : memref<36x4xbf16, #tpu.memory_space<vmem>>, vector<36x4xbf16>
    %cst_78 = arith.constant dense<0.000000e+00> : vector<256x4xf32>
    %64 = tpu.matmul %62, %63, %cst_78 {dimension_numbers = #tpu.dot_dimension_numbers<[1], [0], [0], [1], [0, 0, 1, 1], [], []>} : vector<256x36xbf16>, vector<36x4xbf16>, vector<256x4xf32> -> vector<256x4xf32>
    %c0_79 = arith.constant 0 : index
    %c0_80 = arith.constant 0 : index
    %65 = vector.load %arg5[%c0_79, %c0_80] : memref<2x4xf32, #tpu.memory_space<vmem>>, vector<1x4xf32>
    %66 = vector.shape_cast %65 : vector<1x4xf32> to vector<4xf32>
    %67 = vector.shape_cast %66 : vector<4xf32> to vector<1x4xf32>
    %68 = vector.broadcast %67 : vector<1x4xf32> to vector<256x4xf32>
    %69 = arith.mulf %64, %68 : vector<256x4xf32>
    %c1_81 = arith.constant 1 : index
    %c0_82 = arith.constant 0 : index
    %70 = vector.load %arg5[%c1_81, %c0_82] : memref<2x4xf32, #tpu.memory_space<vmem>>, vector<1x4xf32>
    %71 = vector.shape_cast %70 : vector<1x4xf32> to vector<4xf32>
    %72 = vector.shape_cast %71 : vector<4xf32> to vector<1x4xf32>
    %73 = vector.broadcast %72 : vector<1x4xf32> to vector<256x4xf32>
    %74 = arith.addf %69, %73 : vector<256x4xf32>
    %c0_83 = arith.constant 0 : index
    %c0_84 = arith.constant 0 : index
    %c0_85 = arith.constant 0 : index
    %c0_86 = arith.constant 0 : index
    %75 = vector.load %arg1[%c0_83, %c0_84, %c0_85, %c0_86] : memref<1x16x16x4xf32, #tpu.memory_space<vmem>>, vector<1x16x16x4xf32>
    %76 = vector.shape_cast %75 : vector<1x16x16x4xf32> to vector<16x16x4xf32>
    %77 = vector.shape_cast %76 : vector<16x16x4xf32> to vector<256x4xf32>
    %78 = arith.addf %74, %77 : vector<256x4xf32>
    %79 = vector.shape_cast %78 : vector<256x4xf32> to vector<16x16x4xf32>
    %c0_87 = arith.constant 0 : index
    %c0_88 = arith.constant 0 : index
    %c0_89 = arith.constant 0 : index
    %c0_90 = arith.constant 0 : index
    %80 = vector.load %arg6[%c0_87, %c0_88, %c0_89, %c0_90] : memref<1x16x16x4xf32, #tpu.memory_space<vmem>>, vector<1x16x16x4xf32>
    %81 = vector.shape_cast %80 : vector<1x16x16x4xf32> to vector<16x16x4xf32>
    %82 = vector.shape_cast %79 : vector<16x16x4xf32> to vector<1x16x16x4xf32>
    tpu.vector_store %arg6[%c0_87, %c0_88, %c0_89, %c0_90], %82 {strides = array<i32>} : memref<1x16x16x4xf32, #tpu.memory_space<vmem>>, vector<1x16x16x4xf32>,
    return
  }
  func.func @transform_0(%arg0: i32) -> (i32, i32, i32, i32) {
    %c0_i32 = arith.constant 0 : i32
    %c0_i32_0 = arith.constant 0 : i32
    %c0_i32_1 = arith.constant 0 : i32
    %c0_i32_2 = arith.constant 0 : i32
    return %arg0, %c0_i32, %c0_i32_0, %c0_i32_1 : i32, i32, i32, i32
  }
  func.func @transform_1(%arg0: i32) -> (i32, i32) {
    %c0_i32 = arith.constant 0 : i32
    %c0_i32_0 = arith.constant 0 : i32
    %c0_i32_1 = arith.constant 0 : i32
    return %c0_i32, %c0_i32_0 : i32, i32
  }
  func.func @transform_2(%arg0: i32) -> (i32, i32) {
    %c0_i32 = arith.constant 0 : i32
    %c0_i32_0 = arith.constant 0 : i32
    %c0_i32_1 = arith.constant 0 : i32
    return %c0_i32, %c0_i32_0 : i32, i32
  }
  func.func @transform_3(%arg0: i32) -> (i32, i32) {
    %c0_i32 = arith.constant 0 : i32
    %c0_i32_0 = arith.constant 0 : i32
    %c0_i32_1 = arith.constant 0 : i32
    return %c0_i32, %c0_i32_0 : i32, i32
  }
  func.func @transform_4(%arg0: i32) -> (i32, i32) {
    %c0_i32 = arith.constant 0 : i32
    %c0_i32_0 = arith.constant 0 : i32
    %c0_i32_1 = arith.constant 0 : i32
    return %c0_i32, %c0_i32_0 : i32, i32
  }
  func.func @transform_5(%arg0: i32) -> (i32, i32, i32, i32) {
    %c0_i32 = arith.constant 0 : i32
    %c0_i32_0 = arith.constant 0 : i32
    %c0_i32_1 = arith.constant 0 : i32
    %c0_i32_2 = arith.constant 0 : i32
    return %arg0, %c0_i32, %c0_i32_0, %c0_i32_1 : i32, i32, i32, i32
  }
}

</mosaic_0001>

<llo_original>
// kernel: tpu_custom_call.1
$region0: #{tpu_custom_call.1}
  #allocation0 [shape = 'u32[]', space=smem, size = 0x4, offset = 0x4, fixed_abs, tag = 'smem constant byte address 0x4 - core index']
  #allocation1 [shape = 'u32[144,128]{1,0:T(1,128)}', space=vmem, size = 0x12000, scoped, tag = 'internal scratch']
  #allocation2 [shape = 'f32[18,18,4]{2,1,0:T(8,128)}', space=vmem, size = 0x36000, scoped, tag = 'scratch operand']
  #allocation3 [shape = 'f32[18,18,4]{2,1,0:T(8,128)}', space=vmem, size = 0x36000, scoped, tag = 'scratch operand']
  %s0 = inlined_call_operand.vmem [shape: f32[2,16,16,4], index: 0, kind: input, shape index: {}]
  %s1 = inlined_call_operand.vmem [shape: bf16[36,4], index: 1, kind: input, shape index: {}]
  %s2 = inlined_call_operand.vmem [shape: bf16[36,4], index: 2, kind: input, shape index: {}]
  %s3 = inlined_call_operand.vmem [shape: f32[2,4], index: 3, kind: input, shape index: {}]
  %s4 = inlined_call_operand.vmem [shape: f32[2,4], index: 4, kind: input, shape index: {}]
  %s5 = inlined_call_operand.vmem [shape: f32[2,16,16,4], index: 5, kind: output, shape index: {}]
  %s6 = sld [smem:[#allocation0]]
  $region53: #{tpu_custom_call.1} parent=0
    _
  %s8 = ssub.s32 1, %s6
  %s9 = scalar_select 0, %s8, %s6
  loop: start=0, step=1, limit=4
  $region2: #{tpu_custom_call.1} parent=0 // loop_pre_header
    _
  $region3: #{tpu_custom_call.1} parent=0 // loop_header
    %s11 = sphi 0, %s15
    %p12 = scmp.ge.s32.totalorder %s11, 4
    %s21 = sphi 0, %s23
    %s24 = sphi 0, %s21
    %s25 = sphi 0, %s24
    %s41 = sphi 0, %s25
    %s45 = sphi 0, %s45
    %s47 = sphi 0, %s45
    %s48 = sphi 0, %s47
    %s62 = sphi 0, %s48
    %s66 = sphi 0, %s66
    %s68 = sphi 0, %s66
    %s69 = sphi 0, %s68
    %s83 = sphi 0, %s69
    %s87 = sphi 0, %s87
    %s89 = sphi 0, %s87
    %s90 = sphi 0, %s89
    %s104 = sphi 0, %s90
    %s108 = sphi 0, %s108
    %s110 = sphi 0, %s108
    %s111 = sphi 0, %s110
    %s125 = sphi 0, %s111
    %s131 = sphi 0, %s133
    %s134 = sphi 0, %s131
    %s135 = sphi 0, %s134
    %s151 = sphi 0, %s135
  $region4: #{tpu_custom_call.1} parent=0 // loop_header_branch
    %14 = sbr.rel (%p12) target = $region8
  $region5: #{tpu_custom_call.1} parent=0 // loop_body
    %s16 = ssub.s32 %s11, 1
    %s17 = ssub.s32 %s11, 2
    %s18 = sadd.s32 %s11, 1
    %s19 = ssub.s32 %s11, %s18
    %p20 = scmp.eq.s32.totalorder %s19, 0
    %s22 = sadd.s32 %s21, 1
    %s23 = scalar_select %p20, %s21, %s22
    %p26 = pneg %p20
    %p27 = scmp.eq.s32.totalorder %s11, 1
    %p28 = por %p26, %p27
    %p29 = scmp.ne.s32.totalorder %s21, %s24
    %p30 = scmp.eq.s32.totalorder %s11, 0
    %p31 = por %p29, %p30
    %p32 = scmp.ne.s32.totalorder %s21, %s24
    %p33 = scmp.eq.s32.totalorder %s16, 1
    %p34 = por %p32, %p33
    %p35 = scmp.ne.s32.totalorder %s24, %s25
    %p36 = scmp.eq.s32.totalorder %s16, 0
    %p37 = por %p35, %p36
    %p38 = scmp.ne.s32.totalorder %s24, %s25
    %p39 = scmp.eq.s32.totalorder %s17, 1
    %p40 = por %p38, %p39
    %p42 = scmp.ne.s32.totalorder %s25, %s41
    %p43 = scmp.eq.s32.totalorder %s17, 0
    %p44 = por %p42, %p43
    %s46 = sadd.s32 %s45, 1
    %p49 = scmp.eq.s32.totalorder %s11, 1
    %p50 = scmp.ne.s32.totalorder %s45, %s47
    %p51 = scmp.eq.s32.totalorder %s11, 0
    %p52 = por %p50, %p51
    %p53 = scmp.ne.s32.totalorder %s45, %s47
    %p54 = scmp.eq.s32.totalorder %s16, 1
    %p55 = por %p53, %p54
    %p56 = scmp.ne.s32.totalorder %s47, %s48
    %p57 = scmp.eq.s32.totalorder %s16, 0
    %p58 = por %p56, %p57
    %p59 = scmp.ne.s32.totalorder %s47, %s48
    %p60 = scmp.eq.s32.totalorder %s17, 1
    %p61 = por %p59, %p60
    %p63 = scmp.ne.s32.totalorder %s48, %s62
    %p64 = scmp.eq.s32.totalorder %s17, 0
    %p65 = por %p63, %p64
    %s67 = sadd.s32 %s66, 1
    %p70 = scmp.eq.s32.totalorder %s11, 1
    %p71 = scmp.ne.s32.totalorder %s66, %s68
    %p72 = scmp.eq.s32.totalorder %s11, 0
    %p73 = por %p71, %p72
    %p74 = scmp.ne.s32.totalorder %s66, %s68
    %p75 = scmp.eq.s32.totalorder %s16, 1
    %p76 = por %p74, %p75
    %p77 = scmp.ne.s32.totalorder %s68, %s69
    %p78 = scmp.eq.s32.totalorder %s16, 0
    %p79 = por %p77, %p78
    %p80 = scmp.ne.s32.totalorder %s68, %s69
    %p81 = scmp.eq.s32.totalorder %s17, 1
    %p82 = por %p80, %p81
    %p84 = scmp.ne.s32.totalorder %s69, %s83
    %p85 = scmp.eq.s32.totalorder %s17, 0
    %p86 = por %p84, %p85
    %s88 = sadd.s32 %s87, 1
    %p91 = scmp.eq.s32.totalorder %s11, 1
    %p92 = scmp.ne.s32.totalorder %s87, %s89
    %p93 = scmp.eq.s32.totalorder %s11, 0
    %p94 = por %p92, %p93
    %p95 = scmp.ne.s32.totalorder %s87, %s89
    %p96 = scmp.eq.s32.totalorder %s16, 1
    %p97 = por %p95, %p96
    %p98 = scmp.ne.s32.totalorder %s89, %s90
    %p99 = scmp.eq.s32.totalorder %s16, 0
    %p100 = por %p98, %p99
    %p101 = scmp.ne.s32.totalorder %s89, %s90
    %p102 = scmp.eq.s32.totalorder %s17, 1
    %p103 = por %p101, %p102
    %p105 = scmp.ne.s32.totalorder %s90, %s104
    %p106 = scmp.eq.s32.totalorder %s17, 0
    %p107 = por %p105, %p106
    %s109 = sadd.s32 %s108, 1
    %p112 = scmp.eq.s32.totalorder %s11, 1
    %p113 = scmp.ne.s32.totalorder %s108, %s110
    %p114 = scmp.eq.s32.totalorder %s11, 0
    %p115 = por %p113, %p114
    %p116 = scmp.ne.s32.totalorder %s108, %s110
    %p117 = scmp.eq.s32.totalorder %s16, 1
    %p118 = por %p116, %p117
    %p119 = scmp.ne.s32.totalorder %s110, %s111
    %p120 = scmp.eq.s32.totalorder %s16, 0
    %p121 = por %p119, %p120
    %p122 = scmp.ne.s32.totalorder %s110, %s111
    %p123 = scmp.eq.s32.totalorder %s17, 1
    %p124 = por %p122, %p123
    %p126 = scmp.ne.s32.totalorder %s111, %s125
    %p127 = scmp.eq.s32.totalorder %s17, 0
    %p128 = por %p126, %p127
    %s129 = ssub.s32 %s11, %s18
    %p130 = scmp.eq.s32.totalorder %s129, 0
    %s132 = sadd.s32 %s131, 1
    %s133 = scalar_select %p130, %s131, %s132
    %p136 = pneg %p130
    %p137 = scmp.eq.s32.totalorder %s11, 1
    %p138 = por %p136, %p137
    %p139 = scmp.ne.s32.totalorder %s131, %s134
    %p140 = scmp.eq.s32.totalorder %s11, 0
    %p141 = por %p139, %p140
    %p142 = scmp.ne.s32.totalorder %s131, %s134
    %p143 = scmp.eq.s32.totalorder %s16, 1
    %p144 = por %p142, %p143
    %p145 = scmp.ne.s32.totalorder %s134, %s135
    %p146 = scmp.eq.s32.totalorder %s16, 0
    %p147 = por %p145, %p146
    %p148 = scmp.ne.s32.totalorder %s134, %s135
    %p149 = scmp.eq.s32.totalorder %s17, 1
    %p150 = por %p148, %p149
    %p152 = scmp.ne.s32.totalorder %s135, %s151
    %p153 = scmp.eq.s32.totalorder %s17, 0
    %p154 = por %p152, %p153
    %p155 = scmp.le.s32.totalorder 1, %s11
    %p156 = scmp.lt.s32.totalorder %s11, 3
    %p157 = pnand %p155, %p156
    %p158 = pneg %p157
    // Predicated region
    $region9: #{tpu_custom_call.1} parent=5 // pred_check
      _
    $region10: #{tpu_custom_call.1} parent=5 // pred_check_branch
      %160 = sbr.rel (%p157) target = $region12
    $region11: #{tpu_custom_call.1} parent=5 // pred_region
      %s161 = ssub.s32 %s11, 1
      // Predicated region
      $region13: #{tpu_custom_call.1} parent=11 // pred_check
        %p162 = pneg %p58
      $region14: #{tpu_custom_call.1} parent=11 // pred_check_branch
        %164 = sbr.rel (%p162) target = $region16
      $region15: #{tpu_custom_call.1} parent=11 // pred_region
        _
      $region16: #{tpu_custom_call.1} parent=11 // pred_fallthru
        _
      // Predicated region
      $region17: #{tpu_custom_call.1} parent=11 // pred_check
        %p165 = pneg %p79
      $region18: #{tpu_custom_call.1} parent=11 // pred_check_branch
        %167 = sbr.rel (%p165) target = $region20
      $region19: #{tpu_custom_call.1} parent=11 // pred_region
        _
      $region20: #{tpu_custom_call.1} parent=11 // pred_fallthru
        _
      // Predicated region
      $region21: #{tpu_custom_call.1} parent=11 // pred_check
        %p168 = pneg %p100
      $region22: #{tpu_custom_call.1} parent=11 // pred_check_branch
        %170 = sbr.rel (%p168) target = $region24
      $region23: #{tpu_custom_call.1} parent=11 // pred_region
        _
      $region24: #{tpu_custom_call.1} parent=11 // pred_fallthru
        _
      // Predicated region
      $region25: #{tpu_custom_call.1} parent=11 // pred_check
        %p171 = pneg %p121
      $region26: #{tpu_custom_call.1} parent=11 // pred_check_branch
        %173 = sbr.rel (%p171) target = $region28
      $region27: #{tpu_custom_call.1} parent=11 // pred_region
        _
      $region28: #{tpu_custom_call.1} parent=11 // pred_fallthru
        _
    $region12: #{tpu_custom_call.1} parent=5 // pred_fallthru
      _
    %p174 = scmp.lt.s32.totalorder %s11, 2
    // Predicated region
    $region29: #{tpu_custom_call.1} parent=5 // pred_check
      %p175 = pneg %p174
    $region30: #{tpu_custom_call.1} parent=5 // pred_check_branch
      %177 = sbr.rel (%p175) target = $region32
    $region31: #{tpu_custom_call.1} parent=5 // pred_region
      // Predicated region
      $region33: #{tpu_custom_call.1} parent=31 // pred_check
        %p178 = pneg %p31
      $region34: #{tpu_custom_call.1} parent=31 // pred_check_branch
        %180 = sbr.rel (%p178) target = $region36
      $region35: #{tpu_custom_call.1} parent=31 // pred_region
        %p181 = scmp.lt.s32.totalorder %s11, 1
        %s182 = scalar_select %p181, %s11, 1
        %s183 = smul.addr %s182, 32
        %s184 = smul.addr %s183, 8
        %s185 = scalar_lea.vmem %s0, %s184
      $region36: #{tpu_custom_call.1} parent=31 // pred_fallthru
        _
    $region32: #{tpu_custom_call.1} parent=5 // pred_fallthru
      _
    %p186 = scmp.le.s32.totalorder 1, %s11
    %p187 = scmp.lt.s32.totalorder %s11, 3
    %p188 = pnand %p186, %p187
    %p189 = pneg %p188
    // Predicated region
    $region37: #{tpu_custom_call.1} parent=5 // pred_check
      _
    $region38: #{tpu_custom_call.1} parent=5 // pred_check_branch
      %191 = sbr.rel (%p188) target = $region40
    $region39: #{tpu_custom_call.1} parent=5 // pred_region
      %s192 = ssub.s32 %s11, 1
      %p193 = scmp.lt.s32.totalorder %s16, 1
      %s194 = scalar_select %p193, %s16, 1
      %s195 = smul.addr %s194, 32
      %s196 = smul.addr %s195, 8
      %s197 = scalar_lea.vmem %s0, %s196
      %p198 = pneg %p37
      %p199 = pneg %p34
      %p200 = pneg %p58
      %p201 = pneg %p55
      %p202 = pneg %p79
      %p203 = pneg %p76
      %p204 = pneg %p100
      %p205 = pneg %p97
      %p206 = pneg %p121
      %p207 = pneg %p118
      %p208 = pneg %p147
      %p209 = pneg %p144
      %p210 = scmp.lt.s32.totalorder %s16, 1
      %s211 = scalar_select %p210, %s16, 1
      %s212 = smul.addr %s211, 32
      %s213 = smul.addr %s212, 8
      %s214 = scalar_lea.vmem %s5, %s213
      %p215 = scmp.lt.s32.totalorder %s16, 1
      %s216 = scalar_select %p215, %s16, 1
      %s217 = smul.addr %s216, 32
      %s218 = smul.addr %s217, 8
      %s219 = scalar_lea.vmem %s0, %s218
      %p220 = scmp.lt.s32.totalorder %s16, 1
      %s221 = scalar_select %p220, %s16, 1
      %s222 = smul.addr %s221, 32
      %s223 = smul.addr %s222, 8
      %s224 = scalar_lea.vmem %s5, %s223
      %vm226 = vcmask 31744
      %227 = vst.msk [vmem:[#allocation2] sm:$0xff] %vm226, 0.0
      %228 = vst.msk [vmem:[#allocation2 + $0x8] sm:$0xff] %vm226, 0.0
      %vm229 = vcmask 25600
      %230 = vst.msk [vmem:[#allocation2 + $0x10] sm:$0x3] %vm229, 0.0
      %231 = vst.msk [vmem:[#allocation2 + $0x18] sm:$0xff] %vm226, 0.0
      %232 = vst.msk [vmem:[#allocation2 + $0x20] sm:$0xff] %vm226, 0.0
      %233 = vst.msk [vmem:[#allocation2 + $0x28] sm:$0x3] %vm229, 0.0
      %234 = vst.msk [vmem:[#allocation2 + $0x30] sm:$0xff] %vm226, 0.0
      %235 = vst.msk [vmem:[#allocation2 + $0x38] sm:$0xff] %vm226, 0.0
      %236 = vst.msk [vmem:[#allocation2 + $0x40] sm:$0x3] %vm229, 0.0
      %237 = vst.msk [vmem:[#allocation2 + $0x48] sm:$0xff] %vm226, 0.0
      %238 = vst.msk [vmem:[#allocation2 + $0x50] sm:$0xff] %vm226, 0.0
      %239 = vst.msk [vmem:[#allocation2 + $0x58] sm:$0x3] %vm229, 0.0
      %240 = vst.msk [vmem:[#allocation2 + $0x60] sm:$0xff] %vm226, 0.0
      %241 = vst.msk [vmem:[#allocation2 + $0x68] sm:$0xff] %vm226, 0.0
      %242 = vst.msk [vmem:[#allocation2 + $0x70] sm:$0x3] %vm229, 0.0
      %243 = vst.msk [vmem:[#allocation2 + $0x78] sm:$0xff] %vm226, 0.0
      %244 = vst.msk [vmem:[#allocation2 + $0x80] sm:$0xff] %vm226, 0.0
      %245 = vst.msk [vmem:[#allocation2 + $0x88] sm:$0x3] %vm229, 0.0
      %246 = vst.msk [vmem:[#allocation2 + $0x90] sm:$0xff] %vm226, 0.0
      %247 = vst.msk [vmem:[#allocation2 + $0x98] sm:$0xff] %vm226, 0.0
      %248 = vst.msk [vmem:[#allocation2 + $0xa0] sm:$0x3] %vm229, 0.0
      %249 = vst.msk [vmem:[#allocation2 + $0xa8] sm:$0xff] %vm226, 0.0
      %250 = vst.msk [vmem:[#allocation2 + $0xb0] sm:$0xff] %vm226, 0.0
      %251 = vst.msk [vmem:[#allocation2 + $0xb8] sm:$0x3] %vm229, 0.0
      %252 = vst.msk [vmem:[#allocation2 + $0xc0] sm:$0xff] %vm226, 0.0
      %253 = vst.msk [vmem:[#allocation2 + $0xc8] sm:$0xff] %vm226, 0.0
      %254 = vst.msk [vmem:[#allocation2 + $0xd0] sm:$0x3] %vm229, 0.0
      %255 = vst.msk [vmem:[#allocation2 + $0xd8] sm:$0xff] %vm226, 0.0
      %256 = vst.msk [vmem:[#allocation2 + $0xe0] sm:$0xff] %vm226, 0.0
      %257 = vst.msk [vmem:[#allocation2 + $0xe8] sm:$0x3] %vm229, 0.0
      %258 = vst.msk [vmem:[#allocation2 + $0xf0] sm:$0xff] %vm226, 0.0
      %259 = vst.msk [vmem:[#allocation2 + $0xf8] sm:$0xff] %vm226, 0.0
      %260 = vst.msk [vmem:[#allocation2 + $0x100] sm:$0x3] %vm229, 0.0
      %261 = vst.msk [vmem:[#allocation2 + $0x108] sm:$0xff] %vm226, 0.0
      %262 = vst.msk [vmem:[#allocation2 + $0x110] sm:$0xff] %vm226, 0.0
      %263 = vst.msk [vmem:[#allocation2 + $0x118] sm:$0x3] %vm229, 0.0
      %264 = vst.msk [vmem:[#allocation2 + $0x120] sm:$0xff] %vm226, 0.0
      %265 = vst.msk [vmem:[#allocation2 + $0x128] sm:$0xff] %vm226, 0.0
      %266 = vst.msk [vmem:[#allocation2 + $0x130] sm:$0x3] %vm229, 0.0
      %267 = vst.msk [vmem:[#allocation2 + $0x138] sm:$0xff] %vm226, 0.0
      %268 = vst.msk [vmem:[#allocation2 + $0x140] sm:$0xff] %vm226, 0.0
      %269 = vst.msk [vmem:[#allocation2 + $0x148] sm:$0x3] %vm229, 0.0
      %270 = vst.msk [vmem:[#allocation2 + $0x150] sm:$0xff] %vm226, 0.0
      %271 = vst.msk [vmem:[#allocation2 + $0x158] sm:$0xff] %vm226, 0.0
      %272 = vst.msk [vmem:[#allocation2 + $0x160] sm:$0x3] %vm229, 0.0
      %273 = vst.msk [vmem:[#allocation2 + $0x168] sm:$0xff] %vm226, 0.0
      %274 = vst.msk [vmem:[#allocation2 + $0x170] sm:$0xff] %vm226, 0.0
      %275 = vst.msk [vmem:[#allocation2 + $0x178] sm:$0x3] %vm229, 0.0
      %276 = vst.msk [vmem:[#allocation2 + $0x180] sm:$0xff] %vm226, 0.0
      %277 = vst.msk [vmem:[#allocation2 + $0x188] sm:$0xff] %vm226, 0.0
      %278 = vst.msk [vmem:[#allocation2 + $0x190] sm:$0x3] %vm229, 0.0
      %279 = vst.msk [vmem:[#allocation2 + $0x198] sm:$0xff] %vm226, 0.0
      %280 = vst.msk [vmem:[#allocation2 + $0x1a0] sm:$0xff] %vm226, 0.0
      %281 = vst.msk [vmem:[#allocation2 + $0x1a8] sm:$0x3] %vm229, 0.0
      %v282 = vld [vmem:[%s219] sm:$0xff]
      %v283 = vld [vmem:[%s219 + $0x8] sm:$0xff]
      %v284 = vld [vmem:[%s219 + $0x10] sm:$0xff]
      %v285 = vld [vmem:[%s219 + $0x18] sm:$0xff]
      %v286 = vld [vmem:[%s219 + $0x20] sm:$0xff]
      %v287 = vld [vmem:[%s219 + $0x28] sm:$0xff]
      %v288 = vld [vmem:[%s219 + $0x30] sm:$0xff]
      %v289 = vld [vmem:[%s219 + $0x38] sm:$0xff]
      %v290 = vld [vmem:[%s219 + $0x40] sm:$0xff]
      %v291 = vld [vmem:[%s219 + $0x48] sm:$0xff]
      %v292 = vld [vmem:[%s219 + $0x50] sm:$0xff]
      %v293 = vld [vmem:[%s219 + $0x58] sm:$0xff]
      %v294 = vld [vmem:[%s219 + $0x60] sm:$0xff]
      %v295 = vld [vmem:[%s219 + $0x68] sm:$0xff]
      %v296 = vld [vmem:[%s219 + $0x70] sm:$0xff]
      %v297 = vld [vmem:[%s219 + $0x78] sm:$0xff]
      %v298 = vld [vmem:[%s219 + $0x80] sm:$0xff]
      %v299 = vld [vmem:[%s219 + $0x88] sm:$0xff]
      %v300 = vld [vmem:[%s219 + $0x90] sm:$0xff]
      %v301 = vld [vmem:[%s219 + $0x98] sm:$0xff]
      %v302 = vld [vmem:[%s219 + $0xa0] sm:$0xff]
      %v303 = vld [vmem:[%s219 + $0xa8] sm:$0xff]
      %v304 = vld [vmem:[%s219 + $0xb0] sm:$0xff]
      %v305 = vld [vmem:[%s219 + $0xb8] sm:$0xff]
      %v306 = vld [vmem:[%s219 + $0xc0] sm:$0xff]
      %v307 = vld [vmem:[%s219 + $0xc8] sm:$0xff]
      %v308 = vld [vmem:[%s219 + $0xd0] sm:$0xff]
      %v309 = vld [vmem:[%s219 + $0xd8] sm:$0xff]
      %v310 = vld [vmem:[%s219 + $0xe0] sm:$0xff]
      %v311 = vld [vmem:[%s219 + $0xe8] sm:$0xff]
      %v312 = vld [vmem:[%s219 + $0xf0] sm:$0xff]
      %v313 = vld [vmem:[%s219 + $0xf8] sm:$0xff]
      %s314 = scalar_lea.vmem [#allocation2], 24
      %315 = vst.msk [vmem:[%s314 + $0x1] sm:$0xff] %vm226, %v282
      %316 = vst.msk [vmem:[%s314 + $0x9] sm:$0xff] %vm226, %v283
      %317 = vst.msk [vmem:[%s314 + $0x19] sm:$0xff] %vm226, %v284
      %318 = vst.msk [vmem:[%s314 + $0x21] sm:$0xff] %vm226, %v285
      %319 = vst.msk [vmem:[%s314 + $0x31] sm:$0xff] %vm226, %v286
      %320 = vst.msk [vmem:[%s314 + $0x39] sm:$0xff] %vm226, %v287
      %321 = vst.msk [vmem:[%s314 + $0x49] sm:$0xff] %vm226, %v288
      %322 = vst.msk [vmem:[%s314 + $0x51] sm:$0xff] %vm226, %v289
      %323 = vst.msk [vmem:[%s314 + $0x61] sm:$0xff] %vm226, %v290
      %324 = vst.msk [vmem:[%s314 + $0x69] sm:$0xff] %vm226, %v291
      %325 = vst.msk [vmem:[%s314 + $0x79] sm:$0xff] %vm226, %v292
      %326 = vst.msk [vmem:[%s314 + $0x81] sm:$0xff] %vm226, %v293
      %327 = vst.msk [vmem:[%s314 + $0x91] sm:$0xff] %vm226, %v294
      %328 = vst.msk [vmem:[%s314 + $0x99] sm:$0xff] %vm226, %v295
      %329 = vst.msk [vmem:[%s314 + $0xa9] sm:$0xff] %vm226, %v296
      %330 = vst.msk [vmem:[%s314 + $0xb1] sm:$0xff] %vm226, %v297
      %331 = vst.msk [vmem:[%s314 + $0xc1] sm:$0xff] %vm226, %v298
      %332 = vst.msk [vmem:[%s314 + $0xc9] sm:$0xff] %vm226, %v299
      %333 = vst.msk [vmem:[%s314 + $0xd9] sm:$0xff] %vm226, %v300
      %334 = vst.msk [vmem:[%s314 + $0xe1] sm:$0xff] %vm226, %v301
      %335 = vst.msk [vmem:[%s314 + $0xf1] sm:$0xff] %vm226, %v302
      %336 = vst.msk [vmem:[%s314 + $0xf9] sm:$0xff] %vm226, %v303
      %337 = vst.msk [vmem:[%s314 + $0x109] sm:$0xff] %vm226, %v304
      %338 = vst.msk [vmem:[%s314 + $0x111] sm:$0xff] %vm226, %v305
      %339 = vst.msk [vmem:[%s314 + $0x121] sm:$0xff] %vm226, %v306
      %340 = vst.msk [vmem:[%s314 + $0x129] sm:$0xff] %vm226, %v307
      %341 = vst.msk [vmem:[%s314 + $0x139] sm:$0xff] %vm226, %v308
      %342 = vst.msk [vmem:[%s314 + $0x141] sm:$0xff] %vm226, %v309
      %343 = vst.msk [vmem:[%s314 + $0x151] sm:$0xff] %vm226, %v310
      %344 = vst.msk [vmem:[%s314 + $0x159] sm:$0xff] %vm226, %v311
      %345 = vst.msk [vmem:[%s314 + $0x169] sm:$0xff] %vm226, %v312
      %346 = vst.msk [vmem:[%s314 + $0x171] sm:$0xff] %vm226, %v313
      %v347 = vld [vmem:[#allocation2] sm:$0xff]
      %v348 = vld [vmem:[#allocation2 + $0x8] sm:$0xff]
      %v349 = vld [vmem:[#allocation2 + $0x18] sm:$0xff]
      %v350 = vld [vmem:[#allocation2 + $0x20] sm:$0xff]
      %v351 = vld [vmem:[#allocation2 + $0x30] sm:$0xff]
      %v352 = vld [vmem:[#allocation2 + $0x38] sm:$0xff]
      %v353 = vld [vmem:[#allocation2 + $0x48] sm:$0xff]
      %v354 = vld [vmem:[#allocation2 + $0x50] sm:$0xff]
      %v355 = vld [vmem:[#allocation2 + $0x60] sm:$0xff]
      %v356 = vld [vmem:[#allocation2 + $0x68] sm:$0xff]
      %v357 = vld [vmem:[#allocation2 + $0x78] sm:$0xff]
      %v358 = vld [vmem:[#allocation2 + $0x80] sm:$0xff]
      %v359 = vld [vmem:[#allocation2 + $0x90] sm:$0xff]
      %v360 = vld [vmem:[#allocation2 + $0x98] sm:$0xff]
      %v361 = vld [vmem:[#allocation2 + $0xa8] sm:$0xff]
      %v362 = vld [vmem:[#allocation2 + $0xb0] sm:$0xff]
      %v363 = vld [vmem:[#allocation2 + $0xc0] sm:$0xff]
      %v364 = vld [vmem:[#allocation2 + $0xc8] sm:$0xff]
      %v365 = vld [vmem:[#allocation2 + $0xd8] sm:$0xff]
      %v366 = vld [vmem:[#allocation2 + $0xe0] sm:$0xff]
      %v367 = vld [vmem:[#allocation2 + $0xf0] sm:$0xff]
      %v368 = vld [vmem:[#allocation2 + $0xf8] sm:$0xff]
      %v369 = vld [vmem:[#allocation2 + $0x108] sm:$0xff]
      %v370 = vld [vmem:[#allocation2 + $0x110] sm:$0xff]
      %v371 = vld [vmem:[#allocation2 + $0x120] sm:$0xff]
      %v372 = vld [vmem:[#allocation2 + $0x128] sm:$0xff]
      %v373 = vld [vmem:[#allocation2 + $0x138] sm:$0xff]
      %v374 = vld [vmem:[#allocation2 + $0x140] sm:$0xff]
      %v375 = vld [vmem:[#allocation2 + $0x150] sm:$0xff]
      %v376 = vld [vmem:[#allocation2 + $0x158] sm:$0xff]
      %v377 = vld [vmem:[#allocation2 + $0x168] sm:$0xff]
      %v378 = vld [vmem:[#allocation2 + $0x170] sm:$0xff]
      %v379 = vld [vmem:[#allocation2 + $0x1] sm:$0xff]
      %v380 = vld [vmem:[#allocation2 + $0x9] sm:$0xff]
      %v381 = vld [vmem:[#allocation2 + $0x19] sm:$0xff]
      %v382 = vld [vmem:[#allocation2 + $0x21] sm:$0xff]
      %v383 = vld [vmem:[#allocation2 + $0x31] sm:$0xff]
      %v384 = vld [vmem:[#allocation2 + $0x39] sm:$0xff]
      %v385 = vld [vmem:[#allocation2 + $0x49] sm:$0xff]
      %v386 = vld [vmem:[#allocation2 + $0x51] sm:$0xff]
      %v387 = vld [vmem:[#allocation2 + $0x61] sm:$0xff]
      %v388 = vld [vmem:[#allocation2 + $0x69] sm:$0xff]
      %v389 = vld [vmem:[#allocation2 + $0x79] sm:$0xff]
      %v390 = vld [vmem:[#allocation2 + $0x81] sm:$0xff]
      %v391 = vld [vmem:[#allocation2 + $0x91] sm:$0xff]
      %v392 = vld [vmem:[#allocation2 + $0x99] sm:$0xff]
      %v393 = vld [vmem:[#allocation2 + $0xa9] sm:$0xff]
      %v394 = vld [vmem:[#allocation2 + $0xb1] sm:$0xff]
      %v395 = vld [vmem:[#allocation2 + $0xc1] sm:$0xff]
      %v396 = vld [vmem:[#allocation2 + $0xc9] sm:$0xff]
      %v397 = vld [vmem:[#allocation2 + $0xd9] sm:$0xff]
      %v398 = vld [vmem:[#allocation2 + $0xe1] sm:$0xff]
      %v399 = vld [vmem:[#allocation2 + $0xf1] sm:$0xff]
      %v400 = vld [vmem:[#allocation2 + $0xf9] sm:$0xff]
      %v401 = vld [vmem:[#allocation2 + $0x109] sm:$0xff]
      %v402 = vld [vmem:[#allocation2 + $0x111] sm:$0xff]
      %v403 = vld [vmem:[#allocation2 + $0x121] sm:$0xff]
      %v404 = vld [vmem:[#allocation2 + $0x129] sm:$0xff]
      %v405 = vld [vmem:[#allocation2 + $0x139] sm:$0xff]
      %v406 = vld [vmem:[#allocation2 + $0x141] sm:$0xff]
      %v407 = vld [vmem:[#allocation2 + $0x151] sm:$0xff]
      %v408 = vld [vmem:[#allocation2 + $0x159] sm:$0xff]
      %v409 = vld [vmem:[#allocation2 + $0x169] sm:$0xff]
      %v410 = vld [vmem:[#allocation2 + $0x171] sm:$0xff]
      %v411 = vld [vmem:[#allocation2 + $0x2] sm:$0xff]
      %v412 = vld [vmem:[#allocation2 + $0xa] sm:$0xff]
      %v413 = vld [vmem:[#allocation2 + $0x1a] sm:$0xff]
      %v414 = vld [vmem:[#allocation2 + $0x22] sm:$0xff]
      %v415 = vld [vmem:[#allocation2 + $0x32] sm:$0xff]
      %v416 = vld [vmem:[#allocation2 + $0x3a] sm:$0xff]
      %v417 = vld [vmem:[#allocation2 + $0x4a] sm:$0xff]
      %v418 = vld [vmem:[#allocation2 + $0x52] sm:$0xff]
      %v419 = vld [vmem:[#allocation2 + $0x62] sm:$0xff]
      %v420 = vld [vmem:[#allocation2 + $0x6a] sm:$0xff]
      %v421 = vld [vmem:[#allocation2 + $0x7a] sm:$0xff]
      %v422 = vld [vmem:[#allocation2 + $0x82] sm:$0xff]
      %v423 = vld [vmem:[#allocation2 + $0x92] sm:$0xff]
      %v424 = vld [vmem:[#allocation2 + $0x9a] sm:$0xff]
      %v425 = vld [vmem:[#allocation2 + $0xaa] sm:$0xff]
      %v426 = vld [vmem:[#allocation2 + $0xb2] sm:$0xff]
      %v427 = vld [vmem:[#allocation2 + $0xc2] sm:$0xff]
      %v428 = vld [vmem:[#allocation2 + $0xca] sm:$0xff]
      %v429 = vld [vmem:[#allocation2 + $0xda] sm:$0xff]
      %v430 = vld [vmem:[#allocation2 + $0xe2] sm:$0xff]
      %v431 = vld [vmem:[#allocation2 + $0xf2] sm:$0xff]
      %v432 = vld [vmem:[#allocation2 + $0xfa] sm:$0xff]
      %v433 = vld [vmem:[#allocation2 + $0x10a] sm:$0xff]
      %v434 = vld [vmem:[#allocation2 + $0x112] sm:$0xff]
      %v435 = vld [vmem:[#allocation2 + $0x122] sm:$0xff]
      %v436 = vld [vmem:[#allocation2 + $0x12a] sm:$0xff]
      %v437 = vld [vmem:[#allocation2 + $0x13a] sm:$0xff]
      %v438 = vld [vmem:[#allocation2 + $0x142] sm:$0xff]
      %v439 = vld [vmem:[#allocation2 + $0x152] sm:$0xff]
      %v440 = vld [vmem:[#allocation2 + $0x15a] sm:$0xff]
      %v441 = vld [vmem:[#allocation2 + $0x16a] sm:$0xff]
      %v442 = vld [vmem:[#allocation2 + $0x172] sm:$0xff]
      %v443 = vld [vmem:[%s314] sm:$0xff]
      %v444 = vld [vmem:[%s314 + $0x8] sm:$0xff]
      %v445 = vld [vmem:[%s314 + $0x18] sm:$0xff]
      %v446 = vld [vmem:[%s314 + $0x20] sm:$0xff]
      %v447 = vld [vmem:[%s314 + $0x30] sm:$0xff]
      %v448 = vld [vmem:[%s314 + $0x38] sm:$0xff]
      %v449 = vld [vmem:[%s314 + $0x48] sm:$0xff]
      %v450 = vld [vmem:[%s314 + $0x50] sm:$0xff]
      %v451 = vld [vmem:[%s314 + $0x60] sm:$0xff]
      %v452 = vld [vmem:[%s314 + $0x68] sm:$0xff]
      %v453 = vld [vmem:[%s314 + $0x78] sm:$0xff]
      %v454 = vld [vmem:[%s314 + $0x80] sm:$0xff]
      %v455 = vld [vmem:[%s314 + $0x90] sm:$0xff]
      %v456 = vld [vmem:[%s314 + $0x98] sm:$0xff]
      %v457 = vld [vmem:[%s314 + $0xa8] sm:$0xff]
      %v458 = vld [vmem:[%s314 + $0xb0] sm:$0xff]
      %v459 = vld [vmem:[%s314 + $0xc0] sm:$0xff]
      %v460 = vld [vmem:[%s314 + $0xc8] sm:$0xff]
      %v461 = vld [vmem:[%s314 + $0xd8] sm:$0xff]
      %v462 = vld [vmem:[%s314 + $0xe0] sm:$0xff]
      %v463 = vld [vmem:[%s314 + $0xf0] sm:$0xff]
      %v464 = vld [vmem:[%s314 + $0xf8] sm:$0xff]
      %v465 = vld [vmem:[%s314 + $0x108] sm:$0xff]
      %v466 = vld [vmem:[%s314 + $0x110] sm:$0xff]
      %v467 = vld [vmem:[%s314 + $0x120] sm:$0xff]
      %v468 = vld [vmem:[%s314 + $0x128] sm:$0xff]
      %v469 = vld [vmem:[%s314 + $0x138] sm:$0xff]
      %v470 = vld [vmem:[%s314 + $0x140] sm:$0xff]
      %v471 = vld [vmem:[%s314 + $0x150] sm:$0xff]
      %v472 = vld [vmem:[%s314 + $0x158] sm:$0xff]
      %v473 = vld [vmem:[%s314 + $0x168] sm:$0xff]
      %v474 = vld [vmem:[%s314 + $0x170] sm:$0xff]
      %v475 = vld [vmem:[%s314 + $0x1] sm:$0xff]
      %v476 = vld [vmem:[%s314 + $0x9] sm:$0xff]
      %v477 = vld [vmem:[%s314 + $0x19] sm:$0xff]
      %v478 = vld [vmem:[%s314 + $0x21] sm:$0xff]
      %v479 = vld [vmem:[%s314 + $0x31] sm:$0xff]
      %v480 = vld [vmem:[%s314 + $0x39] sm:$0xff]
      %v481 = vld [vmem:[%s314 + $0x49] sm:$0xff]
      %v482 = vld [vmem:[%s314 + $0x51] sm:$0xff]
      %v483 = vld [vmem:[%s314 + $0x61] sm:$0xff]
      %v484 = vld [vmem:[%s314 + $0x69] sm:$0xff]
      %v485 = vld [vmem:[%s314 + $0x79] sm:$0xff]
      %v486 = vld [vmem:[%s314 + $0x81] sm:$0xff]
      %v487 = vld [vmem:[%s314 + $0x91] sm:$0xff]
      %v488 = vld [vmem:[%s314 + $0x99] sm:$0xff]
      %v489 = vld [vmem:[%s314 + $0xa9] sm:$0xff]
      %v490 = vld [vmem:[%s314 + $0xb1] sm:$0xff]
      %v491 = vld [vmem:[%s314 + $0xc1] sm:$0xff]
      %v492 = vld [vmem:[%s314 + $0xc9] sm:$0xff]
      %v493 = vld [vmem:[%s314 + $0xd9] sm:$0xff]
      %v494 = vld [vmem:[%s314 + $0xe1] sm:$0xff]
      %v495 = vld [vmem:[%s314 + $0xf1] sm:$0xff]
      %v496 = vld [vmem:[%s314 + $0xf9] sm:$0xff]
      %v497 = vld [vmem:[%s314 + $0x109] sm:$0xff]
      %v498 = vld [vmem:[%s314 + $0x111] sm:$0xff]
      %v499 = vld [vmem:[%s314 + $0x121] sm:$0xff]
      %v500 = vld [vmem:[%s314 + $0x129] sm:$0xff]
      %v501 = vld [vmem:[%s314 + $0x139] sm:$0xff]
      %v502 = vld [vmem:[%s314 + $0x141] sm:$0xff]
      %v503 = vld [vmem:[%s314 + $0x151] sm:$0xff]
      %v504 = vld [vmem:[%s314 + $0x159] sm:$0xff]
      %v505 = vld [vmem:[%s314 + $0x169] sm:$0xff]
      %v506 = vld [vmem:[%s314 + $0x171] sm:$0xff]
      %v507 = vld [vmem:[%s314 + $0x2] sm:$0xff]
      %v508 = vld [vmem:[%s314 + $0xa] sm:$0xff]
      %v509 = vld [vmem:[%s314 + $0x1a] sm:$0xff]
      %v510 = vld [vmem:[%s314 + $0x22] sm:$0xff]
      %v511 = vld [vmem:[%s314 + $0x32] sm:$0xff]
      %v512 = vld [vmem:[%s314 + $0x3a] sm:$0xff]
      %v513 = vld [vmem:[%s314 + $0x4a] sm:$0xff]
      %v514 = vld [vmem:[%s314 + $0x52] sm:$0xff]
      %v515 = vld [vmem:[%s314 + $0x62] sm:$0xff]
      %v516 = vld [vmem:[%s314 + $0x6a] sm:$0xff]
      %v517 = vld [vmem:[%s314 + $0x7a] sm:$0xff]
      %v518 = vld [vmem:[%s314 + $0x82] sm:$0xff]
      %v519 = vld [vmem:[%s314 + $0x92] sm:$0xff]
      %v520 = vld [vmem:[%s314 + $0x9a] sm:$0xff]
      %v521 = vld [vmem:[%s314 + $0xaa] sm:$0xff]
      %v522 = vld [vmem:[%s314 + $0xb2] sm:$0xff]
      %v523 = vld [vmem:[%s314 + $0xc2] sm:$0xff]
      %v524 = vld [vmem:[%s314 + $0xca] sm:$0xff]
      %v525 = vld [vmem:[%s314 + $0xda] sm:$0xff]
      %v526 = vld [vmem:[%s314 + $0xe2] sm:$0xff]
      %v527 = vld [vmem:[%s314 + $0xf2] sm:$0xff]
      %v528 = vld [vmem:[%s314 + $0xfa] sm:$0xff]
      %v529 = vld [vmem:[%s314 + $0x10a] sm:$0xff]
      %v530 = vld [vmem:[%s314 + $0x112] sm:$0xff]
      %v531 = vld [vmem:[%s314 + $0x122] sm:$0xff]
      %v532 = vld [vmem:[%s314 + $0x12a] sm:$0xff]
      %v533 = vld [vmem:[%s314 + $0x13a] sm:$0xff]
      %v534 = vld [vmem:[%s314 + $0x142] sm:$0xff]
      %v535 = vld [vmem:[%s314 + $0x152] sm:$0xff]
      %v536 = vld [vmem:[%s314 + $0x15a] sm:$0xff]
      %v537 = vld [vmem:[%s314 + $0x16a] sm:$0xff]
      %v538 = vld [vmem:[%s314 + $0x172] sm:$0xff]
      %s539 = scalar_lea.vmem [#allocation2], 48
      %v540 = vld [vmem:[%s539] sm:$0xff]
      %v541 = vld [vmem:[%s539 + $0x8] sm:$0xff]
      %v542 = vld [vmem:[%s539 + $0x18] sm:$0xff]
      %v543 = vld [vmem:[%s539 + $0x20] sm:$0xff]
      %v544 = vld [vmem:[%s539 + $0x30] sm:$0xff]
      %v545 = vld [vmem:[%s539 + $0x38] sm:$0xff]
      %v546 = vld [vmem:[%s539 + $0x48] sm:$0xff]
      %v547 = vld [vmem:[%s539 + $0x50] sm:$0xff]
      %v548 = vld [vmem:[%s539 + $0x60] sm:$0xff]
      %v549 = vld [vmem:[%s539 + $0x68] sm:$0xff]
      %v550 = vld [vmem:[%s539 + $0x78] sm:$0xff]
      %v551 = vld [vmem:[%s539 + $0x80] sm:$0xff]
      %v552 = vld [vmem:[%s539 + $0x90] sm:$0xff]
      %v553 = vld [vmem:[%s539 + $0x98] sm:$0xff]
      %v554 = vld [vmem:[%s539 + $0xa8] sm:$0xff]
      %v555 = vld [vmem:[%s539 + $0xb0] sm:$0xff]
      %v556 = vld [vmem:[%s539 + $0xc0] sm:$0xff]
      %v557 = vld [vmem:[%s539 + $0xc8] sm:$0xff]
      %v558 = vld [vmem:[%s539 + $0xd8] sm:$0xff]
      %v559 = vld [vmem:[%s539 + $0xe0] sm:$0xff]
      %v560 = vld [vmem:[%s539 + $0xf0] sm:$0xff]
      %v561 = vld [vmem:[%s539 + $0xf8] sm:$0xff]
      %v562 = vld [vmem:[%s539 + $0x108] sm:$0xff]
      %v563 = vld [vmem:[%s539 + $0x110] sm:$0xff]
      %v564 = vld [vmem:[%s539 + $0x120] sm:$0xff]
      %v565 = vld [vmem:[%s539 + $0x128] sm:$0xff]
      %v566 = vld [vmem:[%s539 + $0x138] sm:$0xff]
      %v567 = vld [vmem:[%s539 + $0x140] sm:$0xff]
      %v568 = vld [vmem:[%s539 + $0x150] sm:$0xff]
      %v569 = vld [vmem:[%s539 + $0x158] sm:$0xff]
      %v570 = vld [vmem:[%s539 + $0x168] sm:$0xff]
      %v571 = vld [vmem:[%s539 + $0x170] sm:$0xff]
      %v572 = vld [vmem:[%s539 + $0x1] sm:$0xff]
      %v573 = vld [vmem:[%s539 + $0x9] sm:$0xff]
      %v574 = vld [vmem:[%s539 + $0x19] sm:$0xff]
      %v575 = vld [vmem:[%s539 + $0x21] sm:$0xff]
      %v576 = vld [vmem:[%s539 + $0x31] sm:$0xff]
      %v577 = vld [vmem:[%s539 + $0x39] sm:$0xff]
      %v578 = vld [vmem:[%s539 + $0x49] sm:$0xff]
      %v579 = vld [vmem:[%s539 + $0x51] sm:$0xff]
      %v580 = vld [vmem:[%s539 + $0x61] sm:$0xff]
      %v581 = vld [vmem:[%s539 + $0x69] sm:$0xff]
      %v582 = vld [vmem:[%s539 + $0x79] sm:$0xff]
      %v583 = vld [vmem:[%s539 + $0x81] sm:$0xff]
      %v584 = vld [vmem:[%s539 + $0x91] sm:$0xff]
      %v585 = vld [vmem:[%s539 + $0x99] sm:$0xff]
      %v586 = vld [vmem:[%s539 + $0xa9] sm:$0xff]
      %v587 = vld [vmem:[%s539 + $0xb1] sm:$0xff]
      %v588 = vld [vmem:[%s539 + $0xc1] sm:$0xff]
      %v589 = vld [vmem:[%s539 + $0xc9] sm:$0xff]
      %v590 = vld [vmem:[%s539 + $0xd9] sm:$0xff]
      %v591 = vld [vmem:[%s539 + $0xe1] sm:$0xff]
      %v592 = vld [vmem:[%s539 + $0xf1] sm:$0xff]
      %v593 = vld [vmem:[%s539 + $0xf9] sm:$0xff]
      %v594 = vld [vmem:[%s539 + $0x109] sm:$0xff]
      %v595 = vld [vmem:[%s539 + $0x111] sm:$0xff]
      %v596 = vld [vmem:[%s539 + $0x121] sm:$0xff]
      %v597 = vld [vmem:[%s539 + $0x129] sm:$0xff]
      %v598 = vld [vmem:[%s539 + $0x139] sm:$0xff]
      %v599 = vld [vmem:[%s539 + $0x141] sm:$0xff]
      %v600 = vld [vmem:[%s539 + $0x151] sm:$0xff]
      %v601 = vld [vmem:[%s539 + $0x159] sm:$0xff]
      %v602 = vld [vmem:[%s539 + $0x169] sm:$0xff]
      %v603 = vld [vmem:[%s539 + $0x171] sm:$0xff]
      %v604 = vld [vmem:[%s539 + $0x2] sm:$0xff]
      %v605 = vld [vmem:[%s539 + $0xa] sm:$0xff]
      %v606 = vld [vmem:[%s539 + $0x1a] sm:$0xff]
      %v607 = vld [vmem:[%s539 + $0x22] sm:$0xff]
      %v608 = vld [vmem:[%s539 + $0x32] sm:$0xff]
      %v609 = vld [vmem:[%s539 + $0x3a] sm:$0xff]
      %v610 = vld [vmem:[%s539 + $0x4a] sm:$0xff]
      %v611 = vld [vmem:[%s539 + $0x52] sm:$0xff]
      %v612 = vld [vmem:[%s539 + $0x62] sm:$0xff]
      %v613 = vld [vmem:[%s539 + $0x6a] sm:$0xff]
      %v614 = vld [vmem:[%s539 + $0x7a] sm:$0xff]
      %v615 = vld [vmem:[%s539 + $0x82] sm:$0xff]
      %v616 = vld [vmem:[%s539 + $0x92] sm:$0xff]
      %v617 = vld [vmem:[%s539 + $0x9a] sm:$0xff]
      %v618 = vld [vmem:[%s539 + $0xaa] sm:$0xff]
      %v619 = vld [vmem:[%s539 + $0xb2] sm:$0xff]
      %v620 = vld [vmem:[%s539 + $0xc2] sm:$0xff]
      %v621 = vld [vmem:[%s539 + $0xca] sm:$0xff]
      %v622 = vld [vmem:[%s539 + $0xda] sm:$0xff]
      %v623 = vld [vmem:[%s539 + $0xe2] sm:$0xff]
      %v624 = vld [vmem:[%s539 + $0xf2] sm:$0xff]
      %v625 = vld [vmem:[%s539 + $0xfa] sm:$0xff]
      %v626 = vld [vmem:[%s539 + $0x10a] sm:$0xff]
      %v627 = vld [vmem:[%s539 + $0x112] sm:$0xff]
      %v628 = vld [vmem:[%s539 + $0x122] sm:$0xff]
      %v629 = vld [vmem:[%s539 + $0x12a] sm:$0xff]
      %v630 = vld [vmem:[%s539 + $0x13a] sm:$0xff]
      %v631 = vld [vmem:[%s539 + $0x142] sm:$0xff]
      %v632 = vld [vmem:[%s539 + $0x152] sm:$0xff]
      %v633 = vld [vmem:[%s539 + $0x15a] sm:$0xff]
      %v634 = vld [vmem:[%s539 + $0x16a] sm:$0xff]
      %v635 = vld [vmem:[%s539 + $0x172] sm:$0xff]
      %668 = vrot.lane.b32.xlu0 %v379, 4
      %v669 = vpop.permute.xlu0 %668
      %670 = vrot.lane.b32.xlu0 %v380, 4
      %v671 = vpop.permute.xlu0 %670
      %672 = vrot.lane.b32.xlu0 %v381, 4
      %v673 = vpop.permute.xlu0 %672
      %674 = vrot.lane.b32.xlu0 %v382, 4
      %v675 = vpop.permute.xlu0 %674
      %676 = vrot.lane.b32.xlu0 %v383, 4
      %v677 = vpop.permute.xlu0 %676
      %678 = vrot.lane.b32.xlu0 %v384, 4
      %v679 = vpop.permute.xlu0 %678
      %680 = vrot.lane.b32.xlu0 %v385, 4
      %v681 = vpop.permute.xlu0 %680
      %682 = vrot.lane.b32.xlu0 %v386, 4
      %v683 = vpop.permute.xlu0 %682
      %684 = vrot.lane.b32.xlu0 %v387, 4
      %v685 = vpop.permute.xlu0 %684
      %686 = vrot.lane.b32.xlu0 %v388, 4
      %v687 = vpop.permute.xlu0 %686
      %688 = vrot.lane.b32.xlu0 %v389, 4
      %v689 = vpop.permute.xlu0 %688
      %690 = vrot.lane.b32.xlu0 %v390, 4
      %v691 = vpop.permute.xlu0 %690
      %692 = vrot.lane.b32.xlu0 %v391, 4
      %v693 = vpop.permute.xlu0 %692
      %694 = vrot.lane.b32.xlu0 %v392, 4
      %v695 = vpop.permute.xlu0 %694
      %696 = vrot.lane.b32.xlu0 %v393, 4
      %v697 = vpop.permute.xlu0 %696
      %698 = vrot.lane.b32.xlu0 %v394, 4
      %v699 = vpop.permute.xlu0 %698
      %700 = vrot.lane.b32.xlu0 %v395, 4
      %v701 = vpop.permute.xlu0 %700
      %702 = vrot.lane.b32.xlu0 %v396, 4
      %v703 = vpop.permute.xlu0 %702
      %704 = vrot.lane.b32.xlu0 %v397, 4
      %v705 = vpop.permute.xlu0 %704
      %706 = vrot.lane.b32.xlu0 %v398, 4
      %v707 = vpop.permute.xlu0 %706
      %708 = vrot.lane.b32.xlu0 %v399, 4
      %v709 = vpop.permute.xlu0 %708
      %710 = vrot.lane.b32.xlu0 %v400, 4
      %v711 = vpop.permute.xlu0 %710
      %712 = vrot.lane.b32.xlu0 %v401, 4
      %v713 = vpop.permute.xlu0 %712
      %714 = vrot.lane.b32.xlu0 %v402, 4
      %v715 = vpop.permute.xlu0 %714
      %716 = vrot.lane.b32.xlu0 %v403, 4
      %v717 = vpop.permute.xlu0 %716
      %718 = vrot.lane.b32.xlu0 %v404, 4
      %v719 = vpop.permute.xlu0 %718
      %720 = vrot.lane.b32.xlu0 %v405, 4
      %v721 = vpop.permute.xlu0 %720
      %722 = vrot.lane.b32.xlu0 %v406, 4
      %v723 = vpop.permute.xlu0 %722
      %724 = vrot.lane.b32.xlu0 %v407, 4
      %v725 = vpop.permute.xlu0 %724
      %726 = vrot.lane.b32.xlu0 %v408, 4
      %v727 = vpop.permute.xlu0 %726
      %728 = vrot.lane.b32.xlu0 %v409, 4
      %v729 = vpop.permute.xlu0 %728
      %730 = vrot.lane.b32.xlu0 %v410, 4
      %v731 = vpop.permute.xlu0 %730
      %796 = vrot.lane.b32.xlu0 %v411, 8
      %v797 = vpop.permute.xlu0 %796
      %798 = vrot.lane.b32.xlu0 %v412, 8
      %v799 = vpop.permute.xlu0 %798
      %800 = vrot.lane.b32.xlu0 %v413, 8
      %v801 = vpop.permute.xlu0 %800
      %802 = vrot.lane.b32.xlu0 %v414, 8
      %v803 = vpop.permute.xlu0 %802
      %804 = vrot.lane.b32.xlu0 %v415, 8
      %v805 = vpop.permute.xlu0 %804
      %806 = vrot.lane.b32.xlu0 %v416, 8
      %v807 = vpop.permute.xlu0 %806
      %808 = vrot.lane.b32.xlu0 %v417, 8
      %v809 = vpop.permute.xlu0 %808
      %810 = vrot.lane.b32.xlu0 %v418, 8
      %v811 = vpop.permute.xlu0 %810
      %812 = vrot.lane.b32.xlu0 %v419, 8
      %v813 = vpop.permute.xlu0 %812
      %814 = vrot.lane.b32.xlu0 %v420, 8
      %v815 = vpop.permute.xlu0 %814
      %816 = vrot.lane.b32.xlu0 %v421, 8
      %v817 = vpop.permute.xlu0 %816
      %818 = vrot.lane.b32.xlu0 %v422, 8
      %v819 = vpop.permute.xlu0 %818
      %820 = vrot.lane.b32.xlu0 %v423, 8
      %v821 = vpop.permute.xlu0 %820
      %822 = vrot.lane.b32.xlu0 %v424, 8
      %v823 = vpop.permute.xlu0 %822
      %824 = vrot.lane.b32.xlu0 %v425, 8
      %v825 = vpop.permute.xlu0 %824
      %826 = vrot.lane.b32.xlu0 %v426, 8
      %v827 = vpop.permute.xlu0 %826
      %828 = vrot.lane.b32.xlu0 %v427, 8
      %v829 = vpop.permute.xlu0 %828
      %830 = vrot.lane.b32.xlu0 %v428, 8
      %v831 = vpop.permute.xlu0 %830
      %832 = vrot.lane.b32.xlu0 %v429, 8
      %v833 = vpop.permute.xlu0 %832
      %834 = vrot.lane.b32.xlu0 %v430, 8
      %v835 = vpop.permute.xlu0 %834
      %836 = vrot.lane.b32.xlu0 %v431, 8
      %v837 = vpop.permute.xlu0 %836
      %838 = vrot.lane.b32.xlu0 %v432, 8
      %v839 = vpop.permute.xlu0 %838
      %840 = vrot.lane.b32.xlu0 %v433, 8
      %v841 = vpop.permute.xlu0 %840
      %842 = vrot.lane.b32.xlu0 %v434, 8
      %v843 = vpop.permute.xlu0 %842
      %844 = vrot.lane.b32.xlu0 %v435, 8
      %v845 = vpop.permute.xlu0 %844
      %846 = vrot.lane.b32.xlu0 %v436, 8
      %v847 = vpop.permute.xlu0 %846
      %848 = vrot.lane.b32.xlu0 %v437, 8
      %v849 = vpop.permute.xlu0 %848
      %850 = vrot.lane.b32.xlu0 %v438, 8
      %v851 = vpop.permute.xlu0 %850
      %852 = vrot.lane.b32.xlu0 %v439, 8
      %v853 = vpop.permute.xlu0 %852
      %854 = vrot.lane.b32.xlu0 %v440, 8
      %v855 = vpop.permute.xlu0 %854
      %856 = vrot.lane.b32.xlu0 %v441, 8
      %v857 = vpop.permute.xlu0 %856
      %858 = vrot.lane.b32.xlu0 %v442, 8
      %v859 = vpop.permute.xlu0 %858
      %924 = vrot.lane.b32.xlu0 %v443, 12
      %v925 = vpop.permute.xlu0 %924
      %926 = vrot.lane.b32.xlu0 %v444, 12
      %v927 = vpop.permute.xlu0 %926
      %928 = vrot.lane.b32.xlu0 %v445, 12
      %v929 = vpop.permute.xlu0 %928
      %930 = vrot.lane.b32.xlu0 %v446, 12
      %v931 = vpop.permute.xlu0 %930
      %932 = vrot.lane.b32.xlu0 %v447, 12
      %v933 = vpop.permute.xlu0 %932
      %934 = vrot.lane.b32.xlu0 %v448, 12
      %v935 = vpop.permute.xlu0 %934
      %936 = vrot.lane.b32.xlu0 %v449, 12
      %v937 = vpop.permute.xlu0 %936
      %938 = vrot.lane.b32.xlu0 %v450, 12
      %v939 = vpop.permute.xlu0 %938
      %940 = vrot.lane.b32.xlu0 %v451, 12
      %v941 = vpop.permute.xlu0 %940
      %942 = vrot.lane.b32.xlu0 %v452, 12
      %v943 = vpop.permute.xlu0 %942
      %944 = vrot.lane.b32.xlu0 %v453, 12
      %v945 = vpop.permute.xlu0 %944
      %946 = vrot.lane.b32.xlu0 %v454, 12
      %v947 = vpop.permute.xlu0 %946
      %948 = vrot.lane.b32.xlu0 %v455, 12
      %v949 = vpop.permute.xlu0 %948
      %950 = vrot.lane.b32.xlu0 %v456, 12
      %v951 = vpop.permute.xlu0 %950
      %952 = vrot.lane.b32.xlu0 %v457, 12
      %v953 = vpop.permute.xlu0 %952
      %954 = vrot.lane.b32.xlu0 %v458, 12
      %v955 = vpop.permute.xlu0 %954
      %956 = vrot.lane.b32.xlu0 %v459, 12
      %v957 = vpop.permute.xlu0 %956
      %958 = vrot.lane.b32.xlu0 %v460, 12
      %v959 = vpop.permute.xlu0 %958
      %960 = vrot.lane.b32.xlu0 %v461, 12
      %v961 = vpop.permute.xlu0 %960
      %962 = vrot.lane.b32.xlu0 %v462, 12
      %v963 = vpop.permute.xlu0 %962
      %964 = vrot.lane.b32.xlu0 %v463, 12
      %v965 = vpop.permute.xlu0 %964
      %966 = vrot.lane.b32.xlu0 %v464, 12
      %v967 = vpop.permute.xlu0 %966
      %968 = vrot.lane.b32.xlu0 %v465, 12
      %v969 = vpop.permute.xlu0 %968
      %970 = vrot.lane.b32.xlu0 %v466, 12
      %v971 = vpop.permute.xlu0 %970
      %972 = vrot.lane.b32.xlu0 %v467, 12
      %v973 = vpop.permute.xlu0 %972
      %974 = vrot.lane.b32.xlu0 %v468, 12
      %v975 = vpop.permute.xlu0 %974
      %976 = vrot.lane.b32.xlu0 %v469, 12
      %v977 = vpop.permute.xlu0 %976
      %978 = vrot.lane.b32.xlu0 %v470, 12
      %v979 = vpop.permute.xlu0 %978
      %980 = vrot.lane.b32.xlu0 %v471, 12
      %v981 = vpop.permute.xlu0 %980
      %982 = vrot.lane.b32.xlu0 %v472, 12
      %v983 = vpop.permute.xlu0 %982
      %984 = vrot.lane.b32.xlu0 %v473, 12
      %v985 = vpop.permute.xlu0 %984
      %986 = vrot.lane.b32.xlu0 %v474, 12
      %v987 = vpop.permute.xlu0 %986
      %1052 = vrot.lane.b32.xlu0 %v475, 16
      %v1053 = vpop.permute.xlu0 %1052
      %1054 = vrot.lane.b32.xlu0 %v476, 16
      %v1055 = vpop.permute.xlu0 %1054
      %1056 = vrot.lane.b32.xlu0 %v477, 16
      %v1057 = vpop.permute.xlu0 %1056
      %1058 = vrot.lane.b32.xlu0 %v478, 16
      %v1059 = vpop.permute.xlu0 %1058
      %1060 = vrot.lane.b32.xlu0 %v479, 16
      %v1061 = vpop.permute.xlu0 %1060
      %1062 = vrot.lane.b32.xlu0 %v480, 16
      %v1063 = vpop.permute.xlu0 %1062
      %1064 = vrot.lane.b32.xlu0 %v481, 16
      %v1065 = vpop.permute.xlu0 %1064
      %1066 = vrot.lane.b32.xlu0 %v482, 16
      %v1067 = vpop.permute.xlu0 %1066
      %1068 = vrot.lane.b32.xlu0 %v483, 16
      %v1069 = vpop.permute.xlu0 %1068
      %1070 = vrot.lane.b32.xlu0 %v484, 16
      %v1071 = vpop.permute.xlu0 %1070
      %1072 = vrot.lane.b32.xlu0 %v485, 16
      %v1073 = vpop.permute.xlu0 %1072
      %1074 = vrot.lane.b32.xlu0 %v486, 16
      %v1075 = vpop.permute.xlu0 %1074
      %1076 = vrot.lane.b32.xlu0 %v487, 16
      %v1077 = vpop.permute.xlu0 %1076
      %1078 = vrot.lane.b32.xlu0 %v488, 16
      %v1079 = vpop.permute.xlu0 %1078
      %1080 = vrot.lane.b32.xlu0 %v489, 16
      %v1081 = vpop.permute.xlu0 %1080
      %1082 = vrot.lane.b32.xlu0 %v490, 16
      %v1083 = vpop.permute.xlu0 %1082
      %1084 = vrot.lane.b32.xlu0 %v491, 16
      %v1085 = vpop.permute.xlu0 %1084
      %1086 = vrot.lane.b32.xlu0 %v492, 16
      %v1087 = vpop.permute.xlu0 %1086
      %1088 = vrot.lane.b32.xlu0 %v493, 16
      %v1089 = vpop.permute.xlu0 %1088
      %1090 = vrot.lane.b32.xlu0 %v494, 16
      %v1091 = vpop.permute.xlu0 %1090
      %1092 = vrot.lane.b32.xlu0 %v495, 16
      %v1093 = vpop.permute.xlu0 %1092
      %1094 = vrot.lane.b32.xlu0 %v496, 16
      %v1095 = vpop.permute.xlu0 %1094
      %1096 = vrot.lane.b32.xlu0 %v497, 16
      %v1097 = vpop.permute.xlu0 %1096
      %1098 = vrot.lane.b32.xlu0 %v498, 16
      %v1099 = vpop.permute.xlu0 %1098
      %1100 = vrot.lane.b32.xlu0 %v499, 16
      %v1101 = vpop.permute.xlu0 %1100
      %1102 = vrot.lane.b32.xlu0 %v500, 16
      %v1103 = vpop.permute.xlu0 %1102
      %1104 = vrot.lane.b32.xlu0 %v501, 16
      %v1105 = vpop.permute.xlu0 %1104
      %1106 = vrot.lane.b32.xlu0 %v502, 16
      %v1107 = vpop.permute.xlu0 %1106
      %1108 = vrot.lane.b32.xlu0 %v503, 16
      %v1109 = vpop.permute.xlu0 %1108
      %1110 = vrot.lane.b32.xlu0 %v504, 16
      %v1111 = vpop.permute.xlu0 %1110
      %1112 = vrot.lane.b32.xlu0 %v505, 16
      %v1113 = vpop.permute.xlu0 %1112
      %1114 = vrot.lane.b32.xlu0 %v506, 16
      %v1115 = vpop.permute.xlu0 %1114
      %1180 = vrot.lane.b32.xlu0 %v507, 20
      %v1181 = vpop.permute.xlu0 %1180
      %1182 = vrot.lane.b32.xlu0 %v508, 20
      %v1183 = vpop.permute.xlu0 %1182
      %1184 = vrot.lane.b32.xlu0 %v509, 20
      %v1185 = vpop.permute.xlu0 %1184
      %1186 = vrot.lane.b32.xlu0 %v510, 20
      %v1187 = vpop.permute.xlu0 %1186
      %1188 = vrot.lane.b32.xlu0 %v511, 20
      %v1189 = vpop.permute.xlu0 %1188
      %1190 = vrot.lane.b32.xlu0 %v512, 20
      %v1191 = vpop.permute.xlu0 %1190
      %1192 = vrot.lane.b32.xlu0 %v513, 20
      %v1193 = vpop.permute.xlu0 %1192
      %1194 = vrot.lane.b32.xlu0 %v514, 20
      %v1195 = vpop.permute.xlu0 %1194
      %1196 = vrot.lane.b32.xlu0 %v515, 20
      %v1197 = vpop.permute.xlu0 %1196
      %1198 = vrot.lane.b32.xlu0 %v516, 20
      %v1199 = vpop.permute.xlu0 %1198
      %1200 = vrot.lane.b32.xlu0 %v517, 20
      %v1201 = vpop.permute.xlu0 %1200
      %1202 = vrot.lane.b32.xlu0 %v518, 20
      %v1203 = vpop.permute.xlu0 %1202
      %1204 = vrot.lane.b32.xlu0 %v519, 20
      %v1205 = vpop.permute.xlu0 %1204
      %1206 = vrot.lane.b32.xlu0 %v520, 20
      %v1207 = vpop.permute.xlu0 %1206
      %1208 = vrot.lane.b32.xlu0 %v521, 20
      %v1209 = vpop.permute.xlu0 %1208
      %1210 = vrot.lane.b32.xlu0 %v522, 20
      %v1211 = vpop.permute.xlu0 %1210
      %1212 = vrot.lane.b32.xlu0 %v523, 20
      %v1213 = vpop.permute.xlu0 %1212
      %1214 = vrot.lane.b32.xlu0 %v524, 20
      %v1215 = vpop.permute.xlu0 %1214
      %1216 = vrot.lane.b32.xlu0 %v525, 20
      %v1217 = vpop.permute.xlu0 %1216
      %1218 = vrot.lane.b32.xlu0 %v526, 20
      %v1219 = vpop.permute.xlu0 %1218
      %1220 = vrot.lane.b32.xlu0 %v527, 20
      %v1221 = vpop.permute.xlu0 %1220
      %1222 = vrot.lane.b32.xlu0 %v528, 20
      %v1223 = vpop.permute.xlu0 %1222
      %1224 = vrot.lane.b32.xlu0 %v529, 20
      %v1225 = vpop.permute.xlu0 %1224
      %1226 = vrot.lane.b32.xlu0 %v530, 20
      %v1227 = vpop.permute.xlu0 %1226
      %1228 = vrot.lane.b32.xlu0 %v531, 20
      %v1229 = vpop.permute.xlu0 %1228
      %1230 = vrot.lane.b32.xlu0 %v532, 20
      %v1231 = vpop.permute.xlu0 %1230
      %1232 = vrot.lane.b32.xlu0 %v533, 20
      %v1233 = vpop.permute.xlu0 %1232
      %1234 = vrot.lane.b32.xlu0 %v534, 20
      %v1235 = vpop.permute.xlu0 %1234
      %1236 = vrot.lane.b32.xlu0 %v535, 20
      %v1237 = vpop.permute.xlu0 %1236
      %1238 = vrot.lane.b32.xlu0 %v536, 20
      %v1239 = vpop.permute.xlu0 %1238
      %1240 = vrot.lane.b32.xlu0 %v537, 20
      %v1241 = vpop.permute.xlu0 %1240
      %1242 = vrot.lane.b32.xlu0 %v538, 20
      %v1243 = vpop.permute.xlu0 %1242
      %1308 = vrot.lane.b32.xlu0 %v540, 24
      %v1309 = vpop.permute.xlu0 %1308
      %1310 = vrot.lane.b32.xlu0 %v541, 24
      %v1311 = vpop.permute.xlu0 %1310
      %1312 = vrot.lane.b32.xlu0 %v542, 24
      %v1313 = vpop.permute.xlu0 %1312
      %1314 = vrot.lane.b32.xlu0 %v543, 24
      %v1315 = vpop.permute.xlu0 %1314
      %1316 = vrot.lane.b32.xlu0 %v544, 24
      %v1317 = vpop.permute.xlu0 %1316
      %1318 = vrot.lane.b32.xlu0 %v545, 24
      %v1319 = vpop.permute.xlu0 %1318
      %1320 = vrot.lane.b32.xlu0 %v546, 24
      %v1321 = vpop.permute.xlu0 %1320
      %1322 = vrot.lane.b32.xlu0 %v547, 24
      %v1323 = vpop.permute.xlu0 %1322
      %1324 = vrot.lane.b32.xlu0 %v548, 24
      %v1325 = vpop.permute.xlu0 %1324
      %1326 = vrot.lane.b32.xlu0 %v549, 24
      %v1327 = vpop.permute.xlu0 %1326
      %1328 = vrot.lane.b32.xlu0 %v550, 24
      %v1329 = vpop.permute.xlu0 %1328
      %1330 = vrot.lane.b32.xlu0 %v551, 24
      %v1331 = vpop.permute.xlu0 %1330
      %1332 = vrot.lane.b32.xlu0 %v552, 24
      %v1333 = vpop.permute.xlu0 %1332
      %1334 = vrot.lane.b32.xlu0 %v553, 24
      %v1335 = vpop.permute.xlu0 %1334
      %1336 = vrot.lane.b32.xlu0 %v554, 24
      %v1337 = vpop.permute.xlu0 %1336
      %1338 = vrot.lane.b32.xlu0 %v555, 24
      %v1339 = vpop.permute.xlu0 %1338
      %1340 = vrot.lane.b32.xlu0 %v556, 24
      %v1341 = vpop.permute.xlu0 %1340
      %1342 = vrot.lane.b32.xlu0 %v557, 24
      %v1343 = vpop.permute.xlu0 %1342
      %1344 = vrot.lane.b32.xlu0 %v558, 24
      %v1345 = vpop.permute.xlu0 %1344
      %1346 = vrot.lane.b32.xlu0 %v559, 24
      %v1347 = vpop.permute.xlu0 %1346
      %1348 = vrot.lane.b32.xlu0 %v560, 24
      %v1349 = vpop.permute.xlu0 %1348
      %1350 = vrot.lane.b32.xlu0 %v561, 24
      %v1351 = vpop.permute.xlu0 %1350
      %1352 = vrot.lane.b32.xlu0 %v562, 24
      %v1353 = vpop.permute.xlu0 %1352
      %1354 = vrot.lane.b32.xlu0 %v563, 24
      %v1355 = vpop.permute.xlu0 %1354
      %1356 = vrot.lane.b32.xlu0 %v564, 24
      %v1357 = vpop.permute.xlu0 %1356
      %1358 = vrot.lane.b32.xlu0 %v565, 24
      %v1359 = vpop.permute.xlu0 %1358
      %1360 = vrot.lane.b32.xlu0 %v566, 24
      %v1361 = vpop.permute.xlu0 %1360
      %1362 = vrot.lane.b32.xlu0 %v567, 24
      %v1363 = vpop.permute.xlu0 %1362
      %1364 = vrot.lane.b32.xlu0 %v568, 24
      %v1365 = vpop.permute.xlu0 %1364
      %1366 = vrot.lane.b32.xlu0 %v569, 24
      %v1367 = vpop.permute.xlu0 %1366
      %1368 = vrot.lane.b32.xlu0 %v570, 24
      %v1369 = vpop.permute.xlu0 %1368
      %1370 = vrot.lane.b32.xlu0 %v571, 24
      %v1371 = vpop.permute.xlu0 %1370
      %1436 = vrot.lane.b32.xlu0 %v572, 28
      %v1437 = vpop.permute.xlu0 %1436
      %1438 = vrot.lane.b32.xlu0 %v573, 28
      %v1439 = vpop.permute.xlu0 %1438
      %1440 = vrot.lane.b32.xlu0 %v574, 28
      %v1441 = vpop.permute.xlu0 %1440
      %1442 = vrot.lane.b32.xlu0 %v575, 28
      %v1443 = vpop.permute.xlu0 %1442
      %1444 = vrot.lane.b32.xlu0 %v576, 28
      %v1445 = vpop.permute.xlu0 %1444
      %1446 = vrot.lane.b32.xlu0 %v577, 28
      %v1447 = vpop.permute.xlu0 %1446
      %1448 = vrot.lane.b32.xlu0 %v578, 28
      %v1449 = vpop.permute.xlu0 %1448
      %1450 = vrot.lane.b32.xlu0 %v579, 28
      %v1451 = vpop.permute.xlu0 %1450
      %1452 = vrot.lane.b32.xlu0 %v580, 28
      %v1453 = vpop.permute.xlu0 %1452
      %1454 = vrot.lane.b32.xlu0 %v581, 28
      %v1455 = vpop.permute.xlu0 %1454
      %1456 = vrot.lane.b32.xlu0 %v582, 28
      %v1457 = vpop.permute.xlu0 %1456
      %1458 = vrot.lane.b32.xlu0 %v583, 28
      %v1459 = vpop.permute.xlu0 %1458
      %1460 = vrot.lane.b32.xlu0 %v584, 28
      %v1461 = vpop.permute.xlu0 %1460
      %1462 = vrot.lane.b32.xlu0 %v585, 28
      %v1463 = vpop.permute.xlu0 %1462
      %1464 = vrot.lane.b32.xlu0 %v586, 28
      %v1465 = vpop.permute.xlu0 %1464
      %1466 = vrot.lane.b32.xlu0 %v587, 28
      %v1467 = vpop.permute.xlu0 %1466
      %1468 = vrot.lane.b32.xlu0 %v588, 28
      %v1469 = vpop.permute.xlu0 %1468
      %1470 = vrot.lane.b32.xlu0 %v589, 28
      %v1471 = vpop.permute.xlu0 %1470
      %1472 = vrot.lane.b32.xlu0 %v590, 28
      %v1473 = vpop.permute.xlu0 %1472
      %1474 = vrot.lane.b32.xlu0 %v591, 28
      %v1475 = vpop.permute.xlu0 %1474
      %1476 = vrot.lane.b32.xlu0 %v592, 28
      %v1477 = vpop.permute.xlu0 %1476
      %1478 = vrot.lane.b32.xlu0 %v593, 28
      %v1479 = vpop.permute.xlu0 %1478
      %1480 = vrot.lane.b32.xlu0 %v594, 28
      %v1481 = vpop.permute.xlu0 %1480
      %1482 = vrot.lane.b32.xlu0 %v595, 28
      %v1483 = vpop.permute.xlu0 %1482
      %1484 = vrot.lane.b32.xlu0 %v596, 28
      %v1485 = vpop.permute.xlu0 %1484
      %1486 = vrot.lane.b32.xlu0 %v597, 28
      %v1487 = vpop.permute.xlu0 %1486
      %1488 = vrot.lane.b32.xlu0 %v598, 28
      %v1489 = vpop.permute.xlu0 %1488
      %1490 = vrot.lane.b32.xlu0 %v599, 28
      %v1491 = vpop.permute.xlu0 %1490
      %1492 = vrot.lane.b32.xlu0 %v600, 28
      %v1493 = vpop.permute.xlu0 %1492
      %1494 = vrot.lane.b32.xlu0 %v601, 28
      %v1495 = vpop.permute.xlu0 %1494
      %1496 = vrot.lane.b32.xlu0 %v602, 28
      %v1497 = vpop.permute.xlu0 %1496
      %1498 = vrot.lane.b32.xlu0 %v603, 28
      %v1499 = vpop.permute.xlu0 %1498
      %1564 = vrot.lane.b32.xlu0 %v604, 32
      %v1565 = vpop.permute.xlu0 %1564
      %1566 = vrot.lane.b32.xlu0 %v605, 32
      %v1567 = vpop.permute.xlu0 %1566
      %1568 = vrot.lane.b32.xlu0 %v606, 32
      %v1569 = vpop.permute.xlu0 %1568
      %1570 = vrot.lane.b32.xlu0 %v607, 32
      %v1571 = vpop.permute.xlu0 %1570
      %1572 = vrot.lane.b32.xlu0 %v608, 32
      %v1573 = vpop.permute.xlu0 %1572
      %1574 = vrot.lane.b32.xlu0 %v609, 32
      %v1575 = vpop.permute.xlu0 %1574
      %1576 = vrot.lane.b32.xlu0 %v610, 32
      %v1577 = vpop.permute.xlu0 %1576
      %1578 = vrot.lane.b32.xlu0 %v611, 32
      %v1579 = vpop.permute.xlu0 %1578
      %1580 = vrot.lane.b32.xlu0 %v612, 32
      %v1581 = vpop.permute.xlu0 %1580
      %1582 = vrot.lane.b32.xlu0 %v613, 32
      %v1583 = vpop.permute.xlu0 %1582
      %1584 = vrot.lane.b32.xlu0 %v614, 32
      %v1585 = vpop.permute.xlu0 %1584
      %1586 = vrot.lane.b32.xlu0 %v615, 32
      %v1587 = vpop.permute.xlu0 %1586
      %1588 = vrot.lane.b32.xlu0 %v616, 32
      %v1589 = vpop.permute.xlu0 %1588
      %1590 = vrot.lane.b32.xlu0 %v617, 32
      %v1591 = vpop.permute.xlu0 %1590
      %1592 = vrot.lane.b32.xlu0 %v618, 32
      %v1593 = vpop.permute.xlu0 %1592
      %1594 = vrot.lane.b32.xlu0 %v619, 32
      %v1595 = vpop.permute.xlu0 %1594
      %1596 = vrot.lane.b32.xlu0 %v620, 32
      %v1597 = vpop.permute.xlu0 %1596
      %1598 = vrot.lane.b32.xlu0 %v621, 32
      %v1599 = vpop.permute.xlu0 %1598
      %1600 = vrot.lane.b32.xlu0 %v622, 32
      %v1601 = vpop.permute.xlu0 %1600
      %1602 = vrot.lane.b32.xlu0 %v623, 32
      %v1603 = vpop.permute.xlu0 %1602
      %1604 = vrot.lane.b32.xlu0 %v624, 32
      %v1605 = vpop.permute.xlu0 %1604
      %1606 = vrot.lane.b32.xlu0 %v625, 32
      %v1607 = vpop.permute.xlu0 %1606
      %1608 = vrot.lane.b32.xlu0 %v626, 32
      %v1609 = vpop.permute.xlu0 %1608
      %1610 = vrot.lane.b32.xlu0 %v627, 32
      %v1611 = vpop.permute.xlu0 %1610
      %1612 = vrot.lane.b32.xlu0 %v628, 32
      %v1613 = vpop.permute.xlu0 %1612
      %1614 = vrot.lane.b32.xlu0 %v629, 32
      %v1615 = vpop.permute.xlu0 %1614
      %1616 = vrot.lane.b32.xlu0 %v630, 32
      %v1617 = vpop.permute.xlu0 %1616
      %1618 = vrot.lane.b32.xlu0 %v631, 32
      %v1619 = vpop.permute.xlu0 %1618
      %1620 = vrot.lane.b32.xlu0 %v632, 32
      %v1621 = vpop.permute.xlu0 %1620
      %1622 = vrot.lane.b32.xlu0 %v633, 32
      %v1623 = vpop.permute.xlu0 %1622
      %1624 = vrot.lane.b32.xlu0 %v634, 32
      %v1625 = vpop.permute.xlu0 %1624
      %1626 = vrot.lane.b32.xlu0 %v635, 32
      %v1627 = vpop.permute.xlu0 %1626
      %v1660 = vsel %vm226, %v347, %v669
      %v1661 = vsel %vm226, %v348, %v671
      %v1662 = vsel %vm226, %v349, %v673
      %v1663 = vsel %vm226, %v350, %v675
      %v1664 = vsel %vm226, %v351, %v677
      %v1665 = vsel %vm226, %v352, %v679
      %v1666 = vsel %vm226, %v353, %v681
      %v1667 = vsel %vm226, %v354, %v683
      %v1668 = vsel %vm226, %v355, %v685
      %v1669 = vsel %vm226, %v356, %v687
      %v1670 = vsel %vm226, %v357, %v689
      %v1671 = vsel %vm226, %v358, %v691
      %v1672 = vsel %vm226, %v359, %v693
      %v1673 = vsel %vm226, %v360, %v695
      %v1674 = vsel %vm226, %v361, %v697
      %v1675 = vsel %vm226, %v362, %v699
      %v1676 = vsel %vm226, %v363, %v701
      %v1677 = vsel %vm226, %v364, %v703
      %v1678 = vsel %vm226, %v365, %v705
      %v1679 = vsel %vm226, %v366, %v707
      %v1680 = vsel %vm226, %v367, %v709
      %v1681 = vsel %vm226, %v368, %v711
      %v1682 = vsel %vm226, %v369, %v713
      %v1683 = vsel %vm226, %v370, %v715
      %v1684 = vsel %vm226, %v371, %v717
      %v1685 = vsel %vm226, %v372, %v719
      %v1686 = vsel %vm226, %v373, %v721
      %v1687 = vsel %vm226, %v374, %v723
      %v1688 = vsel %vm226, %v375, %v725
      %v1689 = vsel %vm226, %v376, %v727
      %v1690 = vsel %vm226, %v377, %v729
      %v1691 = vsel %vm226, %v378, %v731
      %vm1692 = vcmask 64512
      %v1693 = vsel %vm1692, %v1660, %v797
      %v1694 = vsel %vm1692, %v1661, %v799
      %v1695 = vsel %vm1692, %v1662, %v801
      %v1696 = vsel %vm1692, %v1663, %v803
      %v1697 = vsel %vm1692, %v1664, %v805
      %v1698 = vsel %vm1692, %v1665, %v807
      %v1699 = vsel %vm1692, %v1666, %v809
      %v1700 = vsel %vm1692, %v1667, %v811
      %v1701 = vsel %vm1692, %v1668, %v813
      %v1702 = vsel %vm1692, %v1669, %v815
      %v1703 = vsel %vm1692, %v1670, %v817
      %v1704 = vsel %vm1692, %v1671, %v819
      %v1705 = vsel %vm1692, %v1672, %v821
      %v1706 = vsel %vm1692, %v1673, %v823
      %v1707 = vsel %vm1692, %v1674, %v825
      %v1708 = vsel %vm1692, %v1675, %v827
      %v1709 = vsel %vm1692, %v1676, %v829
      %v1710 = vsel %vm1692, %v1677, %v831
      %v1711 = vsel %vm1692, %v1678, %v833
      %v1712 = vsel %vm1692, %v1679, %v835
      %v1713 = vsel %vm1692, %v1680, %v837
      %v1714 = vsel %vm1692, %v1681, %v839
      %v1715 = vsel %vm1692, %v1682, %v841
      %v1716 = vsel %vm1692, %v1683, %v843
      %v1717 = vsel %vm1692, %v1684, %v845
      %v1718 = vsel %vm1692, %v1685, %v847
      %v1719 = vsel %vm1692, %v1686, %v849
      %v1720 = vsel %vm1692, %v1687, %v851
      %v1721 = vsel %vm1692, %v1688, %v853
      %v1722 = vsel %vm1692, %v1689, %v855
      %v1723 = vsel %vm1692, %v1690, %v857
      %v1724 = vsel %vm1692, %v1691, %v859
      %vm1725 = vcmask 97280
      %v1726 = vsel %vm1725, %v1693, %v925
      %v1727 = vsel %vm1725, %v1694, %v927
      %v1728 = vsel %vm1725, %v1695, %v929
      %v1729 = vsel %vm1725, %v1696, %v931
      %v1730 = vsel %vm1725, %v1697, %v933
      %v1731 = vsel %vm1725, %v1698, %v935
      %v1732 = vsel %vm1725, %v1699, %v937
      %v1733 = vsel %vm1725, %v1700, %v939
      %v1734 = vsel %vm1725, %v1701, %v941
      %v1735 = vsel %vm1725, %v1702, %v943
      %v1736 = vsel %vm1725, %v1703, %v945
      %v1737 = vsel %vm1725, %v1704, %v947
      %v1738 = vsel %vm1725, %v1705, %v949
      %v1739 = vsel %vm1725, %v1706, %v951
      %v1740 = vsel %vm1725, %v1707, %v953
      %v1741 = vsel %vm1725, %v1708, %v955
      %v1742 = vsel %vm1725, %v1709, %v957
      %v1743 = vsel %vm1725, %v1710, %v959
      %v1744 = vsel %vm1725, %v1711, %v961
      %v1745 = vsel %vm1725, %v1712, %v963
      %v1746 = vsel %vm1725, %v1713, %v965
      %v1747 = vsel %vm1725, %v1714, %v967
      %v1748 = vsel %vm1725, %v1715, %v969
      %v1749 = vsel %vm1725, %v1716, %v971
      %v1750 = vsel %vm1725, %v1717, %v973
      %v1751 = vsel %vm1725, %v1718, %v975
      %v1752 = vsel %vm1725, %v1719, %v977
      %v1753 = vsel %vm1725, %v1720, %v979
      %v1754 = vsel %vm1725, %v1721, %v981
      %v1755 = vsel %vm1725, %v1722, %v983
      %v1756 = vsel %vm1725, %v1723, %v985
      %v1757 = vsel %vm1725, %v1724, %v987
      %vm1758 = vcmask 130048
      %v1759 = vsel %vm1758, %v1726, %v1053
      %v1760 = vsel %vm1758, %v1727, %v1055
      %v1761 = vsel %vm1758, %v1728, %v1057
      %v1762 = vsel %vm1758, %v1729, %v1059
      %v1763 = vsel %vm1758, %v1730, %v1061
      %v1764 = vsel %vm1758, %v1731, %v1063
      %v1765 = vsel %vm1758, %v1732, %v1065
      %v1766 = vsel %vm1758, %v1733, %v1067
      %v1767 = vsel %vm1758, %v1734, %v1069
      %v1768 = vsel %vm1758, %v1735, %v1071
      %v1769 = vsel %vm1758, %v1736, %v1073
      %v1770 = vsel %vm1758, %v1737, %v1075
      %v1771 = vsel %vm1758, %v1738, %v1077
      %v1772 = vsel %vm1758, %v1739, %v1079
      %v1773 = vsel %vm1758, %v1740, %v1081
      %v1774 = vsel %vm1758, %v1741, %v1083
      %v1775 = vsel %vm1758, %v1742, %v1085
      %v1776 = vsel %vm1758, %v1743, %v1087
      %v1777 = vsel %vm1758, %v1744, %v1089
      %v1778 = vsel %vm1758, %v1745, %v1091
      %v1779 = vsel %vm1758, %v1746, %v1093
      %v1780 = vsel %vm1758, %v1747, %v1095
      %v1781 = vsel %vm1758, %v1748, %v1097
      %v1782 = vsel %vm1758, %v1749, %v1099
      %v1783 = vsel %vm1758, %v1750, %v1101
      %v1784 = vsel %vm1758, %v1751, %v1103
      %v1785 = vsel %vm1758, %v1752, %v1105
      %v1786 = vsel %vm1758, %v1753, %v1107
      %v1787 = vsel %vm1758, %v1754, %v1109
      %v1788 = vsel %vm1758, %v1755, %v1111
      %v1789 = vsel %vm1758, %v1756, %v1113
      %v1790 = vsel %vm1758, %v1757, %v1115
      %vm1791 = vcmask 162816
      %v1792 = vsel %vm1791, %v1759, %v1181
      %v1793 = vsel %vm1791, %v1760, %v1183
      %v1794 = vsel %vm1791, %v1761, %v1185
      %v1795 = vsel %vm1791, %v1762, %v1187
      %v1796 = vsel %vm1791, %v1763, %v1189
      %v1797 = vsel %vm1791, %v1764, %v1191
      %v1798 = vsel %vm1791, %v1765, %v1193
      %v1799 = vsel %vm1791, %v1766, %v1195
      %v1800 = vsel %vm1791, %v1767, %v1197
      %v1801 = vsel %vm1791, %v1768, %v1199
      %v1802 = vsel %vm1791, %v1769, %v1201
      %v1803 = vsel %vm1791, %v1770, %v1203
      %v1804 = vsel %vm1791, %v1771, %v1205
      %v1805 = vsel %vm1791, %v1772, %v1207
      %v1806 = vsel %vm1791, %v1773, %v1209
      %v1807 = vsel %vm1791, %v1774, %v1211
      %v1808 = vsel %vm1791, %v1775, %v1213
      %v1809 = vsel %vm1791, %v1776, %v1215
      %v1810 = vsel %vm1791, %v1777, %v1217
      %v1811 = vsel %vm1791, %v1778, %v1219
      %v1812 = vsel %vm1791, %v1779, %v1221
      %v1813 = vsel %vm1791, %v1780, %v1223
      %v1814 = vsel %vm1791, %v1781, %v1225
      %v1815 = vsel %vm1791, %v1782, %v1227
      %v1816 = vsel %vm1791, %v1783, %v1229
      %v1817 = vsel %vm1791, %v1784, %v1231
      %v1818 = vsel %vm1791, %v1785, %v1233
      %v1819 = vsel %vm1791, %v1786, %v1235
      %v1820 = vsel %vm1791, %v1787, %v1237
      %v1821 = vsel %vm1791, %v1788, %v1239
      %v1822 = vsel %vm1791, %v1789, %v1241
      %v1823 = vsel %vm1791, %v1790, %v1243
      %vm1824 = vcmask 195584
      %v1825 = vsel %vm1824, %v1792, %v1309
      %v1826 = vsel %vm1824, %v1793, %v1311
      %v1827 = vsel %vm1824, %v1794, %v1313
      %v1828 = vsel %vm1824, %v1795, %v1315
      %v1829 = vsel %vm1824, %v1796, %v1317
      %v1830 = vsel %vm1824, %v1797, %v1319
      %v1831 = vsel %vm1824, %v1798, %v1321
      %v1832 = vsel %vm1824, %v1799, %v1323
      %v1833 = vsel %vm1824, %v1800, %v1325
      %v1834 = vsel %vm1824, %v1801, %v1327
      %v1835 = vsel %vm1824, %v1802, %v1329
      %v1836 = vsel %vm1824, %v1803, %v1331
      %v1837 = vsel %vm1824, %v1804, %v1333
      %v1838 = vsel %vm1824, %v1805, %v1335
      %v1839 = vsel %vm1824, %v1806, %v1337
      %v1840 = vsel %vm1824, %v1807, %v1339
      %v1841 = vsel %vm1824, %v1808, %v1341
      %v1842 = vsel %vm1824, %v1809, %v1343
      %v1843 = vsel %vm1824, %v1810, %v1345
      %v1844 = vsel %vm1824, %v1811, %v1347
      %v1845 = vsel %vm1824, %v1812, %v1349
      %v1846 = vsel %vm1824, %v1813, %v1351
      %v1847 = vsel %vm1824, %v1814, %v1353
      %v1848 = vsel %vm1824, %v1815, %v1355
      %v1849 = vsel %vm1824, %v1816, %v1357
      %v1850 = vsel %vm1824, %v1817, %v1359
      %v1851 = vsel %vm1824, %v1818, %v1361
      %v1852 = vsel %vm1824, %v1819, %v1363
      %v1853 = vsel %vm1824, %v1820, %v1365
      %v1854 = vsel %vm1824, %v1821, %v1367
      %v1855 = vsel %vm1824, %v1822, %v1369
      %v1856 = vsel %vm1824, %v1823, %v1371
      %vm1857 = vcmask 228352
      %v1858 = vsel %vm1857, %v1825, %v1437
      %v1859 = vsel %vm1857, %v1826, %v1439
      %v1860 = vsel %vm1857, %v1827, %v1441
      %v1861 = vsel %vm1857, %v1828, %v1443
      %v1862 = vsel %vm1857, %v1829, %v1445
      %v1863 = vsel %vm1857, %v1830, %v1447
      %v1864 = vsel %vm1857, %v1831, %v1449
      %v1865 = vsel %vm1857, %v1832, %v1451
      %v1866 = vsel %vm1857, %v1833, %v1453
      %v1867 = vsel %vm1857, %v1834, %v1455
      %v1868 = vsel %vm1857, %v1835, %v1457
      %v1869 = vsel %vm1857, %v1836, %v1459
      %v1870 = vsel %vm1857, %v1837, %v1461
      %v1871 = vsel %vm1857, %v1838, %v1463
      %v1872 = vsel %vm1857, %v1839, %v1465
      %v1873 = vsel %vm1857, %v1840, %v1467
      %v1874 = vsel %vm1857, %v1841, %v1469
      %v1875 = vsel %vm1857, %v1842, %v1471
      %v1876 = vsel %vm1857, %v1843, %v1473
      %v1877 = vsel %vm1857, %v1844, %v1475
      %v1878 = vsel %vm1857, %v1845, %v1477
      %v1879 = vsel %vm1857, %v1846, %v1479
      %v1880 = vsel %vm1857, %v1847, %v1481
      %v1881 = vsel %vm1857, %v1848, %v1483
      %v1882 = vsel %vm1857, %v1849, %v1485
      %v1883 = vsel %vm1857, %v1850, %v1487
      %v1884 = vsel %vm1857, %v1851, %v1489
      %v1885 = vsel %vm1857, %v1852, %v1491
      %v1886 = vsel %vm1857, %v1853, %v1493
      %v1887 = vsel %vm1857, %v1854, %v1495
      %v1888 = vsel %vm1857, %v1855, %v1497
      %v1889 = vsel %vm1857, %v1856, %v1499
      %vm1890 = vcmask 261120
      %v1891 = vsel %vm1890, %v1858, %v1565
      %v1892 = vsel %vm1890, %v1859, %v1567
      %v1893 = vsel %vm1890, %v1860, %v1569
      %v1894 = vsel %vm1890, %v1861, %v1571
      %v1895 = vsel %vm1890, %v1862, %v1573
      %v1896 = vsel %vm1890, %v1863, %v1575
      %v1897 = vsel %vm1890, %v1864, %v1577
      %v1898 = vsel %vm1890, %v1865, %v1579
      %v1899 = vsel %vm1890, %v1866, %v1581
      %v1900 = vsel %vm1890, %v1867, %v1583
      %v1901 = vsel %vm1890, %v1868, %v1585
      %v1902 = vsel %vm1890, %v1869, %v1587
      %v1903 = vsel %vm1890, %v1870, %v1589
      %v1904 = vsel %vm1890, %v1871, %v1591
      %v1905 = vsel %vm1890, %v1872, %v1593
      %v1906 = vsel %vm1890, %v1873, %v1595
      %v1907 = vsel %vm1890, %v1874, %v1597
      %v1908 = vsel %vm1890, %v1875, %v1599
      %v1909 = vsel %vm1890, %v1876, %v1601
      %v1910 = vsel %vm1890, %v1877, %v1603
      %v1911 = vsel %vm1890, %v1878, %v1605
      %v1912 = vsel %vm1890, %v1879, %v1607
      %v1913 = vsel %vm1890, %v1880, %v1609
      %v1914 = vsel %vm1890, %v1881, %v1611
      %v1915 = vsel %vm1890, %v1882, %v1613
      %v1916 = vsel %vm1890, %v1883, %v1615
      %v1917 = vsel %vm1890, %v1884, %v1617
      %v1918 = vsel %vm1890, %v1885, %v1619
      %v1919 = vsel %vm1890, %v1886, %v1621
      %v1920 = vsel %vm1890, %v1887, %v1623
      %v1921 = vsel %vm1890, %v1888, %v1625
      %v1922 = vsel %vm1890, %v1889, %v1627
      %v1923 = vpack.c.bf16 %v1892, %v1891
      %v1924 = vpack.c.bf16 %v1894, %v1893
      %v1925 = vpack.c.bf16 %v1896, %v1895
      %v1926 = vpack.c.bf16 %v1898, %v1897
      %v1927 = vpack.c.bf16 %v1900, %v1899
      %v1928 = vpack.c.bf16 %v1902, %v1901
      %v1929 = vpack.c.bf16 %v1904, %v1903
      %v1930 = vpack.c.bf16 %v1906, %v1905
      %v1931 = vpack.c.bf16 %v1908, %v1907
      %v1932 = vpack.c.bf16 %v1910, %v1909
      %v1933 = vpack.c.bf16 %v1912, %v1911
      %v1934 = vpack.c.bf16 %v1914, %v1913
      %v1935 = vpack.c.bf16 %v1916, %v1915
      %v1936 = vpack.c.bf16 %v1918, %v1917
      %v1937 = vpack.c.bf16 %v1920, %v1919
      %v1938 = vpack.c.bf16 %v1922, %v1921
      %v1939 = vld [vmem:[%s1] sm:$0xf]
      %v1940 = vld [vmem:[%s1 + $0x4] sm:$0xf]
      %v1941 = vld [vmem:[%s1 + $0x8] sm:$0xf]
      %v1942 = vld [vmem:[%s1 + $0xc] sm:$0xf]
      %v1943 = vld [vmem:[%s1 + $0x10] sm:$0x3]
      %v1949 = vunpack.c.l.b16 %v1939
      %v1950 = vunpack.c.l.b16 %v1940
      %v1951 = vunpack.c.l.b16 %v1941
      %v1952 = vunpack.c.l.b16 %v1942
      %v1953 = vunpack.c.l.b16 %v1943
      %v1954 = vpack.c.b16 %v1950, %v1949
      %v1955 = vpack.c.b16 %v1952, %v1951
      %v1956 = vpack.c.b16 %v1953, %v1953
      %vm1959 = vcmask 293888
      %v1961 = vsel %vm1959, %v1923, 0
      %v1964 = vsel %vm1959, %v1924, 0
      %v1967 = vsel %vm1959, %v1925, 0
      %v1970 = vsel %vm1959, %v1926, 0
      %v1973 = vsel %vm1959, %v1927, 0
      %v1976 = vsel %vm1959, %v1928, 0
      %v1979 = vsel %vm1959, %v1929, 0
      %v1982 = vsel %vm1959, %v1930, 0
      %v1985 = vsel %vm1959, %v1931, 0
      %v1988 = vsel %vm1959, %v1932, 0
      %v1991 = vsel %vm1959, %v1933, 0
      %v1994 = vsel %vm1959, %v1934, 0
      %v1997 = vsel %vm1959, %v1935, 0
      %v2000 = vsel %vm1959, %v1936, 0
      %v2003 = vsel %vm1959, %v1937, 0
      %v2006 = vsel %vm1959, %v1938, 0
      %vm2008 = vcmask 1041408
      %v2010 = vsel %vm2008, %v1956, 0
      %2012 = vmatprep.subr.bf16.mxu0 0
      %2013 = vmatpush1.bf16.msra.mxu0 %v1954
      %2014 = vmatprep.subr.bf16.mxu0 0
      %2015 = vmatpush1.bf16.msra.mxu0 %v1955
      %2016 = vmatprep.subr.bf16.mxu0 0
      %2017 = vmatpush1.bf16.msra.mxu0 %v2010
      %2018 = vmatprep.subr.bf16.mxu0 0
      %2019 = vmatpush1.bf16.msra.mxu0 0
      %2020 = vmatprep.subr.bf16.mxu0 0
      %2021 = vmatpush1.bf16.msra.mxu0 0
      %2022 = vmatprep.subr.bf16.mxu0 0
      %2023 = vmatpush1.bf16.msra.mxu0 0
      %2024 = vmatprep.subr.bf16.mxu0 0
      %2025 = vmatpush1.bf16.msra.mxu0 0
      %2026 = vmatprep.subr.bf16.mxu0 0
      %2027 = vmatpush1.bf16.msra.mxu0 0
      %2028 = vmatprep.subr.bf16.mxu0 0
      %2029 = vmatpush1.bf16.msra.mxu0 0
      %2030 = vmatprep.subr.bf16.mxu0 0
      %2031 = vmatpush1.bf16.msra.mxu0 0
      %2032 = vmatprep.subr.bf16.mxu0 0
      %2033 = vmatpush1.bf16.msra.mxu0 0
      %2034 = vmatprep.subr.bf16.mxu0 0
      %2035 = vmatpush1.bf16.msra.mxu0 0
      %2036 = vmatprep.subr.bf16.mxu0 0
      %2037 = vmatpush1.bf16.msra.mxu0 0
      %2038 = vmatprep.subr.bf16.mxu0 0
      %2039 = vmatpush1.bf16.msra.mxu0 0
      %2040 = vmatprep.subr.bf16.mxu0 0
      %2041 = vmatpush1.bf16.msra.mxu0 0
      %2042 = vmatprep.subr.bf16.mxu0 0
      %2043 = vmatpush1.bf16.msra.mxu0 0
      %2044 = vmatprep.mubr.bf16.mxu0 0
      %2045 = vmatmul.mubr.bf16.gmra.mrb[0].mxu0 %v1961
      %v2046 = vpop.f32.mrb[0].mxu0
      %v2047 = vadd.f32 0.0, %v2046
      %v2048 = vpop.f32.mrb[0].mxu0
      %v2049 = vpop.f32.mrb[0].mxu0
      %v2050 = vadd.f32 0.0, %v2049
      %v2051 = vpop.f32.mrb[0].mxu0
      %2052 = vmatprep.mubr.bf16.mxu0 0
      %2053 = vmatmul.mubr.bf16.gmra.mrb[0].mxu0 %v1964
      %v2054 = vpop.f32.mrb[0].mxu0
      %v2055 = vadd.f32 0.0, %v2054
      %v2056 = vpop.f32.mrb[0].mxu0
      %v2057 = vpop.f32.mrb[0].mxu0
      %v2058 = vadd.f32 0.0, %v2057
      %v2059 = vpop.f32.mrb[0].mxu0
      %2060 = vmatprep.mubr.bf16.mxu0 0
      %2061 = vmatmul.mubr.bf16.gmra.mrb[0].mxu0 %v1967
      %v2062 = vpop.f32.mrb[0].mxu0
      %v2063 = vadd.f32 0.0, %v2062
      %v2064 = vpop.f32.mrb[0].mxu0
      %v2065 = vpop.f32.mrb[0].mxu0
      %v2066 = vadd.f32 0.0, %v2065
      %v2067 = vpop.f32.mrb[0].mxu0
      %2068 = vmatprep.mubr.bf16.mxu0 0
      %2069 = vmatmul.mubr.bf16.gmra.mrb[0].mxu0 %v1970
      %v2070 = vpop.f32.mrb[0].mxu0
      %v2071 = vadd.f32 0.0, %v2070
      %v2072 = vpop.f32.mrb[0].mxu0
      %v2073 = vpop.f32.mrb[0].mxu0
      %v2074 = vadd.f32 0.0, %v2073
      %v2075 = vpop.f32.mrb[0].mxu0
      %2076 = vmatprep.mubr.bf16.mxu0 0
      %2077 = vmatmul.mubr.bf16.gmra.mrb[0].mxu0 %v1973
      %v2078 = vpop.f32.mrb[0].mxu0
      %v2079 = vadd.f32 0.0, %v2078
      %v2080 = vpop.f32.mrb[0].mxu0
      %v2081 = vpop.f32.mrb[0].mxu0
      %v2082 = vadd.f32 0.0, %v2081
      %v2083 = vpop.f32.mrb[0].mxu0
      %2084 = vmatprep.mubr.bf16.mxu0 0
      %2085 = vmatmul.mubr.bf16.gmra.mrb[0].mxu0 %v1976
      %v2086 = vpop.f32.mrb[0].mxu0
      %v2087 = vadd.f32 0.0, %v2086
      %v2088 = vpop.f32.mrb[0].mxu0
      %v2089 = vpop.f32.mrb[0].mxu0
      %v2090 = vadd.f32 0.0, %v2089
      %v2091 = vpop.f32.mrb[0].mxu0
      %2092 = vmatprep.mubr.bf16.mxu0 0
      %2093 = vmatmul.mubr.bf16.gmra.mrb[0].mxu0 %v1979
      %v2094 = vpop.f32.mrb[0].mxu0
      %v2095 = vadd.f32 0.0, %v2094
      %v2096 = vpop.f32.mrb[0].mxu0
      %v2097 = vpop.f32.mrb[0].mxu0
      %v2098 = vadd.f32 0.0, %v2097
      %v2099 = vpop.f32.mrb[0].mxu0
      %2100 = vmatprep.mubr.bf16.mxu0 0
      %2101 = vmatmul.mubr.bf16.gmra.mrb[0].mxu0 %v1982
      %v2102 = vpop.f32.mrb[0].mxu0
      %v2103 = vadd.f32 0.0, %v2102
      %v2104 = vpop.f32.mrb[0].mxu0
      %v2105 = vpop.f32.mrb[0].mxu0
      %v2106 = vadd.f32 0.0, %v2105
      %v2107 = vpop.f32.mrb[0].mxu0
      %2108 = vmatprep.mubr.bf16.mxu0 0
      %2109 = vmatmul.mubr.bf16.gmra.mrb[0].mxu0 %v1985
      %v2110 = vpop.f32.mrb[0].mxu0
      %v2111 = vadd.f32 0.0, %v2110
      %v2112 = vpop.f32.mrb[0].mxu0
      %v2113 = vpop.f32.mrb[0].mxu0
      %v2114 = vadd.f32 0.0, %v2113
      %v2115 = vpop.f32.mrb[0].mxu0
      %2116 = vmatprep.mubr.bf16.mxu0 0
      %2117 = vmatmul.mubr.bf16.gmra.mrb[0].mxu0 %v1988
      %v2118 = vpop.f32.mrb[0].mxu0
      %v2119 = vadd.f32 0.0, %v2118
      %v2120 = vpop.f32.mrb[0].mxu0
      %v2121 = vpop.f32.mrb[0].mxu0
      %v2122 = vadd.f32 0.0, %v2121
      %v2123 = vpop.f32.mrb[0].mxu0
      %2124 = vmatprep.mubr.bf16.mxu0 0
      %2125 = vmatmul.mubr.bf16.gmra.mrb[0].mxu0 %v1991
      %v2126 = vpop.f32.mrb[0].mxu0
      %v2127 = vadd.f32 0.0, %v2126
      %v2128 = vpop.f32.mrb[0].mxu0
      %v2129 = vpop.f32.mrb[0].mxu0
      %v2130 = vadd.f32 0.0, %v2129
      %v2131 = vpop.f32.mrb[0].mxu0
      %2132 = vmatprep.mubr.bf16.mxu0 0
      %2133 = vmatmul.mubr.bf16.gmra.mrb[0].mxu0 %v1994
      %v2134 = vpop.f32.mrb[0].mxu0
      %v2135 = vadd.f32 0.0, %v2134
      %v2136 = vpop.f32.mrb[0].mxu0
      %v2137 = vpop.f32.mrb[0].mxu0
      %v2138 = vadd.f32 0.0, %v2137
      %v2139 = vpop.f32.mrb[0].mxu0
      %2140 = vmatprep.mubr.bf16.mxu0 0
      %2141 = vmatmul.mubr.bf16.gmra.mrb[0].mxu0 %v1997
      %v2142 = vpop.f32.mrb[0].mxu0
      %v2143 = vadd.f32 0.0, %v2142
      %v2144 = vpop.f32.mrb[0].mxu0
      %v2145 = vpop.f32.mrb[0].mxu0
      %v2146 = vadd.f32 0.0, %v2145
      %v2147 = vpop.f32.mrb[0].mxu0
      %2148 = vmatprep.mubr.bf16.mxu0 0
      %2149 = vmatmul.mubr.bf16.gmra.mrb[0].mxu0 %v2000
      %v2150 = vpop.f32.mrb[0].mxu0
      %v2151 = vadd.f32 0.0, %v2150
      %v2152 = vpop.f32.mrb[0].mxu0
      %v2153 = vpop.f32.mrb[0].mxu0
      %v2154 = vadd.f32 0.0, %v2153
      %v2155 = vpop.f32.mrb[0].mxu0
      %2156 = vmatprep.mubr.bf16.mxu0 0
      %2157 = vmatmul.mubr.bf16.gmra.mrb[0].mxu0 %v2003
      %v2158 = vpop.f32.mrb[0].mxu0
      %v2159 = vadd.f32 0.0, %v2158
      %v2160 = vpop.f32.mrb[0].mxu0
      %v2161 = vpop.f32.mrb[0].mxu0
      %v2162 = vadd.f32 0.0, %v2161
      %v2163 = vpop.f32.mrb[0].mxu0
      %2164 = vmatprep.mubr.bf16.mxu0 0
      %2165 = vmatmul.mubr.bf16.gmra.mrb[0].mxu0 %v2006
      %v2166 = vpop.f32.mrb[0].mxu0
      %v2167 = vadd.f32 0.0, %v2166
      %v2168 = vpop.f32.mrb[0].mxu0
      %v2169 = vpop.f32.mrb[0].mxu0
      %v2170 = vadd.f32 0.0, %v2169
      %v2171 = vpop.f32.mrb[0].mxu0
      %2172 = vdwg.mxu0
      %v2173 = vld [vmem:[%s3] sm:$0x1]
      %v2174 = vlaneseq
      %v2175 = vshrl.u32 %v2174, 7
      %v2176 = vsub.s32 0, %v2175
      %v2177 = vrot.slane %v2173, %v2176
      %v2178 = vmul.f32 %v2047, %v2177
      %v2179 = vmul.f32 %v2050, %v2177
      %v2180 = vmul.f32 %v2055, %v2177
      %v2181 = vmul.f32 %v2058, %v2177
      %v2182 = vmul.f32 %v2063, %v2177
      %v2183 = vmul.f32 %v2066, %v2177
      %v2184 = vmul.f32 %v2071, %v2177
      %v2185 = vmul.f32 %v2074, %v2177
      %v2186 = vmul.f32 %v2079, %v2177
      %v2187 = vmul.f32 %v2082, %v2177
      %v2188 = vmul.f32 %v2087, %v2177
      %v2189 = vmul.f32 %v2090, %v2177
      %v2190 = vmul.f32 %v2095, %v2177
      %v2191 = vmul.f32 %v2098, %v2177
      %v2192 = vmul.f32 %v2103, %v2177
      %v2193 = vmul.f32 %v2106, %v2177
      %v2194 = vmul.f32 %v2111, %v2177
      %v2195 = vmul.f32 %v2114, %v2177
      %v2196 = vmul.f32 %v2119, %v2177
      %v2197 = vmul.f32 %v2122, %v2177
      %v2198 = vmul.f32 %v2127, %v2177
      %v2199 = vmul.f32 %v2130, %v2177
      %v2200 = vmul.f32 %v2135, %v2177
      %v2201 = vmul.f32 %v2138, %v2177
      %v2202 = vmul.f32 %v2143, %v2177
      %v2203 = vmul.f32 %v2146, %v2177
      %v2204 = vmul.f32 %v2151, %v2177
      %v2205 = vmul.f32 %v2154, %v2177
      %v2206 = vmul.f32 %v2159, %v2177
      %v2207 = vmul.f32 %v2162, %v2177
      %v2208 = vmul.f32 %v2167, %v2177
      %v2209 = vmul.f32 %v2170, %v2177
      %v2210 = vld [vmem:[%s3 + $0x1] sm:$0x1]
      %v2211 = vlaneseq
      %v2212 = vshrl.u32 %v2211, 7
      %v2213 = vsub.s32 0, %v2212
      %v2214 = vrot.slane %v2210, %v2213
      %v2215 = vadd.f32 %v2178, %v2214
      %v2216 = vadd.f32 %v2179, %v2214
      %v2217 = vadd.f32 %v2180, %v2214
      %v2218 = vadd.f32 %v2181, %v2214
      %v2219 = vadd.f32 %v2182, %v2214
      %v2220 = vadd.f32 %v2183, %v2214
      %v2221 = vadd.f32 %v2184, %v2214
      %v2222 = vadd.f32 %v2185, %v2214
      %v2223 = vadd.f32 %v2186, %v2214
      %v2224 = vadd.f32 %v2187, %v2214
      %v2225 = vadd.f32 %v2188, %v2214
      %v2226 = vadd.f32 %v2189, %v2214
      %v2227 = vadd.f32 %v2190, %v2214
      %v2228 = vadd.f32 %v2191, %v2214
      %v2229 = vadd.f32 %v2192, %v2214
      %v2230 = vadd.f32 %v2193, %v2214
      %v2231 = vadd.f32 %v2194, %v2214
      %v2232 = vadd.f32 %v2195, %v2214
      %v2233 = vadd.f32 %v2196, %v2214
      %v2234 = vadd.f32 %v2197, %v2214
      %v2235 = vadd.f32 %v2198, %v2214
      %v2236 = vadd.f32 %v2199, %v2214
      %v2237 = vadd.f32 %v2200, %v2214
      %v2238 = vadd.f32 %v2201, %v2214
      %v2239 = vadd.f32 %v2202, %v2214
      %v2240 = vadd.f32 %v2203, %v2214
      %v2241 = vadd.f32 %v2204, %v2214
      %v2242 = vadd.f32 %v2205, %v2214
      %v2243 = vadd.f32 %v2206, %v2214
      %v2244 = vadd.f32 %v2207, %v2214
      %v2245 = vadd.f32 %v2208, %v2214
      %v2246 = vadd.f32 %v2209, %v2214
      %v2247 = vmax.f32 %v2215, 0.0
      %v2248 = vmax.f32 %v2216, 0.0
      %v2249 = vmax.f32 %v2217, 0.0
      %v2250 = vmax.f32 %v2218, 0.0
      %v2251 = vmax.f32 %v2219, 0.0
      %v2252 = vmax.f32 %v2220, 0.0
      %v2253 = vmax.f32 %v2221, 0.0
      %v2254 = vmax.f32 %v2222, 0.0
      %v2255 = vmax.f32 %v2223, 0.0
      %v2256 = vmax.f32 %v2224, 0.0
      %v2257 = vmax.f32 %v2225, 0.0
      %v2258 = vmax.f32 %v2226, 0.0
      %v2259 = vmax.f32 %v2227, 0.0
      %v2260 = vmax.f32 %v2228, 0.0
      %v2261 = vmax.f32 %v2229, 0.0
      %v2262 = vmax.f32 %v2230, 0.0
      %v2263 = vmax.f32 %v2231, 0.0
      %v2264 = vmax.f32 %v2232, 0.0
      %v2265 = vmax.f32 %v2233, 0.0
      %v2266 = vmax.f32 %v2234, 0.0
      %v2267 = vmax.f32 %v2235, 0.0
      %v2268 = vmax.f32 %v2236, 0.0
      %v2269 = vmax.f32 %v2237, 0.0
      %v2270 = vmax.f32 %v2238, 0.0
      %v2271 = vmax.f32 %v2239, 0.0
      %v2272 = vmax.f32 %v2240, 0.0
      %v2273 = vmax.f32 %v2241, 0.0
      %v2274 = vmax.f32 %v2242, 0.0
      %v2275 = vmax.f32 %v2243, 0.0
      %v2276 = vmax.f32 %v2244, 0.0
      %v2277 = vmax.f32 %v2245, 0.0
      %v2278 = vmax.f32 %v2246, 0.0
      %2279 = vst.msk [vmem:[#allocation3] sm:$0xff] %vm226, 0.0
      %2280 = vst.msk [vmem:[#allocation3 + $0x8] sm:$0xff] %vm226, 0.0
      %2281 = vst.msk [vmem:[#allocation3 + $0x10] sm:$0x3] %vm229, 0.0
      %2282 = vst.msk [vmem:[#allocation3 + $0x18] sm:$0xff] %vm226, 0.0
      %2283 = vst.msk [vmem:[#allocation3 + $0x20] sm:$0xff] %vm226, 0.0
      %2284 = vst.msk [vmem:[#allocation3 + $0x28] sm:$0x3] %vm229, 0.0
      %2285 = vst.msk [vmem:[#allocation3 + $0x30] sm:$0xff] %vm226, 0.0
      %2286 = vst.msk [vmem:[#allocation3 + $0x38] sm:$0xff] %vm226, 0.0
      %2287 = vst.msk [vmem:[#allocation3 + $0x40] sm:$0x3] %vm229, 0.0
      %2288 = vst.msk [vmem:[#allocation3 + $0x48] sm:$0xff] %vm226, 0.0
      %2289 = vst.msk [vmem:[#allocation3 + $0x50] sm:$0xff] %vm226, 0.0
      %2290 = vst.msk [vmem:[#allocation3 + $0x58] sm:$0x3] %vm229, 0.0
      %2291 = vst.msk [vmem:[#allocation3 + $0x60] sm:$0xff] %vm226, 0.0
      %2292 = vst.msk [vmem:[#allocation3 + $0x68] sm:$0xff] %vm226, 0.0
      %2293 = vst.msk [vmem:[#allocation3 + $0x70] sm:$0x3] %vm229, 0.0
      %2294 = vst.msk [vmem:[#allocation3 + $0x78] sm:$0xff] %vm226, 0.0
      %2295 = vst.msk [vmem:[#allocation3 + $0x80] sm:$0xff] %vm226, 0.0
      %2296 = vst.msk [vmem:[#allocation3 + $0x88] sm:$0x3] %vm229, 0.0
      %2297 = vst.msk [vmem:[#allocation3 + $0x90] sm:$0xff] %vm226, 0.0
      %2298 = vst.msk [vmem:[#allocation3 + $0x98] sm:$0xff] %vm226, 0.0
      %2299 = vst.msk [vmem:[#allocation3 + $0xa0] sm:$0x3] %vm229, 0.0
      %2300 = vst.msk [vmem:[#allocation3 + $0xa8] sm:$0xff] %vm226, 0.0
      %2301 = vst.msk [vmem:[#allocation3 + $0xb0] sm:$0xff] %vm226, 0.0
      %2302 = vst.msk [vmem:[#allocation3 + $0xb8] sm:$0x3] %vm229, 0.0
      %2303 = vst.msk [vmem:[#allocation3 + $0xc0] sm:$0xff] %vm226, 0.0
      %2304 = vst.msk [vmem:[#allocation3 + $0xc8] sm:$0xff] %vm226, 0.0
      %2305 = vst.msk [vmem:[#allocation3 + $0xd0] sm:$0x3] %vm229, 0.0
      %2306 = vst.msk [vmem:[#allocation3 + $0xd8] sm:$0xff] %vm226, 0.0
      %2307 = vst.msk [vmem:[#allocation3 + $0xe0] sm:$0xff] %vm226, 0.0
      %2308 = vst.msk [vmem:[#allocation3 + $0xe8] sm:$0x3] %vm229, 0.0
      %2309 = vst.msk [vmem:[#allocation3 + $0xf0] sm:$0xff] %vm226, 0.0
      %2310 = vst.msk [vmem:[#allocation3 + $0xf8] sm:$0xff] %vm226, 0.0
      %2311 = vst.msk [vmem:[#allocation3 + $0x100] sm:$0x3] %vm229, 0.0
      %2312 = vst.msk [vmem:[#allocation3 + $0x108] sm:$0xff] %vm226, 0.0
      %2313 = vst.msk [vmem:[#allocation3 + $0x110] sm:$0xff] %vm226, 0.0
      %2314 = vst.msk [vmem:[#allocation3 + $0x118] sm:$0x3] %vm229, 0.0
      %2315 = vst.msk [vmem:[#allocation3 + $0x120] sm:$0xff] %vm226, 0.0
      %2316 = vst.msk [vmem:[#allocation3 + $0x128] sm:$0xff] %vm226, 0.0
      %2317 = vst.msk [vmem:[#allocation3 + $0x130] sm:$0x3] %vm229, 0.0
      %2318 = vst.msk [vmem:[#allocation3 + $0x138] sm:$0xff] %vm226, 0.0
      %2319 = vst.msk [vmem:[#allocation3 + $0x140] sm:$0xff] %vm226, 0.0
      %2320 = vst.msk [vmem:[#allocation3 + $0x148] sm:$0x3] %vm229, 0.0
      %2321 = vst.msk [vmem:[#allocation3 + $0x150] sm:$0xff] %vm226, 0.0
      %2322 = vst.msk [vmem:[#allocation3 + $0x158] sm:$0xff] %vm226, 0.0
      %2323 = vst.msk [vmem:[#allocation3 + $0x160] sm:$0x3] %vm229, 0.0
      %2324 = vst.msk [vmem:[#allocation3 + $0x168] sm:$0xff] %vm226, 0.0
      %2325 = vst.msk [vmem:[#allocation3 + $0x170] sm:$0xff] %vm226, 0.0
      %2326 = vst.msk [vmem:[#allocation3 + $0x178] sm:$0x3] %vm229, 0.0
      %2327 = vst.msk [vmem:[#allocation3 + $0x180] sm:$0xff] %vm226, 0.0
      %2328 = vst.msk [vmem:[#allocation3 + $0x188] sm:$0xff] %vm226, 0.0
      %2329 = vst.msk [vmem:[#allocation3 + $0x190] sm:$0x3] %vm229, 0.0
      %2330 = vst.msk [vmem:[#allocation3 + $0x198] sm:$0xff] %vm226, 0.0
      %2331 = vst.msk [vmem:[#allocation3 + $0x1a0] sm:$0xff] %vm226, 0.0
      %2332 = vst.msk [vmem:[#allocation3 + $0x1a8] sm:$0x3] %vm229, 0.0
      %s2333 = scalar_lea.vmem [#allocation3], 24
      %2334 = vst.msk [vmem:[%s2333 + $0x1] sm:$0xff] %vm226, %v2247
      %2335 = vst.msk [vmem:[%s2333 + $0x9] sm:$0xff] %vm226, %v2248
      %2336 = vst.msk [vmem:[%s2333 + $0x19] sm:$0xff] %vm226, %v2249
      %2337 = vst.msk [vmem:[%s2333 + $0x21] sm:$0xff] %vm226, %v2250
      %2338 = vst.msk [vmem:[%s2333 + $0x31] sm:$0xff] %vm226, %v2251
      %2339 = vst.msk [vmem:[%s2333 + $0x39] sm:$0xff] %vm226, %v2252
      %2340 = vst.msk [vmem:[%s2333 + $0x49] sm:$0xff] %vm226, %v2253
      %2341 = vst.msk [vmem:[%s2333 + $0x51] sm:$0xff] %vm226, %v2254
      %2342 = vst.msk [vmem:[%s2333 + $0x61] sm:$0xff] %vm226, %v2255
      %2343 = vst.msk [vmem:[%s2333 + $0x69] sm:$0xff] %vm226, %v2256
      %2344 = vst.msk [vmem:[%s2333 + $0x79] sm:$0xff] %vm226, %v2257
      %2345 = vst.msk [vmem:[%s2333 + $0x81] sm:$0xff] %vm226, %v2258
      %2346 = vst.msk [vmem:[%s2333 + $0x91] sm:$0xff] %vm226, %v2259
      %2347 = vst.msk [vmem:[%s2333 + $0x99] sm:$0xff] %vm226, %v2260
      %2348 = vst.msk [vmem:[%s2333 + $0xa9] sm:$0xff] %vm226, %v2261
      %2349 = vst.msk [vmem:[%s2333 + $0xb1] sm:$0xff] %vm226, %v2262
      %2350 = vst.msk [vmem:[%s2333 + $0xc1] sm:$0xff] %vm226, %v2263
      %2351 = vst.msk [vmem:[%s2333 + $0xc9] sm:$0xff] %vm226, %v2264
      %2352 = vst.msk [vmem:[%s2333 + $0xd9] sm:$0xff] %vm226, %v2265
      %2353 = vst.msk [vmem:[%s2333 + $0xe1] sm:$0xff] %vm226, %v2266
      %2354 = vst.msk [vmem:[%s2333 + $0xf1] sm:$0xff] %vm226, %v2267
      %2355 = vst.msk [vmem:[%s2333 + $0xf9] sm:$0xff] %vm226, %v2268
      %2356 = vst.msk [vmem:[%s2333 + $0x109] sm:$0xff] %vm226, %v2269
      %2357 = vst.msk [vmem:[%s2333 + $0x111] sm:$0xff] %vm226, %v2270
      %2358 = vst.msk [vmem:[%s2333 + $0x121] sm:$0xff] %vm226, %v2271
      %2359 = vst.msk [vmem:[%s2333 + $0x129] sm:$0xff] %vm226, %v2272
      %2360 = vst.msk [vmem:[%s2333 + $0x139] sm:$0xff] %vm226, %v2273
      %2361 = vst.msk [vmem:[%s2333 + $0x141] sm:$0xff] %vm226, %v2274
      %2362 = vst.msk [vmem:[%s2333 + $0x151] sm:$0xff] %vm226, %v2275
      %2363 = vst.msk [vmem:[%s2333 + $0x159] sm:$0xff] %vm226, %v2276
      %2364 = vst.msk [vmem:[%s2333 + $0x169] sm:$0xff] %vm226, %v2277
      %2365 = vst.msk [vmem:[%s2333 + $0x171] sm:$0xff] %vm226, %v2278
      %v2366 = vld [vmem:[#allocation3] sm:$0xff]
      %v2367 = vld [vmem:[#allocation3 + $0x8] sm:$0xff]
      %v2368 = vld [vmem:[#allocation3 + $0x18] sm:$0xff]
      %v2369 = vld [vmem:[#allocation3 + $0x20] sm:$0xff]
      %v2370 = vld [vmem:[#allocation3 + $0x30] sm:$0xff]
      %v2371 = vld [vmem:[#allocation3 + $0x38] sm:$0xff]
      %v2372 = vld [vmem:[#allocation3 + $0x48] sm:$0xff]
      %v2373 = vld [vmem:[#allocation3 + $0x50] sm:$0xff]
      %v2374 = vld [vmem:[#allocation3 + $0x60] sm:$0xff]
      %v2375 = vld [vmem:[#allocation3 + $0x68] sm:$0xff]
      %v2376 = vld [vmem:[#allocation3 + $0x78] sm:$0xff]
      %v2377 = vld [vmem:[#allocation3 + $0x80] sm:$0xff]
      %v2378 = vld [vmem:[#allocation3 + $0x90] sm:$0xff]
      %v2379 = vld [vmem:[#allocation3 + $0x98] sm:$0xff]
      %v2380 = vld [vmem:[#allocation3 + $0xa8] sm:$0xff]
      %v2381 = vld [vmem:[#allocation3 + $0xb0] sm:$0xff]
      %v2382 = vld [vmem:[#allocation3 + $0xc0] sm:$0xff]
      %v2383 = vld [vmem:[#allocation3 + $0xc8] sm:$0xff]
      %v2384 = vld [vmem:[#allocation3 + $0xd8] sm:$0xff]
      %v2385 = vld [vmem:[#allocation3 + $0xe0] sm:$0xff]
      %v2386 = vld [vmem:[#allocation3 + $0xf0] sm:$0xff]
      %v2387 = vld [vmem:[#allocation3 + $0xf8] sm:$0xff]
      %v2388 = vld [vmem:[#allocation3 + $0x108] sm:$0xff]
      %v2389 = vld [vmem:[#allocation3 + $0x110] sm:$0xff]
      %v2390 = vld [vmem:[#allocation3 + $0x120] sm:$0xff]
      %v2391 = vld [vmem:[#allocation3 + $0x128] sm:$0xff]
      %v2392 = vld [vmem:[#allocation3 + $0x138] sm:$0xff]
      %v2393 = vld [vmem:[#allocation3 + $0x140] sm:$0xff]
      %v2394 = vld [vmem:[#allocation3 + $0x150] sm:$0xff]
      %v2395 = vld [vmem:[#allocation3 + $0x158] sm:$0xff]
      %v2396 = vld [vmem:[#allocation3 + $0x168] sm:$0xff]
      %v2397 = vld [vmem:[#allocation3 + $0x170] sm:$0xff]
      %v2398 = vld [vmem:[#allocation3 + $0x1] sm:$0xff]
      %v2399 = vld [vmem:[#allocation3 + $0x9] sm:$0xff]
      %v2400 = vld [vmem:[#allocation3 + $0x19] sm:$0xff]
      %v2401 = vld [vmem:[#allocation3 + $0x21] sm:$0xff]
      %v2402 = vld [vmem:[#allocation3 + $0x31] sm:$0xff]
      %v2403 = vld [vmem:[#allocation3 + $0x39] sm:$0xff]
      %v2404 = vld [vmem:[#allocation3 + $0x49] sm:$0xff]
      %v2405 = vld [vmem:[#allocation3 + $0x51] sm:$0xff]
      %v2406 = vld [vmem:[#allocation3 + $0x61] sm:$0xff]
      %v2407 = vld [vmem:[#allocation3 + $0x69] sm:$0xff]
      %v2408 = vld [vmem:[#allocation3 + $0x79] sm:$0xff]
      %v2409 = vld [vmem:[#allocation3 + $0x81] sm:$0xff]
      %v2410 = vld [vmem:[#allocation3 + $0x91] sm:$0xff]
      %v2411 = vld [vmem:[#allocation3 + $0x99] sm:$0xff]
      %v2412 = vld [vmem:[#allocation3 + $0xa9] sm:$0xff]
      %v2413 = vld [vmem:[#allocation3 + $0xb1] sm:$0xff]
      %v2414 = vld [vmem:[#allocation3 + $0xc1] sm:$0xff]
      %v2415 = vld [vmem:[#allocation3 + $0xc9] sm:$0xff]
      %v2416 = vld [vmem:[#allocation3 + $0xd9] sm:$0xff]
      %v2417 = vld [vmem:[#allocation3 + $0xe1] sm:$0xff]
      %v2418 = vld [vmem:[#allocation3 + $0xf1] sm:$0xff]
      %v2419 = vld [vmem:[#allocation3 + $0xf9] sm:$0xff]
      %v2420 = vld [vmem:[#allocation3 + $0x109] sm:$0xff]
      %v2421 = vld [vmem:[#allocation3 + $0x111] sm:$0xff]
      %v2422 = vld [vmem:[#allocation3 + $0x121] sm:$0xff]
      %v2423 = vld [vmem:[#allocation3 + $0x129] sm:$0xff]
      %v2424 = vld [vmem:[#allocation3 + $0x139] sm:$0xff]
      %v2425 = vld [vmem:[#allocation3 + $0x141] sm:$0xff]
      %v2426 = vld [vmem:[#allocation3 + $0x151] sm:$0xff]
      %v2427 = vld [vmem:[#allocation3 + $0x159] sm:$0xff]
      %v2428 = vld [vmem:[#allocation3 + $0x169] sm:$0xff]
      %v2429 = vld [vmem:[#allocation3 + $0x171] sm:$0xff]
      %v2430 = vld [vmem:[#allocation3 + $0x2] sm:$0xff]
      %v2431 = vld [vmem:[#allocation3 + $0xa] sm:$0xff]
      %v2432 = vld [vmem:[#allocation3 + $0x1a] sm:$0xff]
      %v2433 = vld [vmem:[#allocation3 + $0x22] sm:$0xff]
      %v2434 = vld [vmem:[#allocation3 + $0x32] sm:$0xff]
      %v2435 = vld [vmem:[#allocation3 + $0x3a] sm:$0xff]
      %v2436 = vld [vmem:[#allocation3 + $0x4a] sm:$0xff]
      %v2437 = vld [vmem:[#allocation3 + $0x52] sm:$0xff]
      %v2438 = vld [vmem:[#allocation3 + $0x62] sm:$0xff]
      %v2439 = vld [vmem:[#allocation3 + $0x6a] sm:$0xff]
      %v2440 = vld [vmem:[#allocation3 + $0x7a] sm:$0xff]
      %v2441 = vld [vmem:[#allocation3 + $0x82] sm:$0xff]
      %v2442 = vld [vmem:[#allocation3 + $0x92] sm:$0xff]
      %v2443 = vld [vmem:[#allocation3 + $0x9a] sm:$0xff]
      %v2444 = vld [vmem:[#allocation3 + $0xaa] sm:$0xff]
      %v2445 = vld [vmem:[#allocation3 + $0xb2] sm:$0xff]
      %v2446 = vld [vmem:[#allocation3 + $0xc2] sm:$0xff]
      %v2447 = vld [vmem:[#allocation3 + $0xca] sm:$0xff]
      %v2448 = vld [vmem:[#allocation3 + $0xda] sm:$0xff]
      %v2449 = vld [vmem:[#allocation3 + $0xe2] sm:$0xff]
      %v2450 = vld [vmem:[#allocation3 + $0xf2] sm:$0xff]
      %v2451 = vld [vmem:[#allocation3 + $0xfa] sm:$0xff]
      %v2452 = vld [vmem:[#allocation3 + $0x10a] sm:$0xff]
      %v2453 = vld [vmem:[#allocation3 + $0x112] sm:$0xff]
      %v2454 = vld [vmem:[#allocation3 + $0x122] sm:$0xff]
      %v2455 = vld [vmem:[#allocation3 + $0x12a] sm:$0xff]
      %v2456 = vld [vmem:[#allocation3 + $0x13a] sm:$0xff]
      %v2457 = vld [vmem:[#allocation3 + $0x142] sm:$0xff]
      %v2458 = vld [vmem:[#allocation3 + $0x152] sm:$0xff]
      %v2459 = vld [vmem:[#allocation3 + $0x15a] sm:$0xff]
      %v2460 = vld [vmem:[#allocation3 + $0x16a] sm:$0xff]
      %v2461 = vld [vmem:[#allocation3 + $0x172] sm:$0xff]
      %v2462 = vld [vmem:[%s2333] sm:$0xff]
      %v2463 = vld [vmem:[%s2333 + $0x8] sm:$0xff]
      %v2464 = vld [vmem:[%s2333 + $0x18] sm:$0xff]
      %v2465 = vld [vmem:[%s2333 + $0x20] sm:$0xff]
      %v2466 = vld [vmem:[%s2333 + $0x30] sm:$0xff]
      %v2467 = vld [vmem:[%s2333 + $0x38] sm:$0xff]
      %v2468 = vld [vmem:[%s2333 + $0x48] sm:$0xff]
      %v2469 = vld [vmem:[%s2333 + $0x50] sm:$0xff]
      %v2470 = vld [vmem:[%s2333 + $0x60] sm:$0xff]
      %v2471 = vld [vmem:[%s2333 + $0x68] sm:$0xff]
      %v2472 = vld [vmem:[%s2333 + $0x78] sm:$0xff]
      %v2473 = vld [vmem:[%s2333 + $0x80] sm:$0xff]
      %v2474 = vld [vmem:[%s2333 + $0x90] sm:$0xff]
      %v2475 = vld [vmem:[%s2333 + $0x98] sm:$0xff]
      %v2476 = vld [vmem:[%s2333 + $0xa8] sm:$0xff]
      %v2477 = vld [vmem:[%s2333 + $0xb0] sm:$0xff]
      %v2478 = vld [vmem:[%s2333 + $0xc0] sm:$0xff]
      %v2479 = vld [vmem:[%s2333 + $0xc8] sm:$0xff]
      %v2480 = vld [vmem:[%s2333 + $0xd8] sm:$0xff]
      %v2481 = vld [vmem:[%s2333 + $0xe0] sm:$0xff]
      %v2482 = vld [vmem:[%s2333 + $0xf0] sm:$0xff]
      %v2483 = vld [vmem:[%s2333 + $0xf8] sm:$0xff]
      %v2484 = vld [vmem:[%s2333 + $0x108] sm:$0xff]
      %v2485 = vld [vmem:[%s2333 + $0x110] sm:$0xff]
      %v2486 = vld [vmem:[%s2333 + $0x120] sm:$0xff]
      %v2487 = vld [vmem:[%s2333 + $0x128] sm:$0xff]
      %v2488 = vld [vmem:[%s2333 + $0x138] sm:$0xff]
      %v2489 = vld [vmem:[%s2333 + $0x140] sm:$0xff]
      %v2490 = vld [vmem:[%s2333 + $0x150] sm:$0xff]
      %v2491 = vld [vmem:[%s2333 + $0x158] sm:$0xff]
      %v2492 = vld [vmem:[%s2333 + $0x168] sm:$0xff]
      %v2493 = vld [vmem:[%s2333 + $0x170] sm:$0xff]
      %v2494 = vld [vmem:[%s2333 + $0x1] sm:$0xff]
      %v2495 = vld [vmem:[%s2333 + $0x9] sm:$0xff]
      %v2496 = vld [vmem:[%s2333 + $0x19] sm:$0xff]
      %v2497 = vld [vmem:[%s2333 + $0x21] sm:$0xff]
      %v2498 = vld [vmem:[%s2333 + $0x31] sm:$0xff]
      %v2499 = vld [vmem:[%s2333 + $0x39] sm:$0xff]
      %v2500 = vld [vmem:[%s2333 + $0x49] sm:$0xff]
      %v2501 = vld [vmem:[%s2333 + $0x51] sm:$0xff]
      %v2502 = vld [vmem:[%s2333 + $0x61] sm:$0xff]
      %v2503 = vld [vmem:[%s2333 + $0x69] sm:$0xff]
      %v2504 = vld [vmem:[%s2333 + $0x79] sm:$0xff]
      %v2505 = vld [vmem:[%s2333 + $0x81] sm:$0xff]
      %v2506 = vld [vmem:[%s2333 + $0x91] sm:$0xff]
      %v2507 = vld [vmem:[%s2333 + $0x99] sm:$0xff]
      %v2508 = vld [vmem:[%s2333 + $0xa9] sm:$0xff]
      %v2509 = vld [vmem:[%s2333 + $0xb1] sm:$0xff]
      %v2510 = vld [vmem:[%s2333 + $0xc1] sm:$0xff]
      %v2511 = vld [vmem:[%s2333 + $0xc9] sm:$0xff]
      %v2512 = vld [vmem:[%s2333 + $0xd9] sm:$0xff]
      %v2513 = vld [vmem:[%s2333 + $0xe1] sm:$0xff]
      %v2514 = vld [vmem:[%s2333 + $0xf1] sm:$0xff]
      %v2515 = vld [vmem:[%s2333 + $0xf9] sm:$0xff]
      %v2516 = vld [vmem:[%s2333 + $0x109] sm:$0xff]
      %v2517 = vld [vmem:[%s2333 + $0x111] sm:$0xff]
      %v2518 = vld [vmem:[%s2333 + $0x121] sm:$0xff]
      %v2519 = vld [vmem:[%s2333 + $0x129] sm:$0xff]
      %v2520 = vld [vmem:[%s2333 + $0x139] sm:$0xff]
      %v2521 = vld [vmem:[%s2333 + $0x141] sm:$0xff]
      %v2522 = vld [vmem:[%s2333 + $0x151] sm:$0xff]
      %v2523 = vld [vmem:[%s2333 + $0x159] sm:$0xff]
      %v2524 = vld [vmem:[%s2333 + $0x169] sm:$0xff]
      %v2525 = vld [vmem:[%s2333 + $0x171] sm:$0xff]
      %v2526 = vld [vmem:[%s2333 + $0x2] sm:$0xff]
      %v2527 = vld [vmem:[%s2333 + $0xa] sm:$0xff]
      %v2528 = vld [vmem:[%s2333 + $0x1a] sm:$0xff]
      %v2529 = vld [vmem:[%s2333 + $0x22] sm:$0xff]
      %v2530 = vld [vmem:[%s2333 + $0x32] sm:$0xff]
      %v2531 = vld [vmem:[%s2333 + $0x3a] sm:$0xff]
      %v2532 = vld [vmem:[%s2333 + $0x4a] sm:$0xff]
      %v2533 = vld [vmem:[%s2333 + $0x52] sm:$0xff]
      %v2534 = vld [vmem:[%s2333 + $0x62] sm:$0xff]
      %v2535 = vld [vmem:[%s2333 + $0x6a] sm:$0xff]
      %v2536 = vld [vmem:[%s2333 + $0x7a] sm:$0xff]
      %v2537 = vld [vmem:[%s2333 + $0x82] sm:$0xff]
      %v2538 = vld [vmem:[%s2333 + $0x92] sm:$0xff]
      %v2539 = vld [vmem:[%s2333 + $0x9a] sm:$0xff]
      %v2540 = vld [vmem:[%s2333 + $0xaa] sm:$0xff]
      %v2541 = vld [vmem:[%s2333 + $0xb2] sm:$0xff]
      %v2542 = vld [vmem:[%s2333 + $0xc2] sm:$0xff]
      %v2543 = vld [vmem:[%s2333 + $0xca] sm:$0xff]
      %v2544 = vld [vmem:[%s2333 + $0xda] sm:$0xff]
      %v2545 = vld [vmem:[%s2333 + $0xe2] sm:$0xff]
      %v2546 = vld [vmem:[%s2333 + $0xf2] sm:$0xff]
      %v2547 = vld [vmem:[%s2333 + $0xfa] sm:$0xff]
      %v2548 = vld [vmem:[%s2333 + $0x10a] sm:$0xff]
      %v2549 = vld [vmem:[%s2333 + $0x112] sm:$0xff]
      %v2550 = vld [vmem:[%s2333 + $0x122] sm:$0xff]
      %v2551 = vld [vmem:[%s2333 + $0x12a] sm:$0xff]
      %v2552 = vld [vmem:[%s2333 + $0x13a] sm:$0xff]
      %v2553 = vld [vmem:[%s2333 + $0x142] sm:$0xff]
      %v2554 = vld [vmem:[%s2333 + $0x152] sm:$0xff]
      %v2555 = vld [vmem:[%s2333 + $0x15a] sm:$0xff]
      %v2556 = vld [vmem:[%s2333 + $0x16a] sm:$0xff]
      %v2557 = vld [vmem:[%s2333 + $0x172] sm:$0xff]
      %s2558 = scalar_lea.vmem [#allocation3], 48
      %v2559 = vld [vmem:[%s2558] sm:$0xff]
      %v2560 = vld [vmem:[%s2558 + $0x8] sm:$0xff]
      %v2561 = vld [vmem:[%s2558 + $0x18] sm:$0xff]
      %v2562 = vld [vmem:[%s2558 + $0x20] sm:$0xff]
      %v2563 = vld [vmem:[%s2558 + $0x30] sm:$0xff]
      %v2564 = vld [vmem:[%s2558 + $0x38] sm:$0xff]
      %v2565 = vld [vmem:[%s2558 + $0x48] sm:$0xff]
      %v2566 = vld [vmem:[%s2558 + $0x50] sm:$0xff]
      %v2567 = vld [vmem:[%s2558 + $0x60] sm:$0xff]
      %v2568 = vld [vmem:[%s2558 + $0x68] sm:$0xff]
      %v2569 = vld [vmem:[%s2558 + $0x78] sm:$0xff]
      %v2570 = vld [vmem:[%s2558 + $0x80] sm:$0xff]
      %v2571 = vld [vmem:[%s2558 + $0x90] sm:$0xff]
      %v2572 = vld [vmem:[%s2558 + $0x98] sm:$0xff]
      %v2573 = vld [vmem:[%s2558 + $0xa8] sm:$0xff]
      %v2574 = vld [vmem:[%s2558 + $0xb0] sm:$0xff]
      %v2575 = vld [vmem:[%s2558 + $0xc0] sm:$0xff]
      %v2576 = vld [vmem:[%s2558 + $0xc8] sm:$0xff]
      %v2577 = vld [vmem:[%s2558 + $0xd8] sm:$0xff]
      %v2578 = vld [vmem:[%s2558 + $0xe0] sm:$0xff]
      %v2579 = vld [vmem:[%s2558 + $0xf0] sm:$0xff]
      %v2580 = vld [vmem:[%s2558 + $0xf8] sm:$0xff]
      %v2581 = vld [vmem:[%s2558 + $0x108] sm:$0xff]
      %v2582 = vld [vmem:[%s2558 + $0x110] sm:$0xff]
      %v2583 = vld [vmem:[%s2558 + $0x120] sm:$0xff]
      %v2584 = vld [vmem:[%s2558 + $0x128] sm:$0xff]
      %v2585 = vld [vmem:[%s2558 + $0x138] sm:$0xff]
      %v2586 = vld [vmem:[%s2558 + $0x140] sm:$0xff]
      %v2587 = vld [vmem:[%s2558 + $0x150] sm:$0xff]
      %v2588 = vld [vmem:[%s2558 + $0x158] sm:$0xff]
      %v2589 = vld [vmem:[%s2558 + $0x168] sm:$0xff]
      %v2590 = vld [vmem:[%s2558 + $0x170] sm:$0xff]
      %v2591 = vld [vmem:[%s2558 + $0x1] sm:$0xff]
      %v2592 = vld [vmem:[%s2558 + $0x9] sm:$0xff]
      %v2593 = vld [vmem:[%s2558 + $0x19] sm:$0xff]
      %v2594 = vld [vmem:[%s2558 + $0x21] sm:$0xff]
      %v2595 = vld [vmem:[%s2558 + $0x31] sm:$0xff]
      %v2596 = vld [vmem:[%s2558 + $0x39] sm:$0xff]
      %v2597 = vld [vmem:[%s2558 + $0x49] sm:$0xff]
      %v2598 = vld [vmem:[%s2558 + $0x51] sm:$0xff]
      %v2599 = vld [vmem:[%s2558 + $0x61] sm:$0xff]
      %v2600 = vld [vmem:[%s2558 + $0x69] sm:$0xff]
      %v2601 = vld [vmem:[%s2558 + $0x79] sm:$0xff]
      %v2602 = vld [vmem:[%s2558 + $0x81] sm:$0xff]
      %v2603 = vld [vmem:[%s2558 + $0x91] sm:$0xff]
      %v2604 = vld [vmem:[%s2558 + $0x99] sm:$0xff]
      %v2605 = vld [vmem:[%s2558 + $0xa9] sm:$0xff]
      %v2606 = vld [vmem:[%s2558 + $0xb1] sm:$0xff]
      %v2607 = vld [vmem:[%s2558 + $0xc1] sm:$0xff]
      %v2608 = vld [vmem:[%s2558 + $0xc9] sm:$0xff]
      %v2609 = vld [vmem:[%s2558 + $0xd9] sm:$0xff]
      %v2610 = vld [vmem:[%s2558 + $0xe1] sm:$0xff]
      %v2611 = vld [vmem:[%s2558 + $0xf1] sm:$0xff]
      %v2612 = vld [vmem:[%s2558 + $0xf9] sm:$0xff]
      %v2613 = vld [vmem:[%s2558 + $0x109] sm:$0xff]
      %v2614 = vld [vmem:[%s2558 + $0x111] sm:$0xff]
      %v2615 = vld [vmem:[%s2558 + $0x121] sm:$0xff]
      %v2616 = vld [vmem:[%s2558 + $0x129] sm:$0xff]
      %v2617 = vld [vmem:[%s2558 + $0x139] sm:$0xff]
      %v2618 = vld [vmem:[%s2558 + $0x141] sm:$0xff]
      %v2619 = vld [vmem:[%s2558 + $0x151] sm:$0xff]
      %v2620 = vld [vmem:[%s2558 + $0x159] sm:$0xff]
      %v2621 = vld [vmem:[%s2558 + $0x169] sm:$0xff]
      %v2622 = vld [vmem:[%s2558 + $0x171] sm:$0xff]
      %v2623 = vld [vmem:[%s2558 + $0x2] sm:$0xff]
      %v2624 = vld [vmem:[%s2558 + $0xa] sm:$0xff]
      %v2625 = vld [vmem:[%s2558 + $0x1a] sm:$0xff]
      %v2626 = vld [vmem:[%s2558 + $0x22] sm:$0xff]
      %v2627 = vld [vmem:[%s2558 + $0x32] sm:$0xff]
      %v2628 = vld [vmem:[%s2558 + $0x3a] sm:$0xff]
      %v2629 = vld [vmem:[%s2558 + $0x4a] sm:$0xff]
      %v2630 = vld [vmem:[%s2558 + $0x52] sm:$0xff]
      %v2631 = vld [vmem:[%s2558 + $0x62] sm:$0xff]
      %v2632 = vld [vmem:[%s2558 + $0x6a] sm:$0xff]
      %v2633 = vld [vmem:[%s2558 + $0x7a] sm:$0xff]
      %v2634 = vld [vmem:[%s2558 + $0x82] sm:$0xff]
      %v2635 = vld [vmem:[%s2558 + $0x92] sm:$0xff]
      %v2636 = vld [vmem:[%s2558 + $0x9a] sm:$0xff]
      %v2637 = vld [vmem:[%s2558 + $0xaa] sm:$0xff]
      %v2638 = vld [vmem:[%s2558 + $0xb2] sm:$0xff]
      %v2639 = vld [vmem:[%s2558 + $0xc2] sm:$0xff]
      %v2640 = vld [vmem:[%s2558 + $0xca] sm:$0xff]
      %v2641 = vld [vmem:[%s2558 + $0xda] sm:$0xff]
      %v2642 = vld [vmem:[%s2558 + $0xe2] sm:$0xff]
      %v2643 = vld [vmem:[%s2558 + $0xf2] sm:$0xff]
      %v2644 = vld [vmem:[%s2558 + $0xfa] sm:$0xff]
      %v2645 = vld [vmem:[%s2558 + $0x10a] sm:$0xff]
      %v2646 = vld [vmem:[%s2558 + $0x112] sm:$0xff]
      %v2647 = vld [vmem:[%s2558 + $0x122] sm:$0xff]
      %v2648 = vld [vmem:[%s2558 + $0x12a] sm:$0xff]
      %v2649 = vld [vmem:[%s2558 + $0x13a] sm:$0xff]
      %v2650 = vld [vmem:[%s2558 + $0x142] sm:$0xff]
      %v2651 = vld [vmem:[%s2558 + $0x152] sm:$0xff]
      %v2652 = vld [vmem:[%s2558 + $0x15a] sm:$0xff]
      %v2653 = vld [vmem:[%s2558 + $0x16a] sm:$0xff]
      %v2654 = vld [vmem:[%s2558 + $0x172] sm:$0xff]
      %2687 = vrot.lane.b32.xlu0 %v2398, 4
      %v2688 = vpop.permute.xlu0 %2687
      %2689 = vrot.lane.b32.xlu0 %v2399, 4
      %v2690 = vpop.permute.xlu0 %2689
      %2691 = vrot.lane.b32.xlu0 %v2400, 4
      %v2692 = vpop.permute.xlu0 %2691
      %2693 = vrot.lane.b32.xlu0 %v2401, 4
      %v2694 = vpop.permute.xlu0 %2693
      %2695 = vrot.lane.b32.xlu0 %v2402, 4
      %v2696 = vpop.permute.xlu0 %2695
      %2697 = vrot.lane.b32.xlu0 %v2403, 4
      %v2698 = vpop.permute.xlu0 %2697
      %2699 = vrot.lane.b32.xlu0 %v2404, 4
      %v2700 = vpop.permute.xlu0 %2699
      %2701 = vrot.lane.b32.xlu0 %v2405, 4
      %v2702 = vpop.permute.xlu0 %2701
      %2703 = vrot.lane.b32.xlu0 %v2406, 4
      %v2704 = vpop.permute.xlu0 %2703
      %2705 = vrot.lane.b32.xlu0 %v2407, 4
      %v2706 = vpop.permute.xlu0 %2705
      %2707 = vrot.lane.b32.xlu0 %v2408, 4
      %v2708 = vpop.permute.xlu0 %2707
      %2709 = vrot.lane.b32.xlu0 %v2409, 4
      %v2710 = vpop.permute.xlu0 %2709
      %2711 = vrot.lane.b32.xlu0 %v2410, 4
      %v2712 = vpop.permute.xlu0 %2711
      %2713 = vrot.lane.b32.xlu0 %v2411, 4
      %v2714 = vpop.permute.xlu0 %2713
      %2715 = vrot.lane.b32.xlu0 %v2412, 4
      %v2716 = vpop.permute.xlu0 %2715
      %2717 = vrot.lane.b32.xlu0 %v2413, 4
      %v2718 = vpop.permute.xlu0 %2717
      %2719 = vrot.lane.b32.xlu0 %v2414, 4
      %v2720 = vpop.permute.xlu0 %2719
      %2721 = vrot.lane.b32.xlu0 %v2415, 4
      %v2722 = vpop.permute.xlu0 %2721
      %2723 = vrot.lane.b32.xlu0 %v2416, 4
      %v2724 = vpop.permute.xlu0 %2723
      %2725 = vrot.lane.b32.xlu0 %v2417, 4
      %v2726 = vpop.permute.xlu0 %2725
      %2727 = vrot.lane.b32.xlu0 %v2418, 4
      %v2728 = vpop.permute.xlu0 %2727
      %2729 = vrot.lane.b32.xlu0 %v2419, 4
      %v2730 = vpop.permute.xlu0 %2729
      %2731 = vrot.lane.b32.xlu0 %v2420, 4
      %v2732 = vpop.permute.xlu0 %2731
      %2733 = vrot.lane.b32.xlu0 %v2421, 4
      %v2734 = vpop.permute.xlu0 %2733
      %2735 = vrot.lane.b32.xlu0 %v2422, 4
      %v2736 = vpop.permute.xlu0 %2735
      %2737 = vrot.lane.b32.xlu0 %v2423, 4
      %v2738 = vpop.permute.xlu0 %2737
      %2739 = vrot.lane.b32.xlu0 %v2424, 4
      %v2740 = vpop.permute.xlu0 %2739
      %2741 = vrot.lane.b32.xlu0 %v2425, 4
      %v2742 = vpop.permute.xlu0 %2741
      %2743 = vrot.lane.b32.xlu0 %v2426, 4
      %v2744 = vpop.permute.xlu0 %2743
      %2745 = vrot.lane.b32.xlu0 %v2427, 4
      %v2746 = vpop.permute.xlu0 %2745
      %2747 = vrot.lane.b32.xlu0 %v2428, 4
      %v2748 = vpop.permute.xlu0 %2747
      %2749 = vrot.lane.b32.xlu0 %v2429, 4
      %v2750 = vpop.permute.xlu0 %2749
      %2815 = vrot.lane.b32.xlu0 %v2430, 8
      %v2816 = vpop.permute.xlu0 %2815
      %2817 = vrot.lane.b32.xlu0 %v2431, 8
      %v2818 = vpop.permute.xlu0 %2817
      %2819 = vrot.lane.b32.xlu0 %v2432, 8
      %v2820 = vpop.permute.xlu0 %2819
      %2821 = vrot.lane.b32.xlu0 %v2433, 8
      %v2822 = vpop.permute.xlu0 %2821
      %2823 = vrot.lane.b32.xlu0 %v2434, 8
      %v2824 = vpop.permute.xlu0 %2823
      %2825 = vrot.lane.b32.xlu0 %v2435, 8
      %v2826 = vpop.permute.xlu0 %2825
      %2827 = vrot.lane.b32.xlu0 %v2436, 8
      %v2828 = vpop.permute.xlu0 %2827
      %2829 = vrot.lane.b32.xlu0 %v2437, 8
      %v2830 = vpop.permute.xlu0 %2829
      %2831 = vrot.lane.b32.xlu0 %v2438, 8
      %v2832 = vpop.permute.xlu0 %2831
      %2833 = vrot.lane.b32.xlu0 %v2439, 8
      %v2834 = vpop.permute.xlu0 %2833
      %2835 = vrot.lane.b32.xlu0 %v2440, 8
      %v2836 = vpop.permute.xlu0 %2835
      %2837 = vrot.lane.b32.xlu0 %v2441, 8
      %v2838 = vpop.permute.xlu0 %2837
      %2839 = vrot.lane.b32.xlu0 %v2442, 8
      %v2840 = vpop.permute.xlu0 %2839
      %2841 = vrot.lane.b32.xlu0 %v2443, 8
      %v2842 = vpop.permute.xlu0 %2841
      %2843 = vrot.lane.b32.xlu0 %v2444, 8
      %v2844 = vpop.permute.xlu0 %2843
      %2845 = vrot.lane.b32.xlu0 %v2445, 8
      %v2846 = vpop.permute.xlu0 %2845
      %2847 = vrot.lane.b32.xlu0 %v2446, 8
      %v2848 = vpop.permute.xlu0 %2847
      %2849 = vrot.lane.b32.xlu0 %v2447, 8
      %v2850 = vpop.permute.xlu0 %2849
      %2851 = vrot.lane.b32.xlu0 %v2448, 8
      %v2852 = vpop.permute.xlu0 %2851
      %2853 = vrot.lane.b32.xlu0 %v2449, 8
      %v2854 = vpop.permute.xlu0 %2853
      %2855 = vrot.lane.b32.xlu0 %v2450, 8
      %v2856 = vpop.permute.xlu0 %2855
      %2857 = vrot.lane.b32.xlu0 %v2451, 8
      %v2858 = vpop.permute.xlu0 %2857
      %2859 = vrot.lane.b32.xlu0 %v2452, 8
      %v2860 = vpop.permute.xlu0 %2859
      %2861 = vrot.lane.b32.xlu0 %v2453, 8
      %v2862 = vpop.permute.xlu0 %2861
      %2863 = vrot.lane.b32.xlu0 %v2454, 8
      %v2864 = vpop.permute.xlu0 %2863
      %2865 = vrot.lane.b32.xlu0 %v2455, 8
      %v2866 = vpop.permute.xlu0 %2865
      %2867 = vrot.lane.b32.xlu0 %v2456, 8
      %v2868 = vpop.permute.xlu0 %2867
      %2869 = vrot.lane.b32.xlu0 %v2457, 8
      %v2870 = vpop.permute.xlu0 %2869
      %2871 = vrot.lane.b32.xlu0 %v2458, 8
      %v2872 = vpop.permute.xlu0 %2871
      %2873 = vrot.lane.b32.xlu0 %v2459, 8
      %v2874 = vpop.permute.xlu0 %2873
      %2875 = vrot.lane.b32.xlu0 %v2460, 8
      %v2876 = vpop.permute.xlu0 %2875
      %2877 = vrot.lane.b32.xlu0 %v2461, 8
      %v2878 = vpop.permute.xlu0 %2877
      %2943 = vrot.lane.b32.xlu0 %v2462, 12
      %v2944 = vpop.permute.xlu0 %2943
      %2945 = vrot.lane.b32.xlu0 %v2463, 12
      %v2946 = vpop.permute.xlu0 %2945
      %2947 = vrot.lane.b32.xlu0 %v2464, 12
      %v2948 = vpop.permute.xlu0 %2947
      %2949 = vrot.lane.b32.xlu0 %v2465, 12
      %v2950 = vpop.permute.xlu0 %2949
      %2951 = vrot.lane.b32.xlu0 %v2466, 12
      %v2952 = vpop.permute.xlu0 %2951
      %2953 = vrot.lane.b32.xlu0 %v2467, 12
      %v2954 = vpop.permute.xlu0 %2953
      %2955 = vrot.lane.b32.xlu0 %v2468, 12
      %v2956 = vpop.permute.xlu0 %2955
      %2957 = vrot.lane.b32.xlu0 %v2469, 12
      %v2958 = vpop.permute.xlu0 %2957
      %2959 = vrot.lane.b32.xlu0 %v2470, 12
      %v2960 = vpop.permute.xlu0 %2959
      %2961 = vrot.lane.b32.xlu0 %v2471, 12
      %v2962 = vpop.permute.xlu0 %2961
      %2963 = vrot.lane.b32.xlu0 %v2472, 12
      %v2964 = vpop.permute.xlu0 %2963
      %2965 = vrot.lane.b32.xlu0 %v2473, 12
      %v2966 = vpop.permute.xlu0 %2965
      %2967 = vrot.lane.b32.xlu0 %v2474, 12
      %v2968 = vpop.permute.xlu0 %2967
      %2969 = vrot.lane.b32.xlu0 %v2475, 12
      %v2970 = vpop.permute.xlu0 %2969
      %2971 = vrot.lane.b32.xlu0 %v2476, 12
      %v2972 = vpop.permute.xlu0 %2971
      %2973 = vrot.lane.b32.xlu0 %v2477, 12
      %v2974 = vpop.permute.xlu0 %2973
      %2975 = vrot.lane.b32.xlu0 %v2478, 12
      %v2976 = vpop.permute.xlu0 %2975
      %2977 = vrot.lane.b32.xlu0 %v2479, 12
      %v2978 = vpop.permute.xlu0 %2977
      %2979 = vrot.lane.b32.xlu0 %v2480, 12
      %v2980 = vpop.permute.xlu0 %2979
      %2981 = vrot.lane.b32.xlu0 %v2481, 12
      %v2982 = vpop.permute.xlu0 %2981
      %2983 = vrot.lane.b32.xlu0 %v2482, 12
      %v2984 = vpop.permute.xlu0 %2983
      %2985 = vrot.lane.b32.xlu0 %v2483, 12
      %v2986 = vpop.permute.xlu0 %2985
      %2987 = vrot.lane.b32.xlu0 %v2484, 12
      %v2988 = vpop.permute.xlu0 %2987
      %2989 = vrot.lane.b32.xlu0 %v2485, 12
      %v2990 = vpop.permute.xlu0 %2989
      %2991 = vrot.lane.b32.xlu0 %v2486, 12
      %v2992 = vpop.permute.xlu0 %2991
      %2993 = vrot.lane.b32.xlu0 %v2487, 12
      %v2994 = vpop.permute.xlu0 %2993
      %2995 = vrot.lane.b32.xlu0 %v2488, 12
      %v2996 = vpop.permute.xlu0 %2995
      %2997 = vrot.lane.b32.xlu0 %v2489, 12
      %v2998 = vpop.permute.xlu0 %2997
      %2999 = vrot.lane.b32.xlu0 %v2490, 12
      %v3000 = vpop.permute.xlu0 %2999
      %3001 = vrot.lane.b32.xlu0 %v2491, 12
      %v3002 = vpop.permute.xlu0 %3001
      %3003 = vrot.lane.b32.xlu0 %v2492, 12
      %v3004 = vpop.permute.xlu0 %3003
      %3005 = vrot.lane.b32.xlu0 %v2493, 12
      %v3006 = vpop.permute.xlu0 %3005
      %3071 = vrot.lane.b32.xlu0 %v2494, 16
      %v3072 = vpop.permute.xlu0 %3071
      %3073 = vrot.lane.b32.xlu0 %v2495, 16
      %v3074 = vpop.permute.xlu0 %3073
      %3075 = vrot.lane.b32.xlu0 %v2496, 16
      %v3076 = vpop.permute.xlu0 %3075
      %3077 = vrot.lane.b32.xlu0 %v2497, 16
      %v3078 = vpop.permute.xlu0 %3077
      %3079 = vrot.lane.b32.xlu0 %v2498, 16
      %v3080 = vpop.permute.xlu0 %3079
      %3081 = vrot.lane.b32.xlu0 %v2499, 16
      %v3082 = vpop.permute.xlu0 %3081
      %3083 = vrot.lane.b32.xlu0 %v2500, 16
      %v3084 = vpop.permute.xlu0 %3083
      %3085 = vrot.lane.b32.xlu0 %v2501, 16
      %v3086 = vpop.permute.xlu0 %3085
      %3087 = vrot.lane.b32.xlu0 %v2502, 16
      %v3088 = vpop.permute.xlu0 %3087
      %3089 = vrot.lane.b32.xlu0 %v2503, 16
      %v3090 = vpop.permute.xlu0 %3089
      %3091 = vrot.lane.b32.xlu0 %v2504, 16
      %v3092 = vpop.permute.xlu0 %3091
      %3093 = vrot.lane.b32.xlu0 %v2505, 16
      %v3094 = vpop.permute.xlu0 %3093
      %3095 = vrot.lane.b32.xlu0 %v2506, 16
      %v3096 = vpop.permute.xlu0 %3095
      %3097 = vrot.lane.b32.xlu0 %v2507, 16
      %v3098 = vpop.permute.xlu0 %3097
      %3099 = vrot.lane.b32.xlu0 %v2508, 16
      %v3100 = vpop.permute.xlu0 %3099
      %3101 = vrot.lane.b32.xlu0 %v2509, 16
      %v3102 = vpop.permute.xlu0 %3101
      %3103 = vrot.lane.b32.xlu0 %v2510, 16
      %v3104 = vpop.permute.xlu0 %3103
      %3105 = vrot.lane.b32.xlu0 %v2511, 16
      %v3106 = vpop.permute.xlu0 %3105
      %3107 = vrot.lane.b32.xlu0 %v2512, 16
      %v3108 = vpop.permute.xlu0 %3107
      %3109 = vrot.lane.b32.xlu0 %v2513, 16
      %v3110 = vpop.permute.xlu0 %3109
      %3111 = vrot.lane.b32.xlu0 %v2514, 16
      %v3112 = vpop.permute.xlu0 %3111
      %3113 = vrot.lane.b32.xlu0 %v2515, 16
      %v3114 = vpop.permute.xlu0 %3113
      %3115 = vrot.lane.b32.xlu0 %v2516, 16
      %v3116 = vpop.permute.xlu0 %3115
      %3117 = vrot.lane.b32.xlu0 %v2517, 16
      %v3118 = vpop.permute.xlu0 %3117
      %3119 = vrot.lane.b32.xlu0 %v2518, 16
      %v3120 = vpop.permute.xlu0 %3119
      %3121 = vrot.lane.b32.xlu0 %v2519, 16
      %v3122 = vpop.permute.xlu0 %3121
      %3123 = vrot.lane.b32.xlu0 %v2520, 16
      %v3124 = vpop.permute.xlu0 %3123
      %3125 = vrot.lane.b32.xlu0 %v2521, 16
      %v3126 = vpop.permute.xlu0 %3125
      %3127 = vrot.lane.b32.xlu0 %v2522, 16
      %v3128 = vpop.permute.xlu0 %3127
      %3129 = vrot.lane.b32.xlu0 %v2523, 16
      %v3130 = vpop.permute.xlu0 %3129
      %3131 = vrot.lane.b32.xlu0 %v2524, 16
      %v3132 = vpop.permute.xlu0 %3131
      %3133 = vrot.lane.b32.xlu0 %v2525, 16
      %v3134 = vpop.permute.xlu0 %3133
      %3199 = vrot.lane.b32.xlu0 %v2526, 20
      %v3200 = vpop.permute.xlu0 %3199
      %3201 = vrot.lane.b32.xlu0 %v2527, 20
      %v3202 = vpop.permute.xlu0 %3201
      %3203 = vrot.lane.b32.xlu0 %v2528, 20
      %v3204 = vpop.permute.xlu0 %3203
      %3205 = vrot.lane.b32.xlu0 %v2529, 20
      %v3206 = vpop.permute.xlu0 %3205
      %3207 = vrot.lane.b32.xlu0 %v2530, 20
      %v3208 = vpop.permute.xlu0 %3207
      %3209 = vrot.lane.b32.xlu0 %v2531, 20
      %v3210 = vpop.permute.xlu0 %3209
      %3211 = vrot.lane.b32.xlu0 %v2532, 20
      %v3212 = vpop.permute.xlu0 %3211
      %3213 = vrot.lane.b32.xlu0 %v2533, 20
      %v3214 = vpop.permute.xlu0 %3213
      %3215 = vrot.lane.b32.xlu0 %v2534, 20
      %v3216 = vpop.permute.xlu0 %3215
      %3217 = vrot.lane.b32.xlu0 %v2535, 20
      %v3218 = vpop.permute.xlu0 %3217
      %3219 = vrot.lane.b32.xlu0 %v2536, 20
      %v3220 = vpop.permute.xlu0 %3219
      %3221 = vrot.lane.b32.xlu0 %v2537, 20
      %v3222 = vpop.permute.xlu0 %3221
      %3223 = vrot.lane.b32.xlu0 %v2538, 20
      %v3224 = vpop.permute.xlu0 %3223
      %3225 = vrot.lane.b32.xlu0 %v2539, 20
      %v3226 = vpop.permute.xlu0 %3225
      %3227 = vrot.lane.b32.xlu0 %v2540, 20
      %v3228 = vpop.permute.xlu0 %3227
      %3229 = vrot.lane.b32.xlu0 %v2541, 20
      %v3230 = vpop.permute.xlu0 %3229
      %3231 = vrot.lane.b32.xlu0 %v2542, 20
      %v3232 = vpop.permute.xlu0 %3231
      %3233 = vrot.lane.b32.xlu0 %v2543, 20
      %v3234 = vpop.permute.xlu0 %3233
      %3235 = vrot.lane.b32.xlu0 %v2544, 20
      %v3236 = vpop.permute.xlu0 %3235
      %3237 = vrot.lane.b32.xlu0 %v2545, 20
      %v3238 = vpop.permute.xlu0 %3237
      %3239 = vrot.lane.b32.xlu0 %v2546, 20
      %v3240 = vpop.permute.xlu0 %3239
      %3241 = vrot.lane.b32.xlu0 %v2547, 20
      %v3242 = vpop.permute.xlu0 %3241
      %3243 = vrot.lane.b32.xlu0 %v2548, 20
      %v3244 = vpop.permute.xlu0 %3243
      %3245 = vrot.lane.b32.xlu0 %v2549, 20
      %v3246 = vpop.permute.xlu0 %3245
      %3247 = vrot.lane.b32.xlu0 %v2550, 20
      %v3248 = vpop.permute.xlu0 %3247
      %3249 = vrot.lane.b32.xlu0 %v2551, 20
      %v3250 = vpop.permute.xlu0 %3249
      %3251 = vrot.lane.b32.xlu0 %v2552, 20
      %v3252 = vpop.permute.xlu0 %3251
      %3253 = vrot.lane.b32.xlu0 %v2553, 20
      %v3254 = vpop.permute.xlu0 %3253
      %3255 = vrot.lane.b32.xlu0 %v2554, 20
      %v3256 = vpop.permute.xlu0 %3255
      %3257 = vrot.lane.b32.xlu0 %v2555, 20
      %v3258 = vpop.permute.xlu0 %3257
      %3259 = vrot.lane.b32.xlu0 %v2556, 20
      %v3260 = vpop.permute.xlu0 %3259
      %3261 = vrot.lane.b32.xlu0 %v2557, 20
      %v3262 = vpop.permute.xlu0 %3261
      %3327 = vrot.lane.b32.xlu0 %v2559, 24
      %v3328 = vpop.permute.xlu0 %3327
      %3329 = vrot.lane.b32.xlu0 %v2560, 24
      %v3330 = vpop.permute.xlu0 %3329
      %3331 = vrot.lane.b32.xlu0 %v2561, 24
      %v3332 = vpop.permute.xlu0 %3331
      %3333 = vrot.lane.b32.xlu0 %v2562, 24
      %v3334 = vpop.permute.xlu0 %3333
      %3335 = vrot.lane.b32.xlu0 %v2563, 24
      %v3336 = vpop.permute.xlu0 %3335
      %3337 = vrot.lane.b32.xlu0 %v2564, 24
      %v3338 = vpop.permute.xlu0 %3337
      %3339 = vrot.lane.b32.xlu0 %v2565, 24
      %v3340 = vpop.permute.xlu0 %3339
      %3341 = vrot.lane.b32.xlu0 %v2566, 24
      %v3342 = vpop.permute.xlu0 %3341
      %3343 = vrot.lane.b32.xlu0 %v2567, 24
      %v3344 = vpop.permute.xlu0 %3343
      %3345 = vrot.lane.b32.xlu0 %v2568, 24
      %v3346 = vpop.permute.xlu0 %3345
      %3347 = vrot.lane.b32.xlu0 %v2569, 24
      %v3348 = vpop.permute.xlu0 %3347
      %3349 = vrot.lane.b32.xlu0 %v2570, 24
      %v3350 = vpop.permute.xlu0 %3349
      %3351 = vrot.lane.b32.xlu0 %v2571, 24
      %v3352 = vpop.permute.xlu0 %3351
      %3353 = vrot.lane.b32.xlu0 %v2572, 24
      %v3354 = vpop.permute.xlu0 %3353
      %3355 = vrot.lane.b32.xlu0 %v2573, 24
      %v3356 = vpop.permute.xlu0 %3355
      %3357 = vrot.lane.b32.xlu0 %v2574, 24
      %v3358 = vpop.permute.xlu0 %3357
      %3359 = vrot.lane.b32.xlu0 %v2575, 24
      %v3360 = vpop.permute.xlu0 %3359
      %3361 = vrot.lane.b32.xlu0 %v2576, 24
      %v3362 = vpop.permute.xlu0 %3361
      %3363 = vrot.lane.b32.xlu0 %v2577, 24
      %v3364 = vpop.permute.xlu0 %3363
      %3365 = vrot.lane.b32.xlu0 %v2578, 24
      %v3366 = vpop.permute.xlu0 %3365
      %3367 = vrot.lane.b32.xlu0 %v2579, 24
      %v3368 = vpop.permute.xlu0 %3367
      %3369 = vrot.lane.b32.xlu0 %v2580, 24
      %v3370 = vpop.permute.xlu0 %3369
      %3371 = vrot.lane.b32.xlu0 %v2581, 24
      %v3372 = vpop.permute.xlu0 %3371
      %3373 = vrot.lane.b32.xlu0 %v2582, 24
      %v3374 = vpop.permute.xlu0 %3373
      %3375 = vrot.lane.b32.xlu0 %v2583, 24
      %v3376 = vpop.permute.xlu0 %3375
      %3377 = vrot.lane.b32.xlu0 %v2584, 24
      %v3378 = vpop.permute.xlu0 %3377
      %3379 = vrot.lane.b32.xlu0 %v2585, 24
      %v3380 = vpop.permute.xlu0 %3379
      %3381 = vrot.lane.b32.xlu0 %v2586, 24
      %v3382 = vpop.permute.xlu0 %3381
      %3383 = vrot.lane.b32.xlu0 %v2587, 24
      %v3384 = vpop.permute.xlu0 %3383
      %3385 = vrot.lane.b32.xlu0 %v2588, 24
      %v3386 = vpop.permute.xlu0 %3385
      %3387 = vrot.lane.b32.xlu0 %v2589, 24
      %v3388 = vpop.permute.xlu0 %3387
      %3389 = vrot.lane.b32.xlu0 %v2590, 24
      %v3390 = vpop.permute.xlu0 %3389
      %3455 = vrot.lane.b32.xlu0 %v2591, 28
      %v3456 = vpop.permute.xlu0 %3455
      %3457 = vrot.lane.b32.xlu0 %v2592, 28
      %v3458 = vpop.permute.xlu0 %3457
      %3459 = vrot.lane.b32.xlu0 %v2593, 28
      %v3460 = vpop.permute.xlu0 %3459
      %3461 = vrot.lane.b32.xlu0 %v2594, 28
      %v3462 = vpop.permute.xlu0 %3461
      %3463 = vrot.lane.b32.xlu0 %v2595, 28
      %v3464 = vpop.permute.xlu0 %3463
      %3465 = vrot.lane.b32.xlu0 %v2596, 28
      %v3466 = vpop.permute.xlu0 %3465
      %3467 = vrot.lane.b32.xlu0 %v2597, 28
      %v3468 = vpop.permute.xlu0 %3467
      %3469 = vrot.lane.b32.xlu0 %v2598, 28
      %v3470 = vpop.permute.xlu0 %3469
      %3471 = vrot.lane.b32.xlu0 %v2599, 28
      %v3472 = vpop.permute.xlu0 %3471
      %3473 = vrot.lane.b32.xlu0 %v2600, 28
      %v3474 = vpop.permute.xlu0 %3473
      %3475 = vrot.lane.b32.xlu0 %v2601, 28
      %v3476 = vpop.permute.xlu0 %3475
      %3477 = vrot.lane.b32.xlu0 %v2602, 28
      %v3478 = vpop.permute.xlu0 %3477
      %3479 = vrot.lane.b32.xlu0 %v2603, 28
      %v3480 = vpop.permute.xlu0 %3479
      %3481 = vrot.lane.b32.xlu0 %v2604, 28
      %v3482 = vpop.permute.xlu0 %3481
      %3483 = vrot.lane.b32.xlu0 %v2605, 28
      %v3484 = vpop.permute.xlu0 %3483
      %3485 = vrot.lane.b32.xlu0 %v2606, 28
      %v3486 = vpop.permute.xlu0 %3485
      %3487 = vrot.lane.b32.xlu0 %v2607, 28
      %v3488 = vpop.permute.xlu0 %3487
      %3489 = vrot.lane.b32.xlu0 %v2608, 28
      %v3490 = vpop.permute.xlu0 %3489
      %3491 = vrot.lane.b32.xlu0 %v2609, 28
      %v3492 = vpop.permute.xlu0 %3491
      %3493 = vrot.lane.b32.xlu0 %v2610, 28
      %v3494 = vpop.permute.xlu0 %3493
      %3495 = vrot.lane.b32.xlu0 %v2611, 28
      %v3496 = vpop.permute.xlu0 %3495
      %3497 = vrot.lane.b32.xlu0 %v2612, 28
      %v3498 = vpop.permute.xlu0 %3497
      %3499 = vrot.lane.b32.xlu0 %v2613, 28
      %v3500 = vpop.permute.xlu0 %3499
      %3501 = vrot.lane.b32.xlu0 %v2614, 28
      %v3502 = vpop.permute.xlu0 %3501
      %3503 = vrot.lane.b32.xlu0 %v2615, 28
      %v3504 = vpop.permute.xlu0 %3503
      %3505 = vrot.lane.b32.xlu0 %v2616, 28
      %v3506 = vpop.permute.xlu0 %3505
      %3507 = vrot.lane.b32.xlu0 %v2617, 28
      %v3508 = vpop.permute.xlu0 %3507
      %3509 = vrot.lane.b32.xlu0 %v2618, 28
      %v3510 = vpop.permute.xlu0 %3509
      %3511 = vrot.lane.b32.xlu0 %v2619, 28
      %v3512 = vpop.permute.xlu0 %3511
      %3513 = vrot.lane.b32.xlu0 %v2620, 28
      %v3514 = vpop.permute.xlu0 %3513
      %3515 = vrot.lane.b32.xlu0 %v2621, 28
      %v3516 = vpop.permute.xlu0 %3515
      %3517 = vrot.lane.b32.xlu0 %v2622, 28
      %v3518 = vpop.permute.xlu0 %3517
      %3583 = vrot.lane.b32.xlu0 %v2623, 32
      %v3584 = vpop.permute.xlu0 %3583
      %3585 = vrot.lane.b32.xlu0 %v2624, 32
      %v3586 = vpop.permute.xlu0 %3585
      %3587 = vrot.lane.b32.xlu0 %v2625, 32
      %v3588 = vpop.permute.xlu0 %3587
      %3589 = vrot.lane.b32.xlu0 %v2626, 32
      %v3590 = vpop.permute.xlu0 %3589
      %3591 = vrot.lane.b32.xlu0 %v2627, 32
      %v3592 = vpop.permute.xlu0 %3591
      %3593 = vrot.lane.b32.xlu0 %v2628, 32
      %v3594 = vpop.permute.xlu0 %3593
      %3595 = vrot.lane.b32.xlu0 %v2629, 32
      %v3596 = vpop.permute.xlu0 %3595
      %3597 = vrot.lane.b32.xlu0 %v2630, 32
      %v3598 = vpop.permute.xlu0 %3597
      %3599 = vrot.lane.b32.xlu0 %v2631, 32
      %v3600 = vpop.permute.xlu0 %3599
      %3601 = vrot.lane.b32.xlu0 %v2632, 32
      %v3602 = vpop.permute.xlu0 %3601
      %3603 = vrot.lane.b32.xlu0 %v2633, 32
      %v3604 = vpop.permute.xlu0 %3603
      %3605 = vrot.lane.b32.xlu0 %v2634, 32
      %v3606 = vpop.permute.xlu0 %3605
      %3607 = vrot.lane.b32.xlu0 %v2635, 32
      %v3608 = vpop.permute.xlu0 %3607
      %3609 = vrot.lane.b32.xlu0 %v2636, 32
      %v3610 = vpop.permute.xlu0 %3609
      %3611 = vrot.lane.b32.xlu0 %v2637, 32
      %v3612 = vpop.permute.xlu0 %3611
      %3613 = vrot.lane.b32.xlu0 %v2638, 32
      %v3614 = vpop.permute.xlu0 %3613
      %3615 = vrot.lane.b32.xlu0 %v2639, 32
      %v3616 = vpop.permute.xlu0 %3615
      %3617 = vrot.lane.b32.xlu0 %v2640, 32
      %v3618 = vpop.permute.xlu0 %3617
      %3619 = vrot.lane.b32.xlu0 %v2641, 32
      %v3620 = vpop.permute.xlu0 %3619
      %3621 = vrot.lane.b32.xlu0 %v2642, 32
      %v3622 = vpop.permute.xlu0 %3621
      %3623 = vrot.lane.b32.xlu0 %v2643, 32
      %v3624 = vpop.permute.xlu0 %3623
      %3625 = vrot.lane.b32.xlu0 %v2644, 32
      %v3626 = vpop.permute.xlu0 %3625
      %3627 = vrot.lane.b32.xlu0 %v2645, 32
      %v3628 = vpop.permute.xlu0 %3627
      %3629 = vrot.lane.b32.xlu0 %v2646, 32
      %v3630 = vpop.permute.xlu0 %3629
      %3631 = vrot.lane.b32.xlu0 %v2647, 32
      %v3632 = vpop.permute.xlu0 %3631
      %3633 = vrot.lane.b32.xlu0 %v2648, 32
      %v3634 = vpop.permute.xlu0 %3633
      %3635 = vrot.lane.b32.xlu0 %v2649, 32
      %v3636 = vpop.permute.xlu0 %3635
      %3637 = vrot.lane.b32.xlu0 %v2650, 32
      %v3638 = vpop.permute.xlu0 %3637
      %3639 = vrot.lane.b32.xlu0 %v2651, 32
      %v3640 = vpop.permute.xlu0 %3639
      %3641 = vrot.lane.b32.xlu0 %v2652, 32
      %v3642 = vpop.permute.xlu0 %3641
      %3643 = vrot.lane.b32.xlu0 %v2653, 32
      %v3644 = vpop.permute.xlu0 %3643
      %3645 = vrot.lane.b32.xlu0 %v2654, 32
      %v3646 = vpop.permute.xlu0 %3645
      %v3679 = vsel %vm226, %v2366, %v2688
      %v3680 = vsel %vm226, %v2367, %v2690
      %v3681 = vsel %vm226, %v2368, %v2692
      %v3682 = vsel %vm226, %v2369, %v2694
      %v3683 = vsel %vm226, %v2370, %v2696
      %v3684 = vsel %vm226, %v2371, %v2698
      %v3685 = vsel %vm226, %v2372, %v2700
      %v3686 = vsel %vm226, %v2373, %v2702
      %v3687 = vsel %vm226, %v2374, %v2704
      %v3688 = vsel %vm226, %v2375, %v2706
      %v3689 = vsel %vm226, %v2376, %v2708
      %v3690 = vsel %vm226, %v2377, %v2710
      %v3691 = vsel %vm226, %v2378, %v2712
      %v3692 = vsel %vm226, %v2379, %v2714
      %v3693 = vsel %vm226, %v2380, %v2716
      %v3694 = vsel %vm226, %v2381, %v2718
      %v3695 = vsel %vm226, %v2382, %v2720
      %v3696 = vsel %vm226, %v2383, %v2722
      %v3697 = vsel %vm226, %v2384, %v2724
      %v3698 = vsel %vm226, %v2385, %v2726
      %v3699 = vsel %vm226, %v2386, %v2728
      %v3700 = vsel %vm226, %v2387, %v2730
      %v3701 = vsel %vm226, %v2388, %v2732
      %v3702 = vsel %vm226, %v2389, %v2734
      %v3703 = vsel %vm226, %v2390, %v2736
      %v3704 = vsel %vm226, %v2391, %v2738
      %v3705 = vsel %vm226, %v2392, %v2740
      %v3706 = vsel %vm226, %v2393, %v2742
      %v3707 = vsel %vm226, %v2394, %v2744
      %v3708 = vsel %vm226, %v2395, %v2746
      %v3709 = vsel %vm226, %v2396, %v2748
      %v3710 = vsel %vm226, %v2397, %v2750
      %v3711 = vsel %vm1692, %v3679, %v2816
      %v3712 = vsel %vm1692, %v3680, %v2818
      %v3713 = vsel %vm1692, %v3681, %v2820
      %v3714 = vsel %vm1692, %v3682, %v2822
      %v3715 = vsel %vm1692, %v3683, %v2824
      %v3716 = vsel %vm1692, %v3684, %v2826
      %v3717 = vsel %vm1692, %v3685, %v2828
      %v3718 = vsel %vm1692, %v3686, %v2830
      %v3719 = vsel %vm1692, %v3687, %v2832
      %v3720 = vsel %vm1692, %v3688, %v2834
      %v3721 = vsel %vm1692, %v3689, %v2836
      %v3722 = vsel %vm1692, %v3690, %v2838
      %v3723 = vsel %vm1692, %v3691, %v2840
      %v3724 = vsel %vm1692, %v3692, %v2842
      %v3725 = vsel %vm1692, %v3693, %v2844
      %v3726 = vsel %vm1692, %v3694, %v2846
      %v3727 = vsel %vm1692, %v3695, %v2848
      %v3728 = vsel %vm1692, %v3696, %v2850
      %v3729 = vsel %vm1692, %v3697, %v2852
      %v3730 = vsel %vm1692, %v3698, %v2854
      %v3731 = vsel %vm1692, %v3699, %v2856
      %v3732 = vsel %vm1692, %v3700, %v2858
      %v3733 = vsel %vm1692, %v3701, %v2860
      %v3734 = vsel %vm1692, %v3702, %v2862
      %v3735 = vsel %vm1692, %v3703, %v2864
      %v3736 = vsel %vm1692, %v3704, %v2866
      %v3737 = vsel %vm1692, %v3705, %v2868
      %v3738 = vsel %vm1692, %v3706, %v2870
      %v3739 = vsel %vm1692, %v3707, %v2872
      %v3740 = vsel %vm1692, %v3708, %v2874
      %v3741 = vsel %vm1692, %v3709, %v2876
      %v3742 = vsel %vm1692, %v3710, %v2878
      %v3743 = vsel %vm1725, %v3711, %v2944
      %v3744 = vsel %vm1725, %v3712, %v2946
      %v3745 = vsel %vm1725, %v3713, %v2948
      %v3746 = vsel %vm1725, %v3714, %v2950
      %v3747 = vsel %vm1725, %v3715, %v2952
      %v3748 = vsel %vm1725, %v3716, %v2954
      %v3749 = vsel %vm1725, %v3717, %v2956
      %v3750 = vsel %vm1725, %v3718, %v2958
      %v3751 = vsel %vm1725, %v3719, %v2960
      %v3752 = vsel %vm1725, %v3720, %v2962
      %v3753 = vsel %vm1725, %v3721, %v2964
      %v3754 = vsel %vm1725, %v3722, %v2966
      %v3755 = vsel %vm1725, %v3723, %v2968
      %v3756 = vsel %vm1725, %v3724, %v2970
      %v3757 = vsel %vm1725, %v3725, %v2972
      %v3758 = vsel %vm1725, %v3726, %v2974
      %v3759 = vsel %vm1725, %v3727, %v2976
      %v3760 = vsel %vm1725, %v3728, %v2978
      %v3761 = vsel %vm1725, %v3729, %v2980
      %v3762 = vsel %vm1725, %v3730, %v2982
      %v3763 = vsel %vm1725, %v3731, %v2984
      %v3764 = vsel %vm1725, %v3732, %v2986
      %v3765 = vsel %vm1725, %v3733, %v2988
      %v3766 = vsel %vm1725, %v3734, %v2990
      %v3767 = vsel %vm1725, %v3735, %v2992
      %v3768 = vsel %vm1725, %v3736, %v2994
      %v3769 = vsel %vm1725, %v3737, %v2996
      %v3770 = vsel %vm1725, %v3738, %v2998
      %v3771 = vsel %vm1725, %v3739, %v3000
      %v3772 = vsel %vm1725, %v3740, %v3002
      %v3773 = vsel %vm1725, %v3741, %v3004
      %v3774 = vsel %vm1725, %v3742, %v3006
      %v3775 = vsel %vm1758, %v3743, %v3072
      %v3776 = vsel %vm1758, %v3744, %v3074
      %v3777 = vsel %vm1758, %v3745, %v3076
      %v3778 = vsel %vm1758, %v3746, %v3078
      %v3779 = vsel %vm1758, %v3747, %v3080
      %v3780 = vsel %vm1758, %v3748, %v3082
      %v3781 = vsel %vm1758, %v3749, %v3084
      %v3782 = vsel %vm1758, %v3750, %v3086
      %v3783 = vsel %vm1758, %v3751, %v3088
      %v3784 = vsel %vm1758, %v3752, %v3090
      %v3785 = vsel %vm1758, %v3753, %v3092
      %v3786 = vsel %vm1758, %v3754, %v3094
      %v3787 = vsel %vm1758, %v3755, %v3096
      %v3788 = vsel %vm1758, %v3756, %v3098
      %v3789 = vsel %vm1758, %v3757, %v3100
      %v3790 = vsel %vm1758, %v3758, %v3102
      %v3791 = vsel %vm1758, %v3759, %v3104
      %v3792 = vsel %vm1758, %v3760, %v3106
      %v3793 = vsel %vm1758, %v3761, %v3108
      %v3794 = vsel %vm1758, %v3762, %v3110
      %v3795 = vsel %vm1758, %v3763, %v3112
      %v3796 = vsel %vm1758, %v3764, %v3114
      %v3797 = vsel %vm1758, %v3765, %v3116
      %v3798 = vsel %vm1758, %v3766, %v3118
      %v3799 = vsel %vm1758, %v3767, %v3120
      %v3800 = vsel %vm1758, %v3768, %v3122
      %v3801 = vsel %vm1758, %v3769, %v3124
      %v3802 = vsel %vm1758, %v3770, %v3126
      %v3803 = vsel %vm1758, %v3771, %v3128
      %v3804 = vsel %vm1758, %v3772, %v3130
      %v3805 = vsel %vm1758, %v3773, %v3132
      %v3806 = vsel %vm1758, %v3774, %v3134
      %v3807 = vsel %vm1791, %v3775, %v3200
      %v3808 = vsel %vm1791, %v3776, %v3202
      %v3809 = vsel %vm1791, %v3777, %v3204
      %v3810 = vsel %vm1791, %v3778, %v3206
      %v3811 = vsel %vm1791, %v3779, %v3208
      %v3812 = vsel %vm1791, %v3780, %v3210
      %v3813 = vsel %vm1791, %v3781, %v3212
      %v3814 = vsel %vm1791, %v3782, %v3214
      %v3815 = vsel %vm1791, %v3783, %v3216
      %v3816 = vsel %vm1791, %v3784, %v3218
      %v3817 = vsel %vm1791, %v3785, %v3220
      %v3818 = vsel %vm1791, %v3786, %v3222
      %v3819 = vsel %vm1791, %v3787, %v3224
      %v3820 = vsel %vm1791, %v3788, %v3226
      %v3821 = vsel %vm1791, %v3789, %v3228
      %v3822 = vsel %vm1791, %v3790, %v3230
      %v3823 = vsel %vm1791, %v3791, %v3232
      %v3824 = vsel %vm1791, %v3792, %v3234
      %v3825 = vsel %vm1791, %v3793, %v3236
      %v3826 = vsel %vm1791, %v3794, %v3238
      %v3827 = vsel %vm1791, %v3795, %v3240
      %v3828 = vsel %vm1791, %v3796, %v3242
      %v3829 = vsel %vm1791, %v3797, %v3244
      %v3830 = vsel %vm1791, %v3798, %v3246
      %v3831 = vsel %vm1791, %v3799, %v3248
      %v3832 = vsel %vm1791, %v3800, %v3250
      %v3833 = vsel %vm1791, %v3801, %v3252
      %v3834 = vsel %vm1791, %v3802, %v3254
      %v3835 = vsel %vm1791, %v3803, %v3256
      %v3836 = vsel %vm1791, %v3804, %v3258
      %v3837 = vsel %vm1791, %v3805, %v3260
      %v3838 = vsel %vm1791, %v3806, %v3262
      %v3839 = vsel %vm1824, %v3807, %v3328
      %v3840 = vsel %vm1824, %v3808, %v3330
      %v3841 = vsel %vm1824, %v3809, %v3332
      %v3842 = vsel %vm1824, %v3810, %v3334
      %v3843 = vsel %vm1824, %v3811, %v3336
      %v3844 = vsel %vm1824, %v3812, %v3338
      %v3845 = vsel %vm1824, %v3813, %v3340
      %v3846 = vsel %vm1824, %v3814, %v3342
      %v3847 = vsel %vm1824, %v3815, %v3344
      %v3848 = vsel %vm1824, %v3816, %v3346
      %v3849 = vsel %vm1824, %v3817, %v3348
      %v3850 = vsel %vm1824, %v3818, %v3350
      %v3851 = vsel %vm1824, %v3819, %v3352
      %v3852 = vsel %vm1824, %v3820, %v3354
      %v3853 = vsel %vm1824, %v3821, %v3356
      %v3854 = vsel %vm1824, %v3822, %v3358
      %v3855 = vsel %vm1824, %v3823, %v3360
      %v3856 = vsel %vm1824, %v3824, %v3362
      %v3857 = vsel %vm1824, %v3825, %v3364
      %v3858 = vsel %vm1824, %v3826, %v3366
      %v3859 = vsel %vm1824, %v3827, %v3368
      %v3860 = vsel %vm1824, %v3828, %v3370
      %v3861 = vsel %vm1824, %v3829, %v3372
      %v3862 = vsel %vm1824, %v3830, %v3374
      %v3863 = vsel %vm1824, %v3831, %v3376
      %v3864 = vsel %vm1824, %v3832, %v3378
      %v3865 = vsel %vm1824, %v3833, %v3380
      %v3866 = vsel %vm1824, %v3834, %v3382
      %v3867 = vsel %vm1824, %v3835, %v3384
      %v3868 = vsel %vm1824, %v3836, %v3386
      %v3869 = vsel %vm1824, %v3837, %v3388
      %v3870 = vsel %vm1824, %v3838, %v3390
      %v3871 = vsel %vm1857, %v3839, %v3456
      %v3872 = vsel %vm1857, %v3840, %v3458
      %v3873 = vsel %vm1857, %v3841, %v3460
      %v3874 = vsel %vm1857, %v3842, %v3462
      %v3875 = vsel %vm1857, %v3843, %v3464
      %v3876 = vsel %vm1857, %v3844, %v3466
      %v3877 = vsel %vm1857, %v3845, %v3468
      %v3878 = vsel %vm1857, %v3846, %v3470
      %v3879 = vsel %vm1857, %v3847, %v3472
      %v3880 = vsel %vm1857, %v3848, %v3474
      %v3881 = vsel %vm1857, %v3849, %v3476
      %v3882 = vsel %vm1857, %v3850, %v3478
      %v3883 = vsel %vm1857, %v3851, %v3480
      %v3884 = vsel %vm1857, %v3852, %v3482
      %v3885 = vsel %vm1857, %v3853, %v3484
      %v3886 = vsel %vm1857, %v3854, %v3486
      %v3887 = vsel %vm1857, %v3855, %v3488
      %v3888 = vsel %vm1857, %v3856, %v3490
      %v3889 = vsel %vm1857, %v3857, %v3492
      %v3890 = vsel %vm1857, %v3858, %v3494
      %v3891 = vsel %vm1857, %v3859, %v3496
      %v3892 = vsel %vm1857, %v3860, %v3498
      %v3893 = vsel %vm1857, %v3861, %v3500
      %v3894 = vsel %vm1857, %v3862, %v3502
      %v3895 = vsel %vm1857, %v3863, %v3504
      %v3896 = vsel %vm1857, %v3864, %v3506
      %v3897 = vsel %vm1857, %v3865, %v3508
      %v3898 = vsel %vm1857, %v3866, %v3510
      %v3899 = vsel %vm1857, %v3867, %v3512
      %v3900 = vsel %vm1857, %v3868, %v3514
      %v3901 = vsel %vm1857, %v3869, %v3516
      %v3902 = vsel %vm1857, %v3870, %v3518
      %v3903 = vsel %vm1890, %v3871, %v3584
      %v3904 = vsel %vm1890, %v3872, %v3586
      %v3905 = vsel %vm1890, %v3873, %v3588
      %v3906 = vsel %vm1890, %v3874, %v3590
      %v3907 = vsel %vm1890, %v3875, %v3592
      %v3908 = vsel %vm1890, %v3876, %v3594
      %v3909 = vsel %vm1890, %v3877, %v3596
      %v3910 = vsel %vm1890, %v3878, %v3598
      %v3911 = vsel %vm1890, %v3879, %v3600
      %v3912 = vsel %vm1890, %v3880, %v3602
      %v3913 = vsel %vm1890, %v3881, %v3604
      %v3914 = vsel %vm1890, %v3882, %v3606
      %v3915 = vsel %vm1890, %v3883, %v3608
      %v3916 = vsel %vm1890, %v3884, %v3610
      %v3917 = vsel %vm1890, %v3885, %v3612
      %v3918 = vsel %vm1890, %v3886, %v3614
      %v3919 = vsel %vm1890, %v3887, %v3616
      %v3920 = vsel %vm1890, %v3888, %v3618
      %v3921 = vsel %vm1890, %v3889, %v3620
      %v3922 = vsel %vm1890, %v3890, %v3622
      %v3923 = vsel %vm1890, %v3891, %v3624
      %v3924 = vsel %vm1890, %v3892, %v3626
      %v3925 = vsel %vm1890, %v3893, %v3628
      %v3926 = vsel %vm1890, %v3894, %v3630
      %v3927 = vsel %vm1890, %v3895, %v3632
      %v3928 = vsel %vm1890, %v3896, %v3634
      %v3929 = vsel %vm1890, %v3897, %v3636
      %v3930 = vsel %vm1890, %v3898, %v3638
      %v3931 = vsel %vm1890, %v3899, %v3640
      %v3932 = vsel %vm1890, %v3900, %v3642
      %v3933 = vsel %vm1890, %v3901, %v3644
      %v3934 = vsel %vm1890, %v3902, %v3646
      %v3935 = vpack.c.bf16 %v3904, %v3903
      %v3936 = vpack.c.bf16 %v3906, %v3905
      %v3937 = vpack.c.bf16 %v3908, %v3907
      %v3938 = vpack.c.bf16 %v3910, %v3909
      %v3939 = vpack.c.bf16 %v3912, %v3911
      %v3940 = vpack.c.bf16 %v3914, %v3913
      %v3941 = vpack.c.bf16 %v3916, %v3915
      %v3942 = vpack.c.bf16 %v3918, %v3917
      %v3943 = vpack.c.bf16 %v3920, %v3919
      %v3944 = vpack.c.bf16 %v3922, %v3921
      %v3945 = vpack.c.bf16 %v3924, %v3923
      %v3946 = vpack.c.bf16 %v3926, %v3925
      %v3947 = vpack.c.bf16 %v3928, %v3927
      %v3948 = vpack.c.bf16 %v3930, %v3929
      %v3949 = vpack.c.bf16 %v3932, %v3931
      %v3950 = vpack.c.bf16 %v3934, %v3933
      %v3951 = vld [vmem:[%s2] sm:$0xf]
      %v3952 = vld [vmem:[%s2 + $0x4] sm:$0xf]
      %v3953 = vld [vmem:[%s2 + $0x8] sm:$0xf]
      %v3954 = vld [vmem:[%s2 + $0xc] sm:$0xf]
      %v3955 = vld [vmem:[%s2 + $0x10] sm:$0x3]
      %v3961 = vunpack.c.l.b16 %v3951
      %v3962 = vunpack.c.l.b16 %v3952
      %v3963 = vunpack.c.l.b16 %v3953
      %v3964 = vunpack.c.l.b16 %v3954
      %v3965 = vunpack.c.l.b16 %v3955
      %v3966 = vpack.c.b16 %v3962, %v3961
      %v3967 = vpack.c.b16 %v3964, %v3963
      %v3968 = vpack.c.b16 %v3965, %v3965
      %v3972 = vsel %vm1959, %v3935, 0
      %v3975 = vsel %vm1959, %v3936, 0
      %v3978 = vsel %vm1959, %v3937, 0
      %v3981 = vsel %vm1959, %v3938, 0
      %v3984 = vsel %vm1959, %v3939, 0
      %v3987 = vsel %vm1959, %v3940, 0
      %v3990 = vsel %vm1959, %v3941, 0
      %v3993 = vsel %vm1959, %v3942, 0
      %v3996 = vsel %vm1959, %v3943, 0
      %v3999 = vsel %vm1959, %v3944, 0
      %v4002 = vsel %vm1959, %v3945, 0
      %v4005 = vsel %vm1959, %v3946, 0
      %v4008 = vsel %vm1959, %v3947, 0
      %v4011 = vsel %vm1959, %v3948, 0
      %v4014 = vsel %vm1959, %v3949, 0
      %v4017 = vsel %vm1959, %v3950, 0
      %v4020 = vsel %vm2008, %v3968, 0
      %4022 = vmatprep.subr.bf16.mxu0 0
      %4023 = vmatpush1.bf16.msra.mxu0 %v3966
      %4024 = vmatprep.subr.bf16.mxu0 0
      %4025 = vmatpush1.bf16.msra.mxu0 %v3967
      %4026 = vmatprep.subr.bf16.mxu0 0
      %4027 = vmatpush1.bf16.msra.mxu0 %v4020
      %4028 = vmatprep.subr.bf16.mxu0 0
      %4029 = vmatpush1.bf16.msra.mxu0 0
      %4030 = vmatprep.subr.bf16.mxu0 0
      %4031 = vmatpush1.bf16.msra.mxu0 0
      %4032 = vmatprep.subr.bf16.mxu0 0
      %4033 = vmatpush1.bf16.msra.mxu0 0
      %4034 = vmatprep.subr.bf16.mxu0 0
      %4035 = vmatpush1.bf16.msra.mxu0 0
      %4036 = vmatprep.subr.bf16.mxu0 0
      %4037 = vmatpush1.bf16.msra.mxu0 0
      %4038 = vmatprep.subr.bf16.mxu0 0
      %4039 = vmatpush1.bf16.msra.mxu0 0
      %4040 = vmatprep.subr.bf16.mxu0 0
      %4041 = vmatpush1.bf16.msra.mxu0 0
      %4042 = vmatprep.subr.bf16.mxu0 0
      %4043 = vmatpush1.bf16.msra.mxu0 0
      %4044 = vmatprep.subr.bf16.mxu0 0
      %4045 = vmatpush1.bf16.msra.mxu0 0
      %4046 = vmatprep.subr.bf16.mxu0 0
      %4047 = vmatpush1.bf16.msra.mxu0 0
      %4048 = vmatprep.subr.bf16.mxu0 0
      %4049 = vmatpush1.bf16.msra.mxu0 0
      %4050 = vmatprep.subr.bf16.mxu0 0
      %4051 = vmatpush1.bf16.msra.mxu0 0
      %4052 = vmatprep.subr.bf16.mxu0 0
      %4053 = vmatpush1.bf16.msra.mxu0 0
      %4054 = vmatprep.mubr.bf16.mxu0 0
      %4055 = vmatmul.mubr.bf16.gmra.mrb[0].mxu0 %v3972
      %v4056 = vpop.f32.mrb[0].mxu0
      %v4057 = vadd.f32 0.0, %v4056
      %v4058 = vpop.f32.mrb[0].mxu0
      %v4059 = vpop.f32.mrb[0].mxu0
      %v4060 = vadd.f32 0.0, %v4059
      %v4061 = vpop.f32.mrb[0].mxu0
      %4062 = vmatprep.mubr.bf16.mxu0 0
      %4063 = vmatmul.mubr.bf16.gmra.mrb[0].mxu0 %v3975
      %v4064 = vpop.f32.mrb[0].mxu0
      %v4065 = vadd.f32 0.0, %v4064
      %v4066 = vpop.f32.mrb[0].mxu0
      %v4067 = vpop.f32.mrb[0].mxu0
      %v4068 = vadd.f32 0.0, %v4067
      %v4069 = vpop.f32.mrb[0].mxu0
      %4070 = vmatprep.mubr.bf16.mxu0 0
      %4071 = vmatmul.mubr.bf16.gmra.mrb[0].mxu0 %v3978
      %v4072 = vpop.f32.mrb[0].mxu0
      %v4073 = vadd.f32 0.0, %v4072
      %v4074 = vpop.f32.mrb[0].mxu0
      %v4075 = vpop.f32.mrb[0].mxu0
      %v4076 = vadd.f32 0.0, %v4075
      %v4077 = vpop.f32.mrb[0].mxu0
      %4078 = vmatprep.mubr.bf16.mxu0 0
      %4079 = vmatmul.mubr.bf16.gmra.mrb[0].mxu0 %v3981
      %v4080 = vpop.f32.mrb[0].mxu0
      %v4081 = vadd.f32 0.0, %v4080
      %v4082 = vpop.f32.mrb[0].mxu0
      %v4083 = vpop.f32.mrb[0].mxu0
      %v4084 = vadd.f32 0.0, %v4083
      %v4085 = vpop.f32.mrb[0].mxu0
      %4086 = vmatprep.mubr.bf16.mxu0 0
      %4087 = vmatmul.mubr.bf16.gmra.mrb[0].mxu0 %v3984
      %v4088 = vpop.f32.mrb[0].mxu0
      %v4089 = vadd.f32 0.0, %v4088
      %v4090 = vpop.f32.mrb[0].mxu0
      %v4091 = vpop.f32.mrb[0].mxu0
      %v4092 = vadd.f32 0.0, %v4091
      %v4093 = vpop.f32.mrb[0].mxu0
      %4094 = vmatprep.mubr.bf16.mxu0 0
      %4095 = vmatmul.mubr.bf16.gmra.mrb[0].mxu0 %v3987
      %v4096 = vpop.f32.mrb[0].mxu0
      %v4097 = vadd.f32 0.0, %v4096
      %v4098 = vpop.f32.mrb[0].mxu0
      %v4099 = vpop.f32.mrb[0].mxu0
      %v4100 = vadd.f32 0.0, %v4099
      %v4101 = vpop.f32.mrb[0].mxu0
      %4102 = vmatprep.mubr.bf16.mxu0 0
      %4103 = vmatmul.mubr.bf16.gmra.mrb[0].mxu0 %v3990
      %v4104 = vpop.f32.mrb[0].mxu0
      %v4105 = vadd.f32 0.0, %v4104
      %v4106 = vpop.f32.mrb[0].mxu0
      %v4107 = vpop.f32.mrb[0].mxu0
      %v4108 = vadd.f32 0.0, %v4107
      %v4109 = vpop.f32.mrb[0].mxu0
      %4110 = vmatprep.mubr.bf16.mxu0 0
      %4111 = vmatmul.mubr.bf16.gmra.mrb[0].mxu0 %v3993
      %v4112 = vpop.f32.mrb[0].mxu0
      %v4113 = vadd.f32 0.0, %v4112
      %v4114 = vpop.f32.mrb[0].mxu0
      %v4115 = vpop.f32.mrb[0].mxu0
      %v4116 = vadd.f32 0.0, %v4115
      %v4117 = vpop.f32.mrb[0].mxu0
      %4118 = vmatprep.mubr.bf16.mxu0 0
      %4119 = vmatmul.mubr.bf16.gmra.mrb[0].mxu0 %v3996
      %v4120 = vpop.f32.mrb[0].mxu0
      %v4121 = vadd.f32 0.0, %v4120
      %v4122 = vpop.f32.mrb[0].mxu0
      %v4123 = vpop.f32.mrb[0].mxu0
      %v4124 = vadd.f32 0.0, %v4123
      %v4125 = vpop.f32.mrb[0].mxu0
      %4126 = vmatprep.mubr.bf16.mxu0 0
      %4127 = vmatmul.mubr.bf16.gmra.mrb[0].mxu0 %v3999
      %v4128 = vpop.f32.mrb[0].mxu0
      %v4129 = vadd.f32 0.0, %v4128
      %v4130 = vpop.f32.mrb[0].mxu0
      %v4131 = vpop.f32.mrb[0].mxu0
      %v4132 = vadd.f32 0.0, %v4131
      %v4133 = vpop.f32.mrb[0].mxu0
      %4134 = vmatprep.mubr.bf16.mxu0 0
      %4135 = vmatmul.mubr.bf16.gmra.mrb[0].mxu0 %v4002
      %v4136 = vpop.f32.mrb[0].mxu0
      %v4137 = vadd.f32 0.0, %v4136
      %v4138 = vpop.f32.mrb[0].mxu0
      %v4139 = vpop.f32.mrb[0].mxu0
      %v4140 = vadd.f32 0.0, %v4139
      %v4141 = vpop.f32.mrb[0].mxu0
      %4142 = vmatprep.mubr.bf16.mxu0 0
      %4143 = vmatmul.mubr.bf16.gmra.mrb[0].mxu0 %v4005
      %v4144 = vpop.f32.mrb[0].mxu0
      %v4145 = vadd.f32 0.0, %v4144
      %v4146 = vpop.f32.mrb[0].mxu0
      %v4147 = vpop.f32.mrb[0].mxu0
      %v4148 = vadd.f32 0.0, %v4147
      %v4149 = vpop.f32.mrb[0].mxu0
      %4150 = vmatprep.mubr.bf16.mxu0 0
      %4151 = vmatmul.mubr.bf16.gmra.mrb[0].mxu0 %v4008
      %v4152 = vpop.f32.mrb[0].mxu0
      %v4153 = vadd.f32 0.0, %v4152
      %v4154 = vpop.f32.mrb[0].mxu0
      %v4155 = vpop.f32.mrb[0].mxu0
      %v4156 = vadd.f32 0.0, %v4155
      %v4157 = vpop.f32.mrb[0].mxu0
      %4158 = vmatprep.mubr.bf16.mxu0 0
      %4159 = vmatmul.mubr.bf16.gmra.mrb[0].mxu0 %v4011
      %v4160 = vpop.f32.mrb[0].mxu0
      %v4161 = vadd.f32 0.0, %v4160
      %v4162 = vpop.f32.mrb[0].mxu0
      %v4163 = vpop.f32.mrb[0].mxu0
      %v4164 = vadd.f32 0.0, %v4163
      %v4165 = vpop.f32.mrb[0].mxu0
      %4166 = vmatprep.mubr.bf16.mxu0 0
      %4167 = vmatmul.mubr.bf16.gmra.mrb[0].mxu0 %v4014
      %v4168 = vpop.f32.mrb[0].mxu0
      %v4169 = vadd.f32 0.0, %v4168
      %v4170 = vpop.f32.mrb[0].mxu0
      %v4171 = vpop.f32.mrb[0].mxu0
      %v4172 = vadd.f32 0.0, %v4171
      %v4173 = vpop.f32.mrb[0].mxu0
      %4174 = vmatprep.mubr.bf16.mxu0 0
      %4175 = vmatmul.mubr.bf16.gmra.mrb[0].mxu0 %v4017
      %v4176 = vpop.f32.mrb[0].mxu0
      %v4177 = vadd.f32 0.0, %v4176
      %v4178 = vpop.f32.mrb[0].mxu0
      %v4179 = vpop.f32.mrb[0].mxu0
      %v4180 = vadd.f32 0.0, %v4179
      %v4181 = vpop.f32.mrb[0].mxu0
      %4182 = vdwg.mxu0
      %v4183 = vld [vmem:[%s4] sm:$0x1]
      %v4184 = vlaneseq
      %v4185 = vshrl.u32 %v4184, 7
      %v4186 = vsub.s32 0, %v4185
      %v4187 = vrot.slane %v4183, %v4186
      %v4188 = vmul.f32 %v4057, %v4187
      %v4189 = vmul.f32 %v4060, %v4187
      %v4190 = vmul.f32 %v4065, %v4187
      %v4191 = vmul.f32 %v4068, %v4187
      %v4192 = vmul.f32 %v4073, %v4187
      %v4193 = vmul.f32 %v4076, %v4187
      %v4194 = vmul.f32 %v4081, %v4187
      %v4195 = vmul.f32 %v4084, %v4187
      %v4196 = vmul.f32 %v4089, %v4187
      %v4197 = vmul.f32 %v4092, %v4187
      %v4198 = vmul.f32 %v4097, %v4187
      %v4199 = vmul.f32 %v4100, %v4187
      %v4200 = vmul.f32 %v4105, %v4187
      %v4201 = vmul.f32 %v4108, %v4187
      %v4202 = vmul.f32 %v4113, %v4187
      %v4203 = vmul.f32 %v4116, %v4187
      %v4204 = vmul.f32 %v4121, %v4187
      %v4205 = vmul.f32 %v4124, %v4187
      %v4206 = vmul.f32 %v4129, %v4187
      %v4207 = vmul.f32 %v4132, %v4187
      %v4208 = vmul.f32 %v4137, %v4187
      %v4209 = vmul.f32 %v4140, %v4187
      %v4210 = vmul.f32 %v4145, %v4187
      %v4211 = vmul.f32 %v4148, %v4187
      %v4212 = vmul.f32 %v4153, %v4187
      %v4213 = vmul.f32 %v4156, %v4187
      %v4214 = vmul.f32 %v4161, %v4187
      %v4215 = vmul.f32 %v4164, %v4187
      %v4216 = vmul.f32 %v4169, %v4187
      %v4217 = vmul.f32 %v4172, %v4187
      %v4218 = vmul.f32 %v4177, %v4187
      %v4219 = vmul.f32 %v4180, %v4187
      %v4220 = vld [vmem:[%s4 + $0x1] sm:$0x1]
      %v4221 = vlaneseq
      %v4222 = vshrl.u32 %v4221, 7
      %v4223 = vsub.s32 0, %v4222
      %v4224 = vrot.slane %v4220, %v4223
      %v4225 = vadd.f32 %v4188, %v4224
      %v4226 = vadd.f32 %v4189, %v4224
      %v4227 = vadd.f32 %v4190, %v4224
      %v4228 = vadd.f32 %v4191, %v4224
      %v4229 = vadd.f32 %v4192, %v4224
      %v4230 = vadd.f32 %v4193, %v4224
      %v4231 = vadd.f32 %v4194, %v4224
      %v4232 = vadd.f32 %v4195, %v4224
      %v4233 = vadd.f32 %v4196, %v4224
      %v4234 = vadd.f32 %v4197, %v4224
      %v4235 = vadd.f32 %v4198, %v4224
      %v4236 = vadd.f32 %v4199, %v4224
      %v4237 = vadd.f32 %v4200, %v4224
      %v4238 = vadd.f32 %v4201, %v4224
      %v4239 = vadd.f32 %v4202, %v4224
      %v4240 = vadd.f32 %v4203, %v4224
      %v4241 = vadd.f32 %v4204, %v4224
      %v4242 = vadd.f32 %v4205, %v4224
      %v4243 = vadd.f32 %v4206, %v4224
      %v4244 = vadd.f32 %v4207, %v4224
      %v4245 = vadd.f32 %v4208, %v4224
      %v4246 = vadd.f32 %v4209, %v4224
      %v4247 = vadd.f32 %v4210, %v4224
      %v4248 = vadd.f32 %v4211, %v4224
      %v4249 = vadd.f32 %v4212, %v4224
      %v4250 = vadd.f32 %v4213, %v4224
      %v4251 = vadd.f32 %v4214, %v4224
      %v4252 = vadd.f32 %v4215, %v4224
      %v4253 = vadd.f32 %v4216, %v4224
      %v4254 = vadd.f32 %v4217, %v4224
      %v4255 = vadd.f32 %v4218, %v4224
      %v4256 = vadd.f32 %v4219, %v4224
      %v4257 = vld [vmem:[%s219] sm:$0xff]
      %v4258 = vld [vmem:[%s219 + $0x8] sm:$0xff]
      %v4259 = vld [vmem:[%s219 + $0x10] sm:$0xff]
      %v4260 = vld [vmem:[%s219 + $0x18] sm:$0xff]
      %v4261 = vld [vmem:[%s219 + $0x20] sm:$0xff]
      %v4262 = vld [vmem:[%s219 + $0x28] sm:$0xff]
      %v4263 = vld [vmem:[%s219 + $0x30] sm:$0xff]
      %v4264 = vld [vmem:[%s219 + $0x38] sm:$0xff]
      %v4265 = vld [vmem:[%s219 + $0x40] sm:$0xff]
      %v4266 = vld [vmem:[%s219 + $0x48] sm:$0xff]
      %v4267 = vld [vmem:[%s219 + $0x50] sm:$0xff]
      %v4268 = vld [vmem:[%s219 + $0x58] sm:$0xff]
      %v4269 = vld [vmem:[%s219 + $0x60] sm:$0xff]
      %v4270 = vld [vmem:[%s219 + $0x68] sm:$0xff]
      %v4271 = vld [vmem:[%s219 + $0x70] sm:$0xff]
      %v4272 = vld [vmem:[%s219 + $0x78] sm:$0xff]
      %v4273 = vld [vmem:[%s219 + $0x80] sm:$0xff]
      %v4274 = vld [vmem:[%s219 + $0x88] sm:$0xff]
      %v4275 = vld [vmem:[%s219 + $0x90] sm:$0xff]
      %v4276 = vld [vmem:[%s219 + $0x98] sm:$0xff]
      %v4277 = vld [vmem:[%s219 + $0xa0] sm:$0xff]
      %v4278 = vld [vmem:[%s219 + $0xa8] sm:$0xff]
      %v4279 = vld [vmem:[%s219 + $0xb0] sm:$0xff]
      %v4280 = vld [vmem:[%s219 + $0xb8] sm:$0xff]
      %v4281 = vld [vmem:[%s219 + $0xc0] sm:$0xff]
      %v4282 = vld [vmem:[%s219 + $0xc8] sm:$0xff]
      %v4283 = vld [vmem:[%s219 + $0xd0] sm:$0xff]
      %v4284 = vld [vmem:[%s219 + $0xd8] sm:$0xff]
      %v4285 = vld [vmem:[%s219 + $0xe0] sm:$0xff]
      %v4286 = vld [vmem:[%s219 + $0xe8] sm:$0xff]
      %v4287 = vld [vmem:[%s219 + $0xf0] sm:$0xff]
      %v4288 = vld [vmem:[%s219 + $0xf8] sm:$0xff]
      %v4289 = vadd.f32 %v4225, %v4257
      %v4290 = vadd.f32 %v4226, %v4258
      %v4291 = vadd.f32 %v4227, %v4259
      %v4292 = vadd.f32 %v4228, %v4260
      %v4293 = vadd.f32 %v4229, %v4261
      %v4294 = vadd.f32 %v4230, %v4262
      %v4295 = vadd.f32 %v4231, %v4263
      %v4296 = vadd.f32 %v4232, %v4264
      %v4297 = vadd.f32 %v4233, %v4265
      %v4298 = vadd.f32 %v4234, %v4266
      %v4299 = vadd.f32 %v4235, %v4267
      %v4300 = vadd.f32 %v4236, %v4268
      %v4301 = vadd.f32 %v4237, %v4269
      %v4302 = vadd.f32 %v4238, %v4270
      %v4303 = vadd.f32 %v4239, %v4271
      %v4304 = vadd.f32 %v4240, %v4272
      %v4305 = vadd.f32 %v4241, %v4273
      %v4306 = vadd.f32 %v4242, %v4274
      %v4307 = vadd.f32 %v4243, %v4275
      %v4308 = vadd.f32 %v4244, %v4276
      %v4309 = vadd.f32 %v4245, %v4277
      %v4310 = vadd.f32 %v4246, %v4278
      %v4311 = vadd.f32 %v4247, %v4279
      %v4312 = vadd.f32 %v4248, %v4280
      %v4313 = vadd.f32 %v4249, %v4281
      %v4314 = vadd.f32 %v4250, %v4282
      %v4315 = vadd.f32 %v4251, %v4283
      %v4316 = vadd.f32 %v4252, %v4284
      %v4317 = vadd.f32 %v4253, %v4285
      %v4318 = vadd.f32 %v4254, %v4286
      %v4319 = vadd.f32 %v4255, %v4287
      %v4320 = vadd.f32 %v4256, %v4288
      %4321 = vst.msk [vmem:[%s224] sm:$0xff] %vm226, %v4289
      %4322 = vst.msk [vmem:[%s224 + $0x8] sm:$0xff] %vm226, %v4290
      %4323 = vst.msk [vmem:[%s224 + $0x10] sm:$0xff] %vm226, %v4291
      %4324 = vst.msk [vmem:[%s224 + $0x18] sm:$0xff] %vm226, %v4292
      %4325 = vst.msk [vmem:[%s224 + $0x20] sm:$0xff] %vm226, %v4293
      %4326 = vst.msk [vmem:[%s224 + $0x28] sm:$0xff] %vm226, %v4294
      %4327 = vst.msk [vmem:[%s224 + $0x30] sm:$0xff] %vm226, %v4295
      %4328 = vst.msk [vmem:[%s224 + $0x38] sm:$0xff] %vm226, %v4296
      %4329 = vst.msk [vmem:[%s224 + $0x40] sm:$0xff] %vm226, %v4297
      %4330 = vst.msk [vmem:[%s224 + $0x48] sm:$0xff] %vm226, %v4298
      %4331 = vst.msk [vmem:[%s224 + $0x50] sm:$0xff] %vm226, %v4299
      %4332 = vst.msk [vmem:[%s224 + $0x58] sm:$0xff] %vm226, %v4300
      %4333 = vst.msk [vmem:[%s224 + $0x60] sm:$0xff] %vm226, %v4301
      %4334 = vst.msk [vmem:[%s224 + $0x68] sm:$0xff] %vm226, %v4302
      %4335 = vst.msk [vmem:[%s224 + $0x70] sm:$0xff] %vm226, %v4303
      %4336 = vst.msk [vmem:[%s224 + $0x78] sm:$0xff] %vm226, %v4304
      %4337 = vst.msk [vmem:[%s224 + $0x80] sm:$0xff] %vm226, %v4305
      %4338 = vst.msk [vmem:[%s224 + $0x88] sm:$0xff] %vm226, %v4306
      %4339 = vst.msk [vmem:[%s224 + $0x90] sm:$0xff] %vm226, %v4307
      %4340 = vst.msk [vmem:[%s224 + $0x98] sm:$0xff] %vm226, %v4308
      %4341 = vst.msk [vmem:[%s224 + $0xa0] sm:$0xff] %vm226, %v4309
      %4342 = vst.msk [vmem:[%s224 + $0xa8] sm:$0xff] %vm226, %v4310
      %4343 = vst.msk [vmem:[%s224 + $0xb0] sm:$0xff] %vm226, %v4311
      %4344 = vst.msk [vmem:[%s224 + $0xb8] sm:$0xff] %vm226, %v4312
      %4345 = vst.msk [vmem:[%s224 + $0xc0] sm:$0xff] %vm226, %v4313
      %4346 = vst.msk [vmem:[%s224 + $0xc8] sm:$0xff] %vm226, %v4314
      %4347 = vst.msk [vmem:[%s224 + $0xd0] sm:$0xff] %vm226, %v4315
      %4348 = vst.msk [vmem:[%s224 + $0xd8] sm:$0xff] %vm226, %v4316
      %4349 = vst.msk [vmem:[%s224 + $0xe0] sm:$0xff] %vm226, %v4317
      %4350 = vst.msk [vmem:[%s224 + $0xe8] sm:$0xff] %vm226, %v4318
      %4351 = vst.msk [vmem:[%s224 + $0xf0] sm:$0xff] %vm226, %v4319
      %4352 = vst.msk [vmem:[%s224 + $0xf8] sm:$0xff] %vm226, %v4320
      %p4353 = scmp.lt.s32.totalorder %s16, 1
      %s4354 = scalar_select %p4353, %s16, 1
      %s4355 = smul.addr %s4354, 32
      %s4356 = smul.addr %s4355, 8
      %s4357 = scalar_lea.vmem %s5, %s4356
      // Predicated region
      $region41: #{tpu_custom_call.1} parent=39 // pred_check
        %p4358 = pneg %p144
      $region42: #{tpu_custom_call.1} parent=39 // pred_check_branch
        %4360 = sbr.rel (%p4358) target = $region44
      $region43: #{tpu_custom_call.1} parent=39 // pred_region
        _
      $region44: #{tpu_custom_call.1} parent=39 // pred_fallthru
        _
    $region40: #{tpu_custom_call.1} parent=5 // pred_fallthru
      _
    %p4361 = scmp.le.s32.totalorder 2, %s11
    // Predicated region
    $region45: #{tpu_custom_call.1} parent=5 // pred_check
      %p4362 = pneg %p4361
    $region46: #{tpu_custom_call.1} parent=5 // pred_check_branch
      %4364 = sbr.rel (%p4362) target = $region48
    $region47: #{tpu_custom_call.1} parent=5 // pred_region
      %s4365 = ssub.s32 %s11, 2
      // Predicated region
      $region49: #{tpu_custom_call.1} parent=47 // pred_check
        %p4366 = pneg %p150
      $region50: #{tpu_custom_call.1} parent=47 // pred_check_branch
        %4368 = sbr.rel (%p4366) target = $region52
      $region51: #{tpu_custom_call.1} parent=47 // pred_region
        %p4369 = scmp.lt.s32.totalorder %s17, 1
        %s4370 = scalar_select %p4369, %s17, 1
        %s4371 = smul.addr %s4370, 32
        %s4372 = smul.addr %s4371, 8
        %s4373 = scalar_lea.vmem %s5, %s4372
      $region52: #{tpu_custom_call.1} parent=47 // pred_fallthru
        _
    $region48: #{tpu_custom_call.1} parent=5 // pred_fallthru
      _
  $region6: #{tpu_custom_call.1} parent=0 // loop_footer
    %s15 = sadd.s32 1, %s11
  $region7: #{tpu_custom_call.1} parent=0 // loop_footer_branch
    %10 = sbr.rel target = $region3
  $region8: #{tpu_custom_call.1} parent=0 // loop_exit
    _

</llo_original>
